<compile_context>
chip_gen: v5e
topology: v5e:2x2
jax: 0.10.0
libtpu: 0.0.40
codegen_flags: <defaults>
</compile_context>

<pallas_src>
import jax
import jax.numpy as jnp
from jax.experimental import pallas as pl
from jax.experimental.pallas import tpu as pltpu

LANE = 128


def _round_up(x, m):
    return ((x + m - 1) // m) * m


def decoder_kernel(emb_ref, dec0_ref, h0_ref, c0_ref, ctx_ref, add_mask_ref,
                   w_lstm_ref, b_lstm_ref, w_inp_ref, b_inp_ref,
                   w_ctx_ref, b_ctx_ref, v_ref, w_out_ref, b_out_ref,
                   logp_ref, ptr_ref, h_out_ref, c_out_ref):
    TB, L, Ep = emb_ref.shape
    Hp = h0_ref.shape[1]
    f32, bf16 = jnp.float32, jnp.bfloat16

    # ------------------- loop-invariant (hoisted) work -------------------
    emb_bf = emb_ref[...]                        # (TB, L, Ep) bf16, MXU gather operand
    context = ctx_ref[...]                       # (TB, L, Hp) bf16
    add_mask = add_mask_ref[...]                 # (TB, L) f32
    w_lstm = w_lstm_ref[...]; b_lstm = b_lstm_ref[...]
    w_inp = w_inp_ref[...]; b_inp = b_inp_ref[...]
    w_ctx = w_ctx_ref[...]; b_ctx = b_ctx_ref[...]
    w_out = w_out_ref[...]; b_out = b_out_ref[...]
    v_b = v_ref[...].reshape(1, 1, Hp)           # hoisted broadcast of V

    # Attention context projection (Conv1d k=1) is step-invariant -> once, on MXU.
    ctx_proj = (jnp.dot(context.reshape(TB * L, Hp), w_ctx,
                        preferred_element_type=f32)
                + b_ctx).reshape(TB, L, Hp)
    ctx_proj_bf = ctx_proj.astype(bf16)          # MXU operand for attention pooling

    iota_l = jax.lax.broadcasted_iota(jnp.int32, (TB, L), 1)
    add_mask_count = jnp.sum(add_mask, axis=1, keepdims=True)   # (TB, 1)
    neg_big = jnp.float32(-1e30)   # finite "-inf": NaN-safe even if a row masks out

    dec_in = dec0_ref[...]
    h = h0_ref[...]
    c = c0_ref[...]
    mask = jnp.ones((TB, L), f32)

    # Fully-unrolled decode loop (L is small and static): gives the scheduler
    # visibility to overlap step i+1's matmuls with step i's EUP/VPU tail.
    for i in range(L):
        # ---- LSTMCell: fused [x; h] @ [W_ih; W_hh] (PyTorch gate order i,f,g,o)
        xh = jnp.concatenate([dec_in, h], axis=1).astype(bf16)
        gates = jnp.dot(xh, w_lstm, preferred_element_type=f32) + b_lstm
        i_g = jax.nn.sigmoid(gates[:, 0 * Hp:1 * Hp])
        f_g = jax.nn.sigmoid(gates[:, 1 * Hp:2 * Hp])
        g_g = jnp.tanh(gates[:, 2 * Hp:3 * Hp])
        o_g = jax.nn.sigmoid(gates[:, 3 * Hp:4 * Hp])
        c_t = f_g * c + i_g * g_g
        h_t = o_g * jnp.tanh(c_t)

        # ---- Attention ----
        inp_proj = (jnp.dot(h_t.astype(bf16), w_inp,
                            preferred_element_type=f32) + b_inp)         # (TB, Hp)
        u = jnp.tanh(inp_proj[:, None, :] + ctx_proj)                     # (TB, L, Hp)
        att = jnp.sum(u * v_b, axis=-1)                                   # (TB, L)
        att = jnp.where(mask == 0.0, neg_big, att)
        att_max = jnp.max(att, axis=1, keepdims=True)
        e = jnp.exp(att - att_max)
        alpha = e * pl.reciprocal(jnp.sum(e, axis=1, keepdims=True), approx=True)
        # attention pooling on the MXU: hidden_state[b] = sum_l alpha[b,l]*ctx_proj[b,l,:]
        hidden_state = jnp.einsum('bql,blh->bqh',
                                  alpha[:, None, :].astype(bf16), ctx_proj_bf,
                                  preferred_element_type=f32)[:, 0, :]    # (TB, Hp)

        # h_t = tanh(hidden_out(cat(hidden_state, h_t))) -- fused (2Hp, Hp) matmul
        sh = jnp.concatenate([hidden_state, h_t], axis=1).astype(bf16)
        h_new = jnp.tanh(jnp.dot(sh, w_out, preferred_element_type=f32) + b_out)

        # ---- pointer selection (greedy) ----
        normed = (alpha + 1e-8) * add_mask
        normed = normed * pl.reciprocal(jnp.sum(normed, axis=1, keepdims=True),
                                        approx=True)
        step_ok = (add_mask_count >= float(i)).astype(f32)                # (TB, 1)
        masked_outs = normed * (mask * step_ok)

        max_v = jnp.max(masked_outs, axis=1, keepdims=True)
        action = jnp.min(jnp.where(masked_outs == max_v, iota_l, L),
                         axis=1, keepdims=True)                           # first argmax
        one_hot = (iota_l == action).astype(f32)

        # Categorical(probs=masked_outs + 1e-8).log_prob(action)
        probs = masked_outs + 1e-8
        p_sel = jnp.sum(probs * one_hot, axis=1, keepdims=True)
        logp = jnp.log(p_sel) - jnp.log(jnp.sum(probs, axis=1, keepdims=True))

        # direct per-step column stores (no O(L^2) where-scatter accumulators).
        # (For production shapes with large L, write into a padded lane-dense slab.)
        logp_ref[:, i:i + 1] = logp
        ptr_ref[:, i:i + 1] = action

        mask = mask * (1.0 - one_hot)
        # chosen-embedding gather on the MXU: dec_in[b] = sum_l one_hot[b,l]*emb[b,l,:]
        dec_in = jnp.einsum('bql,ble->bqe',
                            one_hot[:, None, :].astype(bf16), emb_bf,
                            preferred_element_type=f32)[:, 0, :]          # (TB, Ep)
        h = h_new
        c = c_t

    h_out_ref[...] = h        # lane-dense (Hp = multiple of 128); sliced in wrapper
    c_out_ref[...] = c


@jax.jit
def decoder_forward(embedded_inputs, decoder_input, h0, c0, context, add_mask, params):
    B, L, E = embedded_inputs.shape
    H = h0.shape[1]
    Ep = _round_up(E, LANE)
    Hp = _round_up(H, LANE)
    f32, bf16 = jnp.float32, jnp.bfloat16

    def pad2(x, rows, cols):
        return jnp.pad(x, ((0, rows - x.shape[0]), (0, cols - x.shape[1])))

    def pad_gate_cols(w):
        # (in, 4*H) -> (in, 4*Hp), zero-padding each gate block (i, f, g, o).
        in_dim = w.shape[0]
        w = w.reshape(in_dim, 4, H)
        w = jnp.pad(w, ((0, 0), (0, 0), (0, Hp - H)))
        return w.reshape(in_dim, 4 * Hp)

    # --- fused + zero-padded parameters (MXU operands in bf16, biases in f32) ---
    w_ih = pad2(pad_gate_cols(params["w_ih"]), Ep, 4 * Hp)
    w_hh = pad2(pad_gate_cols(params["w_hh"]), Hp, 4 * Hp)
    w_lstm = jnp.concatenate([w_ih, w_hh], axis=0).astype(bf16)           # (Ep+Hp, 4Hp)
    b_lstm = pad_gate_cols(params["b_ih"] + params["b_hh"]).astype(f32)   # (1, 4Hp)
    w_inp = pad2(params["w_inp"], Hp, Hp).astype(bf16)
    b_inp = pad2(params["b_inp"], 1, Hp).astype(f32)
    w_ctx = pad2(params["w_ctx"], Hp, Hp).astype(bf16)
    b_ctx = pad2(params["b_ctx"], 1, Hp).astype(f32)
    v = pad2(params["v"], 1, Hp).astype(f32)
    w_out = jnp.concatenate([pad2(params["w_out1"], Hp, Hp),
                             pad2(params["w_out2"], Hp, Hp)],
                            axis=0).astype(bf16)                          # (2Hp, Hp)
    b_out = pad2(params["b_out"], 1, Hp).astype(f32)

    # --- zero-padded, lane-dense activations ---
    emb = jnp.pad(embedded_inputs, ((0, 0), (0, 0), (0, Ep - E))).astype(bf16)
    dec0 = pad2(decoder_input, B, Ep).astype(f32)
    h0_p = pad2(h0, B, Hp).astype(f32)
    c0_p = pad2(c0, B, Hp).astype(f32)
    ctx = jnp.pad(context, ((0, 0), (0, 0), (0, Hp - H))).astype(bf16)
    add_mask = add_mask.astype(f32)

    # --- batch tiling (grid over batch, "parallel" => megacore sharding) ---
    tb = min(B, 8)
    if B % tb != 0:
        tb = B                    # fall back to a single block if not divisible
    grid = (B // tb,)

    batch3 = lambda b: (b, 0, 0)
    batch2 = lambda b: (b, 0)
    rep2 = lambda b: (0, 0)

    in_specs = [
        pl.BlockSpec((tb, L, Ep), batch3),        # emb (bf16)
        pl.BlockSpec((tb, Ep), batch2),           # decoder_input
        pl.BlockSpec((tb, Hp), batch2),           # h0
        pl.BlockSpec((tb, Hp), batch2),           # c0
        pl.BlockSpec((tb, L, Hp), batch3),        # context (bf16)
        pl.BlockSpec((tb, L), batch2),            # add_mask
        pl.BlockSpec((Ep + Hp, 4 * Hp), rep2),    # fused LSTM weight
        pl.BlockSpec((1, 4 * Hp), rep2),          # fused LSTM bias
        pl.BlockSpec((Hp, Hp), rep2),             # attention input_linear W
        pl.BlockSpec((1, Hp), rep2),              # attention input_linear b
        pl.BlockSpec((Hp, Hp), rep2),             # attention context_linear W
        pl.BlockSpec((1, Hp), rep2),              # attention context_linear b
        pl.BlockSpec((1, Hp), rep2),              # attention V
        pl.BlockSpec((2 * Hp, Hp), rep2),         # fused hidden_out weight
        pl.BlockSpec((1, Hp), rep2),              # hidden_out bias
    ]
    out_specs = (
        pl.BlockSpec((tb, L), batch2),            # log-probs
        pl.BlockSpec((tb, L), batch2),            # pointers
        pl.BlockSpec((tb, Hp), batch2),           # h (padded, lane-dense)
        pl.BlockSpec((tb, Hp), batch2),           # c (padded, lane-dense)
    )
    out_shape = (
        jax.ShapeDtypeStruct((B, L), f32),
        jax.ShapeDtypeStruct((B, L), jnp.int32),
        jax.ShapeDtypeStruct((B, Hp), f32),
        jax.ShapeDtypeStruct((B, Hp), f32),
    )

    # --- explicit VMEM budget: double-buffered blocks + weights + slack ---
    blk_bytes = (tb * L * Ep * 2 + tb * L * Hp * 2            # emb, context (bf16)
                 + tb * (Ep + 2 * Hp) * 4 + tb * L * 4        # dec0/h0/c0, add_mask
                 + tb * L * 8 + tb * Hp * 8)                  # outputs
    w_bytes = ((Ep + Hp) * 4 * Hp + 4 * Hp * Hp) * 2 + 9 * Hp * 4
    scratch = 4 * tb * L * Hp * 4                             # ctx_proj(+bf16), u, ...
    vmem_limit = int(min(max(2 * (blk_bytes + w_bytes) + scratch + (8 << 20),
                             16 << 20), 48 << 20))            # safe on v5e/v6e/v7x

    logp, ptrs, h_out, c_out = pl.pallas_call(
        decoder_kernel,
        grid=grid,
        in_specs=in_specs,
        out_specs=out_specs,
        out_shape=out_shape,
        compiler_params=pltpu.CompilerParams(
            dimension_semantics=("parallel",),
            vmem_limit_bytes=vmem_limit),
    )(emb, dec0, h0_p, c0_p, ctx, add_mask,
      w_lstm, b_lstm, w_inp, b_inp, w_ctx, b_ctx, v, w_out, b_out)

    return (logp, ptrs), (h_out[:, :H], c_out[:, :H])


# TODO(synk): non-greedy Categorical sampling (greedy=False path) needs in-kernel
# PRNG-based sampling; only the greedy=True path is implemented.

if __name__ == "__main__":
    B, L, E, H = 2, 8, 32, 32
    key = jax.random.PRNGKey(0)
    ks = jax.random.split(key, 16)

    def u(k, shape, scale=0.1):
        return jax.random.uniform(k, shape, jnp.float32, -scale, scale)

    params = dict(
        w_ih=u(ks[0], (E, 4 * H)), b_ih=u(ks[1], (1, 4 * H)),
        w_hh=u(ks[2], (H, 4 * H)), b_hh=u(ks[3], (1, 4 * H)),
        w_inp=u(ks[4], (H, H)), b_inp=u(ks[5], (1, H)),
        w_ctx=u(ks[6], (H, H)), b_ctx=u(ks[7], (1, H)),
        v=jax.random.uniform(ks[8], (1, H), jnp.float32, -1.0, 1.0),
        w_out1=u(ks[9], (H, H)), w_out2=u(ks[10], (H, H)), b_out=u(ks[11], (1, H)),
    )

    embedded_inputs = jax.random.normal(ks[12], (B, L, E), jnp.float32)
    decoder_input = jax.random.normal(ks[13], (B, E), jnp.float32)
    h0 = jax.random.normal(ks[14], (B, H), jnp.float32)
    c0 = jnp.zeros((B, H), jnp.float32)
    context = jax.random.normal(ks[15], (B, L, H), jnp.float32)
    add_mask = jnp.ones((B, L), jnp.float32)

    (log_probs, pointers), (h_out, c_out) = decoder_forward(
        embedded_inputs, decoder_input, h0, c0, context, add_mask, params)
    jax.block_until_ready((log_probs, pointers, h_out, c_out))

    assert log_probs.shape == (B, L) and pointers.shape == (B, L)
    assert h_out.shape == (B, H) and c_out.shape == (B, H)
    assert bool(jnp.all(jnp.isfinite(log_probs)))
    assert bool(jnp.all(jnp.isfinite(h_out))) and bool(jnp.all(jnp.isfinite(c_out)))
    # with add_mask all-ones, greedy pointer-net picks each position exactly once
    assert all(sorted(map(int, pointers[b])) == list(range(L)) for b in range(B))
    print("KERNEL_OK")
</pallas_src>

<mosaic_0001>
module attributes {stable_mosaic.version = 11 : i64} {
  func.func @decoder_kernel(%arg0: i32, %arg1: memref<2x8x128xbf16, #tpu.memory_space<vmem>>, %arg2: memref<2x128xf32, #tpu.memory_space<vmem>>, %arg3: memref<2x128xf32, #tpu.memory_space<vmem>>, %arg4: memref<2x128xf32, #tpu.memory_space<vmem>>, %arg5: memref<2x8x128xbf16, #tpu.memory_space<vmem>>, %arg6: memref<2x8xf32, #tpu.memory_space<vmem>>, %arg7: memref<256x512xbf16, #tpu.memory_space<vmem>>, %arg8: memref<1x512xf32, #tpu.memory_space<vmem>>, %arg9: memref<128x128xbf16, #tpu.memory_space<vmem>>, %arg10: memref<1x128xf32, #tpu.memory_space<vmem>>, %arg11: memref<128x128xbf16, #tpu.memory_space<vmem>>, %arg12: memref<1x128xf32, #tpu.memory_space<vmem>>, %arg13: memref<1x128xf32, #tpu.memory_space<vmem>>, %arg14: memref<256x128xbf16, #tpu.memory_space<vmem>>, %arg15: memref<1x128xf32, #tpu.memory_space<vmem>>, %arg16: memref<2x8xf32, #tpu.memory_space<vmem>>, %arg17: memref<2x8xi32, #tpu.memory_space<vmem>>, %arg18: memref<2x128xf32, #tpu.memory_space<vmem>>, %arg19: memref<2x128xf32, #tpu.memory_space<vmem>>) attributes {dimension_semantics = [#tpu.dimension_semantics<parallel>], iteration_bounds = array<i64: 1>, scalar_prefetch = 0 : i64, scratch_operands = 0 : i64, tpu.core_type = #tpu.core_type<tc>, window_params = [{transform_indices = @transform_0, window_bounds = array<i64: 2, 8, 128>}, {transform_indices = @transform_1, window_bounds = array<i64: 2, 128>}, {transform_indices = @transform_2, window_bounds = array<i64: 2, 128>}, {transform_indices = @transform_3, window_bounds = array<i64: 2, 128>}, {transform_indices = @transform_4, window_bounds = array<i64: 2, 8, 128>}, {transform_indices = @transform_5, window_bounds = array<i64: 2, 8>}, {pipeline_mode = #tpu.pipeline_mode<synchronous>, transform_indices = @transform_6, window_bounds = array<i64: 256, 512>}, {pipeline_mode = #tpu.pipeline_mode<synchronous>, transform_indices = @transform_7, window_bounds = array<i64: 1, 512>}, {pipeline_mode = #tpu.pipeline_mode<synchronous>, transform_indices = @transform_8, window_bounds = array<i64: 128, 128>}, {pipeline_mode = #tpu.pipeline_mode<synchronous>, transform_indices = @transform_9, window_bounds = array<i64: 1, 128>}, {pipeline_mode = #tpu.pipeline_mode<synchronous>, transform_indices = @transform_10, window_bounds = array<i64: 128, 128>}, {pipeline_mode = #tpu.pipeline_mode<synchronous>, transform_indices = @transform_11, window_bounds = array<i64: 1, 128>}, {pipeline_mode = #tpu.pipeline_mode<synchronous>, transform_indices = @transform_12, window_bounds = array<i64: 1, 128>}, {pipeline_mode = #tpu.pipeline_mode<synchronous>, transform_indices = @transform_13, window_bounds = array<i64: 256, 128>}, {pipeline_mode = #tpu.pipeline_mode<synchronous>, transform_indices = @transform_14, window_bounds = array<i64: 1, 128>}, {transform_indices = @transform_15, window_bounds = array<i64: 2, 8>}, {transform_indices = @transform_16, window_bounds = array<i64: 2, 8>}, {transform_indices = @transform_17, window_bounds = array<i64: 2, 128>}, {transform_indices = @transform_18, window_bounds = array<i64: 2, 128>}]} {
    %c0 = arith.constant 0 : index
    %c0_0 = arith.constant 0 : index
    %c0_1 = arith.constant 0 : index
    %0 = vector.load %arg1[%c0, %c0_0, %c0_1] : memref<2x8x128xbf16, #tpu.memory_space<vmem>>, vector<2x8x128xbf16>
    %c0_2 = arith.constant 0 : index
    %c0_3 = arith.constant 0 : index
    %c0_4 = arith.constant 0 : index
    %1 = vector.load %arg5[%c0_2, %c0_3, %c0_4] : memref<2x8x128xbf16, #tpu.memory_space<vmem>>, vector<2x8x128xbf16>
    %c0_5 = arith.constant 0 : index
    %c0_6 = arith.constant 0 : index
    %2 = vector.load %arg6[%c0_5, %c0_6] : memref<2x8xf32, #tpu.memory_space<vmem>>, vector<2x8xf32>
    %c0_7 = arith.constant 0 : index
    %c0_8 = arith.constant 0 : index
    %3 = vector.load %arg7[%c0_7, %c0_8] : memref<256x512xbf16, #tpu.memory_space<vmem>>, vector<256x512xbf16>
    %c0_9 = arith.constant 0 : index
    %c0_10 = arith.constant 0 : index
    %4 = vector.load %arg8[%c0_9, %c0_10] : memref<1x512xf32, #tpu.memory_space<vmem>>, vector<1x512xf32>
    %c0_11 = arith.constant 0 : index
    %c0_12 = arith.constant 0 : index
    %5 = vector.load %arg9[%c0_11, %c0_12] : memref<128x128xbf16, #tpu.memory_space<vmem>>, vector<128x128xbf16>
    %c0_13 = arith.constant 0 : index
    %c0_14 = arith.constant 0 : index
    %6 = vector.load %arg10[%c0_13, %c0_14] : memref<1x128xf32, #tpu.memory_space<vmem>>, vector<1x128xf32>
    %c0_15 = arith.constant 0 : index
    %c0_16 = arith.constant 0 : index
    %7 = vector.load %arg11[%c0_15, %c0_16] : memref<128x128xbf16, #tpu.memory_space<vmem>>, vector<128x128xbf16>
    %c0_17 = arith.constant 0 : index
    %c0_18 = arith.constant 0 : index
    %8 = vector.load %arg12[%c0_17, %c0_18] : memref<1x128xf32, #tpu.memory_space<vmem>>, vector<1x128xf32>
    %c0_19 = arith.constant 0 : index
    %c0_20 = arith.constant 0 : index
    %9 = vector.load %arg14[%c0_19, %c0_20] : memref<256x128xbf16, #tpu.memory_space<vmem>>, vector<256x128xbf16>
    %c0_21 = arith.constant 0 : index
    %c0_22 = arith.constant 0 : index
    %10 = vector.load %arg15[%c0_21, %c0_22] : memref<1x128xf32, #tpu.memory_space<vmem>>, vector<1x128xf32>
    %c0_23 = arith.constant 0 : index
    %c0_24 = arith.constant 0 : index
    %11 = vector.load %arg13[%c0_23, %c0_24] : memref<1x128xf32, #tpu.memory_space<vmem>>, vector<1x128xf32>
    %12 = vector.shape_cast %11 : vector<1x128xf32> to vector<1x1x128xf32>
    %13 = vector.shape_cast %1 : vector<2x8x128xbf16> to vector<16x128xbf16>
    %cst = arith.constant dense<0.000000e+00> : vector<16x128xf32>
    %14 = tpu.matmul %13, %7, %cst {dimension_numbers = #tpu.dot_dimension_numbers<[1], [0], [0], [1], [0, 0, 1, 1], [], []>} : vector<16x128xbf16>, vector<128x128xbf16>, vector<16x128xf32> -> vector<16x128xf32>
    %15 = vector.broadcast %8 : vector<1x128xf32> to vector<16x128xf32>
    %16 = arith.addf %14, %15 : vector<16x128xf32>
    %17 = vector.shape_cast %16 : vector<16x128xf32> to vector<2x8x128xf32>
    %18 = arith.truncf %17 : vector<2x8x128xf32> to vector<2x8x128xbf16>
    %19 = tpu.iota {dimensions = array<i32: 1>} : vector<2x8xi32>
    %cst_25 = arith.constant dense<0.000000e+00> : vector<2xf32>
    %20 = vector.multi_reduction <add>, %2, %cst_25 [1] : vector<2x8xf32> to vector<2xf32>
    %21 = vector.shape_cast %20 : vector<2xf32> to vector<2x1xf32>
    %c0_26 = arith.constant 0 : index
    %c0_27 = arith.constant 0 : index
    %22 = vector.load %arg2[%c0_26, %c0_27] : memref<2x128xf32, #tpu.memory_space<vmem>>, vector<2x128xf32>
    %c0_28 = arith.constant 0 : index
    %c0_29 = arith.constant 0 : index
    %23 = vector.load %arg3[%c0_28, %c0_29] : memref<2x128xf32, #tpu.memory_space<vmem>>, vector<2x128xf32>
    %c0_30 = arith.constant 0 : index
    %c0_31 = arith.constant 0 : index
    %24 = vector.load %arg4[%c0_30, %c0_31] : memref<2x128xf32, #tpu.memory_space<vmem>>, vector<2x128xf32>
    %cst_32 = arith.constant 1.000000e+00 : f32
    %25 = vector.broadcast %cst_32 : f32 to vector<2x8xf32>
    %26 = tpu.concatenate %22, %23 in 1 : vector<2x128xf32>, vector<2x128xf32> -> vector<2x256xf32>
    %27 = arith.truncf %26 : vector<2x256xf32> to vector<2x256xbf16>
    %cst_33 = arith.constant dense<0.000000e+00> : vector<2x512xf32>
    %28 = tpu.matmul %27, %3, %cst_33 {dimension_numbers = #tpu.dot_dimension_numbers<[1], [0], [0], [1], [0, 0, 1, 1], [], []>} : vector<2x256xbf16>, vector<256x512xbf16>, vector<2x512xf32> -> vector<2x512xf32>
    %29 = vector.broadcast %4 : vector<1x512xf32> to vector<2x512xf32>
    %30 = arith.addf %28, %29 : vector<2x512xf32>
    %31 = vector.extract_strided_slice %30 {offsets = [0, 0], sizes = [2, 128], strides = [1, 1]} : vector<2x512xf32> to vector<2x128xf32>
    %32 = arith.negf %31 : vector<2x128xf32>
    %33 = math.exp %32 : vector<2x128xf32>
    %cst_34 = arith.constant 1.000000e+00 : f32
    %34 = vector.broadcast %cst_34 : f32 to vector<2x128xf32>
    %35 = arith.addf %34, %33 : vector<2x128xf32>
    %36 = arith.divf %34, %35 : vector<2x128xf32>
    %37 = vector.extract_strided_slice %30 {offsets = [0, 128], sizes = [2, 128], strides = [1, 1]} : vector<2x512xf32> to vector<2x128xf32>
    %38 = arith.negf %37 : vector<2x128xf32>
    %39 = math.exp %38 : vector<2x128xf32>
    %cst_35 = arith.constant 1.000000e+00 : f32
    %40 = vector.broadcast %cst_35 : f32 to vector<2x128xf32>
    %41 = arith.addf %40, %39 : vector<2x128xf32>
    %42 = arith.divf %40, %41 : vector<2x128xf32>
    %43 = vector.extract_strided_slice %30 {offsets = [0, 256], sizes = [2, 128], strides = [1, 1]} : vector<2x512xf32> to vector<2x128xf32>
    %44 = math.tanh %43 : vector<2x128xf32>
    %45 = vector.extract_strided_slice %30 {offsets = [0, 384], sizes = [2, 128], strides = [1, 1]} : vector<2x512xf32> to vector<2x128xf32>
    %46 = arith.negf %45 : vector<2x128xf32>
    %47 = math.exp %46 : vector<2x128xf32>
    %cst_36 = arith.constant 1.000000e+00 : f32
    %48 = vector.broadcast %cst_36 : f32 to vector<2x128xf32>
    %49 = arith.addf %48, %47 : vector<2x128xf32>
    %50 = arith.divf %48, %49 : vector<2x128xf32>
    %51 = arith.mulf %42, %24 : vector<2x128xf32>
    %52 = arith.mulf %36, %44 : vector<2x128xf32>
    %53 = arith.addf %51, %52 : vector<2x128xf32>
    %54 = math.tanh %53 : vector<2x128xf32>
    %55 = arith.mulf %50, %54 : vector<2x128xf32>
    %56 = arith.truncf %55 : vector<2x128xf32> to vector<2x128xbf16>
    %cst_37 = arith.constant dense<0.000000e+00> : vector<2x128xf32>
    %57 = tpu.matmul %56, %5, %cst_37 {dimension_numbers = #tpu.dot_dimension_numbers<[1], [0], [0], [1], [0, 0, 1, 1], [], []>} : vector<2x128xbf16>, vector<128x128xbf16>, vector<2x128xf32> -> vector<2x128xf32>
    %58 = vector.broadcast %6 : vector<1x128xf32> to vector<2x128xf32>
    %59 = arith.addf %57, %58 : vector<2x128xf32>
    %60 = vector.shape_cast %59 : vector<2x128xf32> to vector<2x1x128xf32>
    %61 = vector.broadcast %60 : vector<2x1x128xf32> to vector<2x8x128xf32>
    %62 = arith.addf %61, %17 : vector<2x8x128xf32>
    %63 = math.tanh %62 : vector<2x8x128xf32>
    %64 = vector.broadcast %12 : vector<1x1x128xf32> to vector<2x8x128xf32>
    %65 = arith.mulf %63, %64 : vector<2x8x128xf32>
    %cst_38 = arith.constant dense<0.000000e+00> : vector<2x8xf32>
    %66 = vector.multi_reduction <add>, %65, %cst_38 [2] : vector<2x8x128xf32> to vector<2x8xf32>
    %cst_39 = arith.constant 0.000000e+00 : f32
    %67 = vector.broadcast %cst_39 : f32 to vector<2x8xf32>
    %68 = arith.cmpf oeq, %25, %67 : vector<2x8xf32>
    %cst_40 = arith.constant -1.000000e+30 : f32
    %69 = vector.broadcast %cst_40 : f32 to vector<2x8xf32>
    %70 = arith.select %68, %69, %66 : vector<2x8xi1>, vector<2x8xf32>
    %cst_41 = arith.constant dense<0xFF800000> : vector<2xf32>
    %71 = vector.multi_reduction <maximumf>, %70, %cst_41 [1] : vector<2x8xf32> to vector<2xf32>
    %72 = vector.shape_cast %71 : vector<2xf32> to vector<2x1xf32>
    %73 = vector.broadcast %72 : vector<2x1xf32> to vector<2x8xf32>
    %74 = arith.subf %70, %73 : vector<2x8xf32>
    %75 = math.exp %74 : vector<2x8xf32>
    %cst_42 = arith.constant dense<0.000000e+00> : vector<2xf32>
    %76 = vector.multi_reduction <add>, %75, %cst_42 [1] : vector<2x8xf32> to vector<2xf32>
    %77 = vector.shape_cast %76 : vector<2xf32> to vector<2x1xf32>
    %78 = tpu.reciprocal %77 {approx = true} : vector<2x1xf32> -> vector<2x1xf32>
    %79 = vector.broadcast %78 : vector<2x1xf32> to vector<2x8xf32>
    %80 = arith.mulf %75, %79 : vector<2x8xf32>
    %81 = vector.shape_cast %80 : vector<2x8xf32> to vector<2x1x8xf32>
    %82 = arith.truncf %81 : vector<2x1x8xf32> to vector<2x1x8xbf16>
    "tpu.trace_start"() <{level = 10 : i32, message = "bql,blh->bqh"}> : () -> ()
    %cst_43 = arith.constant dense<0.000000e+00> : vector<2x1x128xf32>
    %83 = tpu.matmul %82, %18, %cst_43 {dimension_numbers = #tpu.dot_dimension_numbers<[2], [1], [1], [2], [0, 0, 0, 1, 1, 2], [0], [0]>} : vector<2x1x8xbf16>, vector<2x8x128xbf16>, vector<2x1x128xf32> -> vector<2x1x128xf32>
    "tpu.trace_stop"() : () -> ()
    %84 = vector.shape_cast %83 : vector<2x1x128xf32> to vector<2x128xf32>
    %85 = tpu.concatenate %84, %55 in 1 : vector<2x128xf32>, vector<2x128xf32> -> vector<2x256xf32>
    %86 = arith.truncf %85 : vector<2x256xf32> to vector<2x256xbf16>
    %cst_44 = arith.constant dense<0.000000e+00> : vector<2x128xf32>
    %87 = tpu.matmul %86, %9, %cst_44 {dimension_numbers = #tpu.dot_dimension_numbers<[1], [0], [0], [1], [0, 0, 1, 1], [], []>} : vector<2x256xbf16>, vector<256x128xbf16>, vector<2x128xf32> -> vector<2x128xf32>
    %88 = vector.broadcast %10 : vector<1x128xf32> to vector<2x128xf32>
    %89 = arith.addf %87, %88 : vector<2x128xf32>
    %90 = math.tanh %89 : vector<2x128xf32>
    %cst_45 = arith.constant 9.99999993E-9 : f32
    %91 = vector.broadcast %cst_45 : f32 to vector<2x8xf32>
    %92 = arith.addf %80, %91 : vector<2x8xf32>
    %93 = arith.mulf %92, %2 : vector<2x8xf32>
    %cst_46 = arith.constant dense<0.000000e+00> : vector<2xf32>
    %94 = vector.multi_reduction <add>, %93, %cst_46 [1] : vector<2x8xf32> to vector<2xf32>
    %95 = vector.shape_cast %94 : vector<2xf32> to vector<2x1xf32>
    %96 = tpu.reciprocal %95 {approx = true} : vector<2x1xf32> -> vector<2x1xf32>
    %97 = vector.broadcast %96 : vector<2x1xf32> to vector<2x8xf32>
    %98 = arith.mulf %93, %97 : vector<2x8xf32>
    %cst_47 = arith.constant 0.000000e+00 : f32
    %99 = vector.broadcast %cst_47 : f32 to vector<2x1xf32>
    %100 = arith.cmpf oge, %21, %99 : vector<2x1xf32>
    %101 = arith.extui %100 : vector<2x1xi1> to vector<2x1xi32>
    %102 = arith.sitofp %101 : vector<2x1xi32> to vector<2x1xf32>
    %103 = vector.broadcast %102 : vector<2x1xf32> to vector<2x8xf32>
    %104 = arith.mulf %25, %103 : vector<2x8xf32>
    %105 = arith.mulf %98, %104 : vector<2x8xf32>
    %cst_48 = arith.constant dense<0xFF800000> : vector<2xf32>
    %106 = vector.multi_reduction <maximumf>, %105, %cst_48 [1] : vector<2x8xf32> to vector<2xf32>
    %107 = vector.shape_cast %106 : vector<2xf32> to vector<2x1xf32>
    %108 = vector.broadcast %107 : vector<2x1xf32> to vector<2x8xf32>
    %109 = arith.cmpf oeq, %105, %108 : vector<2x8xf32>
    %c8_i32 = arith.constant 8 : i32
    %110 = vector.broadcast %c8_i32 : i32 to vector<2x8xi32>
    %111 = arith.select %109, %19, %110 : vector<2x8xi1>, vector<2x8xi32>
    %cst_49 = arith.constant dense<2147483647> : vector<2xi32>
    %112 = vector.multi_reduction <minsi>, %111, %cst_49 [1] : vector<2x8xi32> to vector<2xi32>
    %113 = vector.shape_cast %112 : vector<2xi32> to vector<2x1xi32>
    %114 = vector.broadcast %113 : vector<2x1xi32> to vector<2x8xi32>
    %115 = arith.cmpi eq, %19, %114 : vector<2x8xi32>
    %116 = arith.extui %115 : vector<2x8xi1> to vector<2x8xi32>
    %117 = arith.sitofp %116 : vector<2x8xi32> to vector<2x8xf32>
    %cst_50 = arith.constant 9.99999993E-9 : f32
    %118 = vector.broadcast %cst_50 : f32 to vector<2x8xf32>
    %119 = arith.addf %105, %118 : vector<2x8xf32>
    %120 = arith.mulf %119, %117 : vector<2x8xf32>
    %cst_51 = arith.constant dense<0.000000e+00> : vector<2xf32>
    %121 = vector.multi_reduction <add>, %120, %cst_51 [1] : vector<2x8xf32> to vector<2xf32>
    %122 = vector.shape_cast %121 : vector<2xf32> to vector<2x1xf32>
    %123 = math.log %122 : vector<2x1xf32>
    %cst_52 = arith.constant dense<0.000000e+00> : vector<2xf32>
    %124 = vector.multi_reduction <add>, %119, %cst_52 [1] : vector<2x8xf32> to vector<2xf32>
    %125 = vector.shape_cast %124 : vector<2xf32> to vector<2x1xf32>
    %126 = math.log %125 : vector<2x1xf32>
    %127 = arith.subf %123, %126 : vector<2x1xf32>
    %c0_53 = arith.constant 0 : index
    %c0_54 = arith.constant 0 : index
    %128 = vector.load %arg16[%c0_53, %c0_54] : memref<2x8xf32, #tpu.memory_space<vmem>>, vector<2x1xf32>
    tpu.vector_store %arg16[%c0_53, %c0_54], %127 {strides = array<i32>} : memref<2x8xf32, #tpu.memory_space<vmem>>, vector<2x1xf32>,
    %c0_55 = arith.constant 0 : index
    %c0_56 = arith.constant 0 : index
    %129 = vector.load %arg17[%c0_55, %c0_56] : memref<2x8xi32, #tpu.memory_space<vmem>>, vector<2x1xi32>
    tpu.vector_store %arg17[%c0_55, %c0_56], %113 {strides = array<i32>} : memref<2x8xi32, #tpu.memory_space<vmem>>, vector<2x1xi32>,
    %cst_57 = arith.constant 1.000000e+00 : f32
    %130 = vector.broadcast %cst_57 : f32 to vector<2x8xf32>
    %131 = arith.subf %130, %117 : vector<2x8xf32>
    %132 = arith.mulf %25, %131 : vector<2x8xf32>
    %133 = vector.shape_cast %117 : vector<2x8xf32> to vector<2x1x8xf32>
    %134 = arith.truncf %133 : vector<2x1x8xf32> to vector<2x1x8xbf16>
    "tpu.trace_start"() <{level = 10 : i32, message = "bql,ble->bqe"}> : () -> ()
    %cst_58 = arith.constant dense<0.000000e+00> : vector<2x1x128xf32>
    %135 = tpu.matmul %134, %0, %cst_58 {dimension_numbers = #tpu.dot_dimension_numbers<[2], [1], [1], [2], [0, 0, 0, 1, 1, 2], [0], [0]>} : vector<2x1x8xbf16>, vector<2x8x128xbf16>, vector<2x1x128xf32> -> vector<2x1x128xf32>
    "tpu.trace_stop"() : () -> ()
    %136 = vector.shape_cast %135 : vector<2x1x128xf32> to vector<2x128xf32>
    %137 = tpu.concatenate %136, %90 in 1 : vector<2x128xf32>, vector<2x128xf32> -> vector<2x256xf32>
    %138 = arith.truncf %137 : vector<2x256xf32> to vector<2x256xbf16>
    %cst_59 = arith.constant dense<0.000000e+00> : vector<2x512xf32>
    %139 = tpu.matmul %138, %3, %cst_59 {dimension_numbers = #tpu.dot_dimension_numbers<[1], [0], [0], [1], [0, 0, 1, 1], [], []>} : vector<2x256xbf16>, vector<256x512xbf16>, vector<2x512xf32> -> vector<2x512xf32>
    %140 = vector.broadcast %4 : vector<1x512xf32> to vector<2x512xf32>
    %141 = arith.addf %139, %140 : vector<2x512xf32>
    %142 = vector.extract_strided_slice %141 {offsets = [0, 0], sizes = [2, 128], strides = [1, 1]} : vector<2x512xf32> to vector<2x128xf32>
    %143 = arith.negf %142 : vector<2x128xf32>
    %144 = math.exp %143 : vector<2x128xf32>
    %cst_60 = arith.constant 1.000000e+00 : f32
    %145 = vector.broadcast %cst_60 : f32 to vector<2x128xf32>
    %146 = arith.addf %145, %144 : vector<2x128xf32>
    %147 = arith.divf %145, %146 : vector<2x128xf32>
    %148 = vector.extract_strided_slice %141 {offsets = [0, 128], sizes = [2, 128], strides = [1, 1]} : vector<2x512xf32> to vector<2x128xf32>
    %149 = arith.negf %148 : vector<2x128xf32>
    %150 = math.exp %149 : vector<2x128xf32>
    %cst_61 = arith.constant 1.000000e+00 : f32
    %151 = vector.broadcast %cst_61 : f32 to vector<2x128xf32>
    %152 = arith.addf %151, %150 : vector<2x128xf32>
    %153 = arith.divf %151, %152 : vector<2x128xf32>
    %154 = vector.extract_strided_slice %141 {offsets = [0, 256], sizes = [2, 128], strides = [1, 1]} : vector<2x512xf32> to vector<2x128xf32>
    %155 = math.tanh %154 : vector<2x128xf32>
    %156 = vector.extract_strided_slice %141 {offsets = [0, 384], sizes = [2, 128], strides = [1, 1]} : vector<2x512xf32> to vector<2x128xf32>
    %157 = arith.negf %156 : vector<2x128xf32>
    %158 = math.exp %157 : vector<2x128xf32>
    %cst_62 = arith.constant 1.000000e+00 : f32
    %159 = vector.broadcast %cst_62 : f32 to vector<2x128xf32>
    %160 = arith.addf %159, %158 : vector<2x128xf32>
    %161 = arith.divf %159, %160 : vector<2x128xf32>
    %162 = arith.mulf %153, %53 : vector<2x128xf32>
    %163 = arith.mulf %147, %155 : vector<2x128xf32>
    %164 = arith.addf %162, %163 : vector<2x128xf32>
    %165 = math.tanh %164 : vector<2x128xf32>
    %166 = arith.mulf %161, %165 : vector<2x128xf32>
    %167 = arith.truncf %166 : vector<2x128xf32> to vector<2x128xbf16>
    %cst_63 = arith.constant dense<0.000000e+00> : vector<2x128xf32>
    %168 = tpu.matmul %167, %5, %cst_63 {dimension_numbers = #tpu.dot_dimension_numbers<[1], [0], [0], [1], [0, 0, 1, 1], [], []>} : vector<2x128xbf16>, vector<128x128xbf16>, vector<2x128xf32> -> vector<2x128xf32>
    %169 = vector.broadcast %6 : vector<1x128xf32> to vector<2x128xf32>
    %170 = arith.addf %168, %169 : vector<2x128xf32>
    %171 = vector.shape_cast %170 : vector<2x128xf32> to vector<2x1x128xf32>
    %172 = vector.broadcast %171 : vector<2x1x128xf32> to vector<2x8x128xf32>
    %173 = arith.addf %172, %17 : vector<2x8x128xf32>
    %174 = math.tanh %173 : vector<2x8x128xf32>
    %175 = vector.broadcast %12 : vector<1x1x128xf32> to vector<2x8x128xf32>
    %176 = arith.mulf %174, %175 : vector<2x8x128xf32>
    %cst_64 = arith.constant dense<0.000000e+00> : vector<2x8xf32>
    %177 = vector.multi_reduction <add>, %176, %cst_64 [2] : vector<2x8x128xf32> to vector<2x8xf32>
    %cst_65 = arith.constant 0.000000e+00 : f32
    %178 = vector.broadcast %cst_65 : f32 to vector<2x8xf32>
    %179 = arith.cmpf oeq, %132, %178 : vector<2x8xf32>
    %cst_66 = arith.constant -1.000000e+30 : f32
    %180 = vector.broadcast %cst_66 : f32 to vector<2x8xf32>
    %181 = arith.select %179, %180, %177 : vector<2x8xi1>, vector<2x8xf32>
    %cst_67 = arith.constant dense<0xFF800000> : vector<2xf32>
    %182 = vector.multi_reduction <maximumf>, %181, %cst_67 [1] : vector<2x8xf32> to vector<2xf32>
    %183 = vector.shape_cast %182 : vector<2xf32> to vector<2x1xf32>
    %184 = vector.broadcast %183 : vector<2x1xf32> to vector<2x8xf32>
    %185 = arith.subf %181, %184 : vector<2x8xf32>
    %186 = math.exp %185 : vector<2x8xf32>
    %cst_68 = arith.constant dense<0.000000e+00> : vector<2xf32>
    %187 = vector.multi_reduction <add>, %186, %cst_68 [1] : vector<2x8xf32> to vector<2xf32>
    %188 = vector.shape_cast %187 : vector<2xf32> to vector<2x1xf32>
    %189 = tpu.reciprocal %188 {approx = true} : vector<2x1xf32> -> vector<2x1xf32>
    %190 = vector.broadcast %189 : vector<2x1xf32> to vector<2x8xf32>
    %191 = arith.mulf %186, %190 : vector<2x8xf32>
    %192 = vector.shape_cast %191 : vector<2x8xf32> to vector<2x1x8xf32>
    %193 = arith.truncf %192 : vector<2x1x8xf32> to vector<2x1x8xbf16>
    "tpu.trace_start"() <{level = 10 : i32, message = "bql,blh->bqh"}> : () -> ()
    %cst_69 = arith.constant dense<0.000000e+00> : vector<2x1x128xf32>
    %194 = tpu.matmul %193, %18, %cst_69 {dimension_numbers = #tpu.dot_dimension_numbers<[2], [1], [1], [2], [0, 0, 0, 1, 1, 2], [0], [0]>} : vector<2x1x8xbf16>, vector<2x8x128xbf16>, vector<2x1x128xf32> -> vector<2x1x128xf32>
    "tpu.trace_stop"() : () -> ()
    %195 = vector.shape_cast %194 : vector<2x1x128xf32> to vector<2x128xf32>
    %196 = tpu.concatenate %195, %166 in 1 : vector<2x128xf32>, vector<2x128xf32> -> vector<2x256xf32>
    %197 = arith.truncf %196 : vector<2x256xf32> to vector<2x256xbf16>
    %cst_70 = arith.constant dense<0.000000e+00> : vector<2x128xf32>
    %198 = tpu.matmul %197, %9, %cst_70 {dimension_numbers = #tpu.dot_dimension_numbers<[1], [0], [0], [1], [0, 0, 1, 1], [], []>} : vector<2x256xbf16>, vector<256x128xbf16>, vector<2x128xf32> -> vector<2x128xf32>
    %199 = vector.broadcast %10 : vector<1x128xf32> to vector<2x128xf32>
    %200 = arith.addf %198, %199 : vector<2x128xf32>
    %201 = math.tanh %200 : vector<2x128xf32>
    %cst_71 = arith.constant 9.99999993E-9 : f32
    %202 = vector.broadcast %cst_71 : f32 to vector<2x8xf32>
    %203 = arith.addf %191, %202 : vector<2x8xf32>
    %204 = arith.mulf %203, %2 : vector<2x8xf32>
    %cst_72 = arith.constant dense<0.000000e+00> : vector<2xf32>
    %205 = vector.multi_reduction <add>, %204, %cst_72 [1] : vector<2x8xf32> to vector<2xf32>
    %206 = vector.shape_cast %205 : vector<2xf32> to vector<2x1xf32>
    %207 = tpu.reciprocal %206 {approx = true} : vector<2x1xf32> -> vector<2x1xf32>
    %208 = vector.broadcast %207 : vector<2x1xf32> to vector<2x8xf32>
    %209 = arith.mulf %204, %208 : vector<2x8xf32>
    %cst_73 = arith.constant 1.000000e+00 : f32
    %210 = vector.broadcast %cst_73 : f32 to vector<2x1xf32>
    %211 = arith.cmpf oge, %21, %210 : vector<2x1xf32>
    %212 = arith.extui %211 : vector<2x1xi1> to vector<2x1xi32>
    %213 = arith.sitofp %212 : vector<2x1xi32> to vector<2x1xf32>
    %214 = vector.broadcast %213 : vector<2x1xf32> to vector<2x8xf32>
    %215 = arith.mulf %132, %214 : vector<2x8xf32>
    %216 = arith.mulf %209, %215 : vector<2x8xf32>
    %cst_74 = arith.constant dense<0xFF800000> : vector<2xf32>
    %217 = vector.multi_reduction <maximumf>, %216, %cst_74 [1] : vector<2x8xf32> to vector<2xf32>
    %218 = vector.shape_cast %217 : vector<2xf32> to vector<2x1xf32>
    %219 = vector.broadcast %218 : vector<2x1xf32> to vector<2x8xf32>
    %220 = arith.cmpf oeq, %216, %219 : vector<2x8xf32>
    %c8_i32_75 = arith.constant 8 : i32
    %221 = vector.broadcast %c8_i32_75 : i32 to vector<2x8xi32>
    %222 = arith.select %220, %19, %221 : vector<2x8xi1>, vector<2x8xi32>
    %cst_76 = arith.constant dense<2147483647> : vector<2xi32>
    %223 = vector.multi_reduction <minsi>, %222, %cst_76 [1] : vector<2x8xi32> to vector<2xi32>
    %224 = vector.shape_cast %223 : vector<2xi32> to vector<2x1xi32>
    %225 = vector.broadcast %224 : vector<2x1xi32> to vector<2x8xi32>
    %226 = arith.cmpi eq, %19, %225 : vector<2x8xi32>
    %227 = arith.extui %226 : vector<2x8xi1> to vector<2x8xi32>
    %228 = arith.sitofp %227 : vector<2x8xi32> to vector<2x8xf32>
    %cst_77 = arith.constant 9.99999993E-9 : f32
    %229 = vector.broadcast %cst_77 : f32 to vector<2x8xf32>
    %230 = arith.addf %216, %229 : vector<2x8xf32>
    %231 = arith.mulf %230, %228 : vector<2x8xf32>
    %cst_78 = arith.constant dense<0.000000e+00> : vector<2xf32>
    %232 = vector.multi_reduction <add>, %231, %cst_78 [1] : vector<2x8xf32> to vector<2xf32>
    %233 = vector.shape_cast %232 : vector<2xf32> to vector<2x1xf32>
    %234 = math.log %233 : vector<2x1xf32>
    %cst_79 = arith.constant dense<0.000000e+00> : vector<2xf32>
    %235 = vector.multi_reduction <add>, %230, %cst_79 [1] : vector<2x8xf32> to vector<2xf32>
    %236 = vector.shape_cast %235 : vector<2xf32> to vector<2x1xf32>
    %237 = math.log %236 : vector<2x1xf32>
    %238 = arith.subf %234, %237 : vector<2x1xf32>
    %c0_80 = arith.constant 0 : index
    %c1 = arith.constant 1 : index
    %239 = vector.load %arg16[%c0_80, %c1] : memref<2x8xf32, #tpu.memory_space<vmem>>, vector<2x1xf32>
    tpu.vector_store %arg16[%c0_80, %c1], %238 {strides = array<i32>} : memref<2x8xf32, #tpu.memory_space<vmem>>, vector<2x1xf32>,
    %c0_81 = arith.constant 0 : index
    %c1_82 = arith.constant 1 : index
    %240 = vector.load %arg17[%c0_81, %c1_82] : memref<2x8xi32, #tpu.memory_space<vmem>>, vector<2x1xi32>
    tpu.vector_store %arg17[%c0_81, %c1_82], %224 {strides = array<i32>} : memref<2x8xi32, #tpu.memory_space<vmem>>, vector<2x1xi32>,
    %cst_83 = arith.constant 1.000000e+00 : f32
    %241 = vector.broadcast %cst_83 : f32 to vector<2x8xf32>
    %242 = arith.subf %241, %228 : vector<2x8xf32>
    %243 = arith.mulf %132, %242 : vector<2x8xf32>
    %244 = vector.shape_cast %228 : vector<2x8xf32> to vector<2x1x8xf32>
    %245 = arith.truncf %244 : vector<2x1x8xf32> to vector<2x1x8xbf16>
    "tpu.trace_start"() <{level = 10 : i32, message = "bql,ble->bqe"}> : () -> ()
    %cst_84 = arith.constant dense<0.000000e+00> : vector<2x1x128xf32>
    %246 = tpu.matmul %245, %0, %cst_84 {dimension_numbers = #tpu.dot_dimension_numbers<[2], [1], [1], [2], [0, 0, 0, 1, 1, 2], [0], [0]>} : vector<2x1x8xbf16>, vector<2x8x128xbf16>, vector<2x1x128xf32> -> vector<2x1x128xf32>
    "tpu.trace_stop"() : () -> ()
    %247 = vector.shape_cast %246 : vector<2x1x128xf32> to vector<2x128xf32>
    %248 = tpu.concatenate %247, %201 in 1 : vector<2x128xf32>, vector<2x128xf32> -> vector<2x256xf32>
    %249 = arith.truncf %248 : vector<2x256xf32> to vector<2x256xbf16>
    %cst_85 = arith.constant dense<0.000000e+00> : vector<2x512xf32>
    %250 = tpu.matmul %249, %3, %cst_85 {dimension_numbers = #tpu.dot_dimension_numbers<[1], [0], [0], [1], [0, 0, 1, 1], [], []>} : vector<2x256xbf16>, vector<256x512xbf16>, vector<2x512xf32> -> vector<2x512xf32>
    %251 = vector.broadcast %4 : vector<1x512xf32> to vector<2x512xf32>
    %252 = arith.addf %250, %251 : vector<2x512xf32>
    %253 = vector.extract_strided_slice %252 {offsets = [0, 0], sizes = [2, 128], strides = [1, 1]} : vector<2x512xf32> to vector<2x128xf32>
    %254 = arith.negf %253 : vector<2x128xf32>
    %255 = math.exp %254 : vector<2x128xf32>
    %cst_86 = arith.constant 1.000000e+00 : f32
    %256 = vector.broadcast %cst_86 : f32 to vector<2x128xf32>
    %257 = arith.addf %256, %255 : vector<2x128xf32>
    %258 = arith.divf %256, %257 : vector<2x128xf32>
    %259 = vector.extract_strided_slice %252 {offsets = [0, 128], sizes = [2, 128], strides = [1, 1]} : vector<2x512xf32> to vector<2x128xf32>
    %260 = arith.negf %259 : vector<2x128xf32>
    %261 = math.exp %260 : vector<2x128xf32>
    %cst_87 = arith.constant 1.000000e+00 : f32
    %262 = vector.broadcast %cst_87 : f32 to vector<2x128xf32>
    %263 = arith.addf %262, %261 : vector<2x128xf32>
    %264 = arith.divf %262, %263 : vector<2x128xf32>
    %265 = vector.extract_strided_slice %252 {offsets = [0, 256], sizes = [2, 128], strides = [1, 1]} : vector<2x512xf32> to vector<2x128xf32>
    %266 = math.tanh %265 : vector<2x128xf32>
    %267 = vector.extract_strided_slice %252 {offsets = [0, 384], sizes = [2, 128], strides = [1, 1]} : vector<2x512xf32> to vector<2x128xf32>
    %268 = arith.negf %267 : vector<2x128xf32>
    %269 = math.exp %268 : vector<2x128xf32>
    %cst_88 = arith.constant 1.000000e+00 : f32
    %270 = vector.broadcast %cst_88 : f32 to vector<2x128xf32>
    %271 = arith.addf %270, %269 : vector<2x128xf32>
    %272 = arith.divf %270, %271 : vector<2x128xf32>
    %273 = arith.mulf %264, %164 : vector<2x128xf32>
    %274 = arith.mulf %258, %266 : vector<2x128xf32>
    %275 = arith.addf %273, %274 : vector<2x128xf32>
    %276 = math.tanh %275 : vector<2x128xf32>
    %277 = arith.mulf %272, %276 : vector<2x128xf32>
    %278 = arith.truncf %277 : vector<2x128xf32> to vector<2x128xbf16>
    %cst_89 = arith.constant dense<0.000000e+00> : vector<2x128xf32>
    %279 = tpu.matmul %278, %5, %cst_89 {dimension_numbers = #tpu.dot_dimension_numbers<[1], [0], [0], [1], [0, 0, 1, 1], [], []>} : vector<2x128xbf16>, vector<128x128xbf16>, vector<2x128xf32> -> vector<2x128xf32>
    %280 = vector.broadcast %6 : vector<1x128xf32> to vector<2x128xf32>
    %281 = arith.addf %279, %280 : vector<2x128xf32>
    %282 = vector.shape_cast %281 : vector<2x128xf32> to vector<2x1x128xf32>
    %283 = vector.broadcast %282 : vector<2x1x128xf32> to vector<2x8x128xf32>
    %284 = arith.addf %283, %17 : vector<2x8x128xf32>
    %285 = math.tanh %284 : vector<2x8x128xf32>
    %286 = vector.broadcast %12 : vector<1x1x128xf32> to vector<2x8x128xf32>
    %287 = arith.mulf %285, %286 : vector<2x8x128xf32>
    %cst_90 = arith.constant dense<0.000000e+00> : vector<2x8xf32>
    %288 = vector.multi_reduction <add>, %287, %cst_90 [2] : vector<2x8x128xf32> to vector<2x8xf32>
    %cst_91 = arith.constant 0.000000e+00 : f32
    %289 = vector.broadcast %cst_91 : f32 to vector<2x8xf32>
    %290 = arith.cmpf oeq, %243, %289 : vector<2x8xf32>
    %cst_92 = arith.constant -1.000000e+30 : f32
    %291 = vector.broadcast %cst_92 : f32 to vector<2x8xf32>
    %292 = arith.select %290, %291, %288 : vector<2x8xi1>, vector<2x8xf32>
    %cst_93 = arith.constant dense<0xFF800000> : vector<2xf32>
    %293 = vector.multi_reduction <maximumf>, %292, %cst_93 [1] : vector<2x8xf32> to vector<2xf32>
    %294 = vector.shape_cast %293 : vector<2xf32> to vector<2x1xf32>
    %295 = vector.broadcast %294 : vector<2x1xf32> to vector<2x8xf32>
    %296 = arith.subf %292, %295 : vector<2x8xf32>
    %297 = math.exp %296 : vector<2x8xf32>
    %cst_94 = arith.constant dense<0.000000e+00> : vector<2xf32>
    %298 = vector.multi_reduction <add>, %297, %cst_94 [1] : vector<2x8xf32> to vector<2xf32>
    %299 = vector.shape_cast %298 : vector<2xf32> to vector<2x1xf32>
    %300 = tpu.reciprocal %299 {approx = true} : vector<2x1xf32> -> vector<2x1xf32>
    %301 = vector.broadcast %300 : vector<2x1xf32> to vector<2x8xf32>
    %302 = arith.mulf %297, %301 : vector<2x8xf32>
    %303 = vector.shape_cast %302 : vector<2x8xf32> to vector<2x1x8xf32>
    %304 = arith.truncf %303 : vector<2x1x8xf32> to vector<2x1x8xbf16>
    "tpu.trace_start"() <{level = 10 : i32, message = "bql,blh->bqh"}> : () -> ()
    %cst_95 = arith.constant dense<0.000000e+00> : vector<2x1x128xf32>
    %305 = tpu.matmul %304, %18, %cst_95 {dimension_numbers = #tpu.dot_dimension_numbers<[2], [1], [1], [2], [0, 0, 0, 1, 1, 2], [0], [0]>} : vector<2x1x8xbf16>, vector<2x8x128xbf16>, vector<2x1x128xf32> -> vector<2x1x128xf32>
    "tpu.trace_stop"() : () -> ()
    %306 = vector.shape_cast %305 : vector<2x1x128xf32> to vector<2x128xf32>
    %307 = tpu.concatenate %306, %277 in 1 : vector<2x128xf32>, vector<2x128xf32> -> vector<2x256xf32>
    %308 = arith.truncf %307 : vector<2x256xf32> to vector<2x256xbf16>
    %cst_96 = arith.constant dense<0.000000e+00> : vector<2x128xf32>
    %309 = tpu.matmul %308, %9, %cst_96 {dimension_numbers = #tpu.dot_dimension_numbers<[1], [0], [0], [1], [0, 0, 1, 1], [], []>} : vector<2x256xbf16>, vector<256x128xbf16>, vector<2x128xf32> -> vector<2x128xf32>
    %310 = vector.broadcast %10 : vector<1x128xf32> to vector<2x128xf32>
    %311 = arith.addf %309, %310 : vector<2x128xf32>
    %312 = math.tanh %311 : vector<2x128xf32>
    %cst_97 = arith.constant 9.99999993E-9 : f32
    %313 = vector.broadcast %cst_97 : f32 to vector<2x8xf32>
    %314 = arith.addf %302, %313 : vector<2x8xf32>
    %315 = arith.mulf %314, %2 : vector<2x8xf32>
    %cst_98 = arith.constant dense<0.000000e+00> : vector<2xf32>
    %316 = vector.multi_reduction <add>, %315, %cst_98 [1] : vector<2x8xf32> to vector<2xf32>
    %317 = vector.shape_cast %316 : vector<2xf32> to vector<2x1xf32>
    %318 = tpu.reciprocal %317 {approx = true} : vector<2x1xf32> -> vector<2x1xf32>
    %319 = vector.broadcast %318 : vector<2x1xf32> to vector<2x8xf32>
    %320 = arith.mulf %315, %319 : vector<2x8xf32>
    %cst_99 = arith.constant 2.000000e+00 : f32
    %321 = vector.broadcast %cst_99 : f32 to vector<2x1xf32>
    %322 = arith.cmpf oge, %21, %321 : vector<2x1xf32>
    %323 = arith.extui %322 : vector<2x1xi1> to vector<2x1xi32>
    %324 = arith.sitofp %323 : vector<2x1xi32> to vector<2x1xf32>
    %325 = vector.broadcast %324 : vector<2x1xf32> to vector<2x8xf32>
    %326 = arith.mulf %243, %325 : vector<2x8xf32>
    %327 = arith.mulf %320, %326 : vector<2x8xf32>
    %cst_100 = arith.constant dense<0xFF800000> : vector<2xf32>
    %328 = vector.multi_reduction <maximumf>, %327, %cst_100 [1] : vector<2x8xf32> to vector<2xf32>
    %329 = vector.shape_cast %328 : vector<2xf32> to vector<2x1xf32>
    %330 = vector.broadcast %329 : vector<2x1xf32> to vector<2x8xf32>
    %331 = arith.cmpf oeq, %327, %330 : vector<2x8xf32>
    %c8_i32_101 = arith.constant 8 : i32
    %332 = vector.broadcast %c8_i32_101 : i32 to vector<2x8xi32>
    %333 = arith.select %331, %19, %332 : vector<2x8xi1>, vector<2x8xi32>
    %cst_102 = arith.constant dense<2147483647> : vector<2xi32>
    %334 = vector.multi_reduction <minsi>, %333, %cst_102 [1] : vector<2x8xi32> to vector<2xi32>
    %335 = vector.shape_cast %334 : vector<2xi32> to vector<2x1xi32>
    %336 = vector.broadcast %335 : vector<2x1xi32> to vector<2x8xi32>
    %337 = arith.cmpi eq, %19, %336 : vector<2x8xi32>
    %338 = arith.extui %337 : vector<2x8xi1> to vector<2x8xi32>
    %339 = arith.sitofp %338 : vector<2x8xi32> to vector<2x8xf32>
    %cst_103 = arith.constant 9.99999993E-9 : f32
    %340 = vector.broadcast %cst_103 : f32 to vector<2x8xf32>
    %341 = arith.addf %327, %340 : vector<2x8xf32>
    %342 = arith.mulf %341, %339 : vector<2x8xf32>
    %cst_104 = arith.constant dense<0.000000e+00> : vector<2xf32>
    %343 = vector.multi_reduction <add>, %342, %cst_104 [1] : vector<2x8xf32> to vector<2xf32>
    %344 = vector.shape_cast %343 : vector<2xf32> to vector<2x1xf32>
    %345 = math.log %344 : vector<2x1xf32>
    %cst_105 = arith.constant dense<0.000000e+00> : vector<2xf32>
    %346 = vector.multi_reduction <add>, %341, %cst_105 [1] : vector<2x8xf32> to vector<2xf32>
    %347 = vector.shape_cast %346 : vector<2xf32> to vector<2x1xf32>
    %348 = math.log %347 : vector<2x1xf32>
    %349 = arith.subf %345, %348 : vector<2x1xf32>
    %c0_106 = arith.constant 0 : index
    %c2 = arith.constant 2 : index
    %350 = vector.load %arg16[%c0_106, %c2] : memref<2x8xf32, #tpu.memory_space<vmem>>, vector<2x1xf32>
    tpu.vector_store %arg16[%c0_106, %c2], %349 {strides = array<i32>} : memref<2x8xf32, #tpu.memory_space<vmem>>, vector<2x1xf32>,
    %c0_107 = arith.constant 0 : index
    %c2_108 = arith.constant 2 : index
    %351 = vector.load %arg17[%c0_107, %c2_108] : memref<2x8xi32, #tpu.memory_space<vmem>>, vector<2x1xi32>
    tpu.vector_store %arg17[%c0_107, %c2_108], %335 {strides = array<i32>} : memref<2x8xi32, #tpu.memory_space<vmem>>, vector<2x1xi32>,
    %cst_109 = arith.constant 1.000000e+00 : f32
    %352 = vector.broadcast %cst_109 : f32 to vector<2x8xf32>
    %353 = arith.subf %352, %339 : vector<2x8xf32>
    %354 = arith.mulf %243, %353 : vector<2x8xf32>
    %355 = vector.shape_cast %339 : vector<2x8xf32> to vector<2x1x8xf32>
    %356 = arith.truncf %355 : vector<2x1x8xf32> to vector<2x1x8xbf16>
    "tpu.trace_start"() <{level = 10 : i32, message = "bql,ble->bqe"}> : () -> ()
    %cst_110 = arith.constant dense<0.000000e+00> : vector<2x1x128xf32>
    %357 = tpu.matmul %356, %0, %cst_110 {dimension_numbers = #tpu.dot_dimension_numbers<[2], [1], [1], [2], [0, 0, 0, 1, 1, 2], [0], [0]>} : vector<2x1x8xbf16>, vector<2x8x128xbf16>, vector<2x1x128xf32> -> vector<2x1x128xf32>
    "tpu.trace_stop"() : () -> ()
    %358 = vector.shape_cast %357 : vector<2x1x128xf32> to vector<2x128xf32>
    %359 = tpu.concatenate %358, %312 in 1 : vector<2x128xf32>, vector<2x128xf32> -> vector<2x256xf32>
    %360 = arith.truncf %359 : vector<2x256xf32> to vector<2x256xbf16>
    %cst_111 = arith.constant dense<0.000000e+00> : vector<2x512xf32>
    %361 = tpu.matmul %360, %3, %cst_111 {dimension_numbers = #tpu.dot_dimension_numbers<[1], [0], [0], [1], [0, 0, 1, 1], [], []>} : vector<2x256xbf16>, vector<256x512xbf16>, vector<2x512xf32> -> vector<2x512xf32>
    %362 = vector.broadcast %4 : vector<1x512xf32> to vector<2x512xf32>
    %363 = arith.addf %361, %362 : vector<2x512xf32>
    %364 = vector.extract_strided_slice %363 {offsets = [0, 0], sizes = [2, 128], strides = [1, 1]} : vector<2x512xf32> to vector<2x128xf32>
    %365 = arith.negf %364 : vector<2x128xf32>
    %366 = math.exp %365 : vector<2x128xf32>
    %cst_112 = arith.constant 1.000000e+00 : f32
    %367 = vector.broadcast %cst_112 : f32 to vector<2x128xf32>
    %368 = arith.addf %367, %366 : vector<2x128xf32>
    %369 = arith.divf %367, %368 : vector<2x128xf32>
    %370 = vector.extract_strided_slice %363 {offsets = [0, 128], sizes = [2, 128], strides = [1, 1]} : vector<2x512xf32> to vector<2x128xf32>
    %371 = arith.negf %370 : vector<2x128xf32>
    %372 = math.exp %371 : vector<2x128xf32>
    %cst_113 = arith.constant 1.000000e+00 : f32
    %373 = vector.broadcast %cst_113 : f32 to vector<2x128xf32>
    %374 = arith.addf %373, %372 : vector<2x128xf32>
    %375 = arith.divf %373, %374 : vector<2x128xf32>
    %376 = vector.extract_strided_slice %363 {offsets = [0, 256], sizes = [2, 128], strides = [1, 1]} : vector<2x512xf32> to vector<2x128xf32>
    %377 = math.tanh %376 : vector<2x128xf32>
    %378 = vector.extract_strided_slice %363 {offsets = [0, 384], sizes = [2, 128], strides = [1, 1]} : vector<2x512xf32> to vector<2x128xf32>
    %379 = arith.negf %378 : vector<2x128xf32>
    %380 = math.exp %379 : vector<2x128xf32>
    %cst_114 = arith.constant 1.000000e+00 : f32
    %381 = vector.broadcast %cst_114 : f32 to vector<2x128xf32>
    %382 = arith.addf %381, %380 : vector<2x128xf32>
    %383 = arith.divf %381, %382 : vector<2x128xf32>
    %384 = arith.mulf %375, %275 : vector<2x128xf32>
    %385 = arith.mulf %369, %377 : vector<2x128xf32>
    %386 = arith.addf %384, %385 : vector<2x128xf32>
    %387 = math.tanh %386 : vector<2x128xf32>
    %388 = arith.mulf %383, %387 : vector<2x128xf32>
    %389 = arith.truncf %388 : vector<2x128xf32> to vector<2x128xbf16>
    %cst_115 = arith.constant dense<0.000000e+00> : vector<2x128xf32>
    %390 = tpu.matmul %389, %5, %cst_115 {dimension_numbers = #tpu.dot_dimension_numbers<[1], [0], [0], [1], [0, 0, 1, 1], [], []>} : vector<2x128xbf16>, vector<128x128xbf16>, vector<2x128xf32> -> vector<2x128xf32>
    %391 = vector.broadcast %6 : vector<1x128xf32> to vector<2x128xf32>
    %392 = arith.addf %390, %391 : vector<2x128xf32>
    %393 = vector.shape_cast %392 : vector<2x128xf32> to vector<2x1x128xf32>
    %394 = vector.broadcast %393 : vector<2x1x128xf32> to vector<2x8x128xf32>
    %395 = arith.addf %394, %17 : vector<2x8x128xf32>
    %396 = math.tanh %395 : vector<2x8x128xf32>
    %397 = vector.broadcast %12 : vector<1x1x128xf32> to vector<2x8x128xf32>
    %398 = arith.mulf %396, %397 : vector<2x8x128xf32>
    %cst_116 = arith.constant dense<0.000000e+00> : vector<2x8xf32>
    %399 = vector.multi_reduction <add>, %398, %cst_116 [2] : vector<2x8x128xf32> to vector<2x8xf32>
    %cst_117 = arith.constant 0.000000e+00 : f32
    %400 = vector.broadcast %cst_117 : f32 to vector<2x8xf32>
    %401 = arith.cmpf oeq, %354, %400 : vector<2x8xf32>
    %cst_118 = arith.constant -1.000000e+30 : f32
    %402 = vector.broadcast %cst_118 : f32 to vector<2x8xf32>
    %403 = arith.select %401, %402, %399 : vector<2x8xi1>, vector<2x8xf32>
    %cst_119 = arith.constant dense<0xFF800000> : vector<2xf32>
    %404 = vector.multi_reduction <maximumf>, %403, %cst_119 [1] : vector<2x8xf32> to vector<2xf32>
    %405 = vector.shape_cast %404 : vector<2xf32> to vector<2x1xf32>
    %406 = vector.broadcast %405 : vector<2x1xf32> to vector<2x8xf32>
    %407 = arith.subf %403, %406 : vector<2x8xf32>
    %408 = math.exp %407 : vector<2x8xf32>
    %cst_120 = arith.constant dense<0.000000e+00> : vector<2xf32>
    %409 = vector.multi_reduction <add>, %408, %cst_120 [1] : vector<2x8xf32> to vector<2xf32>
    %410 = vector.shape_cast %409 : vector<2xf32> to vector<2x1xf32>
    %411 = tpu.reciprocal %410 {approx = true} : vector<2x1xf32> -> vector<2x1xf32>
    %412 = vector.broadcast %411 : vector<2x1xf32> to vector<2x8xf32>
    %413 = arith.mulf %408, %412 : vector<2x8xf32>
    %414 = vector.shape_cast %413 : vector<2x8xf32> to vector<2x1x8xf32>
    %415 = arith.truncf %414 : vector<2x1x8xf32> to vector<2x1x8xbf16>
    "tpu.trace_start"() <{level = 10 : i32, message = "bql,blh->bqh"}> : () -> ()
    %cst_121 = arith.constant dense<0.000000e+00> : vector<2x1x128xf32>
    %416 = tpu.matmul %415, %18, %cst_121 {dimension_numbers = #tpu.dot_dimension_numbers<[2], [1], [1], [2], [0, 0, 0, 1, 1, 2], [0], [0]>} : vector<2x1x8xbf16>, vector<2x8x128xbf16>, vector<2x1x128xf32> -> vector<2x1x128xf32>
    "tpu.trace_stop"() : () -> ()
    %417 = vector.shape_cast %416 : vector<2x1x128xf32> to vector<2x128xf32>
    %418 = tpu.concatenate %417, %388 in 1 : vector<2x128xf32>, vector<2x128xf32> -> vector<2x256xf32>
    %419 = arith.truncf %418 : vector<2x256xf32> to vector<2x256xbf16>
    %cst_122 = arith.constant dense<0.000000e+00> : vector<2x128xf32>
    %420 = tpu.matmul %419, %9, %cst_122 {dimension_numbers = #tpu.dot_dimension_numbers<[1], [0], [0], [1], [0, 0, 1, 1], [], []>} : vector<2x256xbf16>, vector<256x128xbf16>, vector<2x128xf32> -> vector<2x128xf32>
    %421 = vector.broadcast %10 : vector<1x128xf32> to vector<2x128xf32>
    %422 = arith.addf %420, %421 : vector<2x128xf32>
    %423 = math.tanh %422 : vector<2x128xf32>
    %cst_123 = arith.constant 9.99999993E-9 : f32
    %424 = vector.broadcast %cst_123 : f32 to vector<2x8xf32>
    %425 = arith.addf %413, %424 : vector<2x8xf32>
    %426 = arith.mulf %425, %2 : vector<2x8xf32>
    %cst_124 = arith.constant dense<0.000000e+00> : vector<2xf32>
    %427 = vector.multi_reduction <add>, %426, %cst_124 [1] : vector<2x8xf32> to vector<2xf32>
    %428 = vector.shape_cast %427 : vector<2xf32> to vector<2x1xf32>
    %429 = tpu.reciprocal %428 {approx = true} : vector<2x1xf32> -> vector<2x1xf32>
    %430 = vector.broadcast %429 : vector<2x1xf32> to vector<2x8xf32>
    %431 = arith.mulf %426, %430 : vector<2x8xf32>
    %cst_125 = arith.constant 3.000000e+00 : f32
    %432 = vector.broadcast %cst_125 : f32 to vector<2x1xf32>
    %433 = arith.cmpf oge, %21, %432 : vector<2x1xf32>
    %434 = arith.extui %433 : vector<2x1xi1> to vector<2x1xi32>
    %435 = arith.sitofp %434 : vector<2x1xi32> to vector<2x1xf32>
    %436 = vector.broadcast %435 : vector<2x1xf32> to vector<2x8xf32>
    %437 = arith.mulf %354, %436 : vector<2x8xf32>
    %438 = arith.mulf %431, %437 : vector<2x8xf32>
    %cst_126 = arith.constant dense<0xFF800000> : vector<2xf32>
    %439 = vector.multi_reduction <maximumf>, %438, %cst_126 [1] : vector<2x8xf32> to vector<2xf32>
    %440 = vector.shape_cast %439 : vector<2xf32> to vector<2x1xf32>
    %441 = vector.broadcast %440 : vector<2x1xf32> to vector<2x8xf32>
    %442 = arith.cmpf oeq, %438, %441 : vector<2x8xf32>
    %c8_i32_127 = arith.constant 8 : i32
    %443 = vector.broadcast %c8_i32_127 : i32 to vector<2x8xi32>
    %444 = arith.select %442, %19, %443 : vector<2x8xi1>, vector<2x8xi32>
    %cst_128 = arith.constant dense<2147483647> : vector<2xi32>
    %445 = vector.multi_reduction <minsi>, %444, %cst_128 [1] : vector<2x8xi32> to vector<2xi32>
    %446 = vector.shape_cast %445 : vector<2xi32> to vector<2x1xi32>
    %447 = vector.broadcast %446 : vector<2x1xi32> to vector<2x8xi32>
    %448 = arith.cmpi eq, %19, %447 : vector<2x8xi32>
    %449 = arith.extui %448 : vector<2x8xi1> to vector<2x8xi32>
    %450 = arith.sitofp %449 : vector<2x8xi32> to vector<2x8xf32>
    %cst_129 = arith.constant 9.99999993E-9 : f32
    %451 = vector.broadcast %cst_129 : f32 to vector<2x8xf32>
    %452 = arith.addf %438, %451 : vector<2x8xf32>
    %453 = arith.mulf %452, %450 : vector<2x8xf32>
    %cst_130 = arith.constant dense<0.000000e+00> : vector<2xf32>
    %454 = vector.multi_reduction <add>, %453, %cst_130 [1] : vector<2x8xf32> to vector<2xf32>
    %455 = vector.shape_cast %454 : vector<2xf32> to vector<2x1xf32>
    %456 = math.log %455 : vector<2x1xf32>
    %cst_131 = arith.constant dense<0.000000e+00> : vector<2xf32>
    %457 = vector.multi_reduction <add>, %452, %cst_131 [1] : vector<2x8xf32> to vector<2xf32>
    %458 = vector.shape_cast %457 : vector<2xf32> to vector<2x1xf32>
    %459 = math.log %458 : vector<2x1xf32>
    %460 = arith.subf %456, %459 : vector<2x1xf32>
    %c0_132 = arith.constant 0 : index
    %c3 = arith.constant 3 : index
    %461 = vector.load %arg16[%c0_132, %c3] : memref<2x8xf32, #tpu.memory_space<vmem>>, vector<2x1xf32>
    tpu.vector_store %arg16[%c0_132, %c3], %460 {strides = array<i32>} : memref<2x8xf32, #tpu.memory_space<vmem>>, vector<2x1xf32>,
    %c0_133 = arith.constant 0 : index
    %c3_134 = arith.constant 3 : index
    %462 = vector.load %arg17[%c0_133, %c3_134] : memref<2x8xi32, #tpu.memory_space<vmem>>, vector<2x1xi32>
    tpu.vector_store %arg17[%c0_133, %c3_134], %446 {strides = array<i32>} : memref<2x8xi32, #tpu.memory_space<vmem>>, vector<2x1xi32>,
    %cst_135 = arith.constant 1.000000e+00 : f32
    %463 = vector.broadcast %cst_135 : f32 to vector<2x8xf32>
    %464 = arith.subf %463, %450 : vector<2x8xf32>
    %465 = arith.mulf %354, %464 : vector<2x8xf32>
    %466 = vector.shape_cast %450 : vector<2x8xf32> to vector<2x1x8xf32>
    %467 = arith.truncf %466 : vector<2x1x8xf32> to vector<2x1x8xbf16>
    "tpu.trace_start"() <{level = 10 : i32, message = "bql,ble->bqe"}> : () -> ()
    %cst_136 = arith.constant dense<0.000000e+00> : vector<2x1x128xf32>
    %468 = tpu.matmul %467, %0, %cst_136 {dimension_numbers = #tpu.dot_dimension_numbers<[2], [1], [1], [2], [0, 0, 0, 1, 1, 2], [0], [0]>} : vector<2x1x8xbf16>, vector<2x8x128xbf16>, vector<2x1x128xf32> -> vector<2x1x128xf32>
    "tpu.trace_stop"() : () -> ()
    %469 = vector.shape_cast %468 : vector<2x1x128xf32> to vector<2x128xf32>
    %470 = tpu.concatenate %469, %423 in 1 : vector<2x128xf32>, vector<2x128xf32> -> vector<2x256xf32>
    %471 = arith.truncf %470 : vector<2x256xf32> to vector<2x256xbf16>
    %cst_137 = arith.constant dense<0.000000e+00> : vector<2x512xf32>
    %472 = tpu.matmul %471, %3, %cst_137 {dimension_numbers = #tpu.dot_dimension_numbers<[1], [0], [0], [1], [0, 0, 1, 1], [], []>} : vector<2x256xbf16>, vector<256x512xbf16>, vector<2x512xf32> -> vector<2x512xf32>
    %473 = vector.broadcast %4 : vector<1x512xf32> to vector<2x512xf32>
    %474 = arith.addf %472, %473 : vector<2x512xf32>
    %475 = vector.extract_strided_slice %474 {offsets = [0, 0], sizes = [2, 128], strides = [1, 1]} : vector<2x512xf32> to vector<2x128xf32>
    %476 = arith.negf %475 : vector<2x128xf32>
    %477 = math.exp %476 : vector<2x128xf32>
    %cst_138 = arith.constant 1.000000e+00 : f32
    %478 = vector.broadcast %cst_138 : f32 to vector<2x128xf32>
    %479 = arith.addf %478, %477 : vector<2x128xf32>
    %480 = arith.divf %478, %479 : vector<2x128xf32>
    %481 = vector.extract_strided_slice %474 {offsets = [0, 128], sizes = [2, 128], strides = [1, 1]} : vector<2x512xf32> to vector<2x128xf32>
    %482 = arith.negf %481 : vector<2x128xf32>
    %483 = math.exp %482 : vector<2x128xf32>
    %cst_139 = arith.constant 1.000000e+00 : f32
    %484 = vector.broadcast %cst_139 : f32 to vector<2x128xf32>
    %485 = arith.addf %484, %483 : vector<2x128xf32>
    %486 = arith.divf %484, %485 : vector<2x128xf32>
    %487 = vector.extract_strided_slice %474 {offsets = [0, 256], sizes = [2, 128], strides = [1, 1]} : vector<2x512xf32> to vector<2x128xf32>
    %488 = math.tanh %487 : vector<2x128xf32>
    %489 = vector.extract_strided_slice %474 {offsets = [0, 384], sizes = [2, 128], strides = [1, 1]} : vector<2x512xf32> to vector<2x128xf32>
    %490 = arith.negf %489 : vector<2x128xf32>
    %491 = math.exp %490 : vector<2x128xf32>
    %cst_140 = arith.constant 1.000000e+00 : f32
    %492 = vector.broadcast %cst_140 : f32 to vector<2x128xf32>
    %493 = arith.addf %492, %491 : vector<2x128xf32>
    %494 = arith.divf %492, %493 : vector<2x128xf32>
    %495 = arith.mulf %486, %386 : vector<2x128xf32>
    %496 = arith.mulf %480, %488 : vector<2x128xf32>
    %497 = arith.addf %495, %496 : vector<2x128xf32>
    %498 = math.tanh %497 : vector<2x128xf32>
    %499 = arith.mulf %494, %498 : vector<2x128xf32>
    %500 = arith.truncf %499 : vector<2x128xf32> to vector<2x128xbf16>
    %cst_141 = arith.constant dense<0.000000e+00> : vector<2x128xf32>
    %501 = tpu.matmul %500, %5, %cst_141 {dimension_numbers = #tpu.dot_dimension_numbers<[1], [0], [0], [1], [0, 0, 1, 1], [], []>} : vector<2x128xbf16>, vector<128x128xbf16>, vector<2x128xf32> -> vector<2x128xf32>
    %502 = vector.broadcast %6 : vector<1x128xf32> to vector<2x128xf32>
    %503 = arith.addf %501, %502 : vector<2x128xf32>
    %504 = vector.shape_cast %503 : vector<2x128xf32> to vector<2x1x128xf32>
    %505 = vector.broadcast %504 : vector<2x1x128xf32> to vector<2x8x128xf32>
    %506 = arith.addf %505, %17 : vector<2x8x128xf32>
    %507 = math.tanh %506 : vector<2x8x128xf32>
    %508 = vector.broadcast %12 : vector<1x1x128xf32> to vector<2x8x128xf32>
    %509 = arith.mulf %507, %508 : vector<2x8x128xf32>
    %cst_142 = arith.constant dense<0.000000e+00> : vector<2x8xf32>
    %510 = vector.multi_reduction <add>, %509, %cst_142 [2] : vector<2x8x128xf32> to vector<2x8xf32>
    %cst_143 = arith.constant 0.000000e+00 : f32
    %511 = vector.broadcast %cst_143 : f32 to vector<2x8xf32>
    %512 = arith.cmpf oeq, %465, %511 : vector<2x8xf32>
    %cst_144 = arith.constant -1.000000e+30 : f32
    %513 = vector.broadcast %cst_144 : f32 to vector<2x8xf32>
    %514 = arith.select %512, %513, %510 : vector<2x8xi1>, vector<2x8xf32>
    %cst_145 = arith.constant dense<0xFF800000> : vector<2xf32>
    %515 = vector.multi_reduction <maximumf>, %514, %cst_145 [1] : vector<2x8xf32> to vector<2xf32>
    %516 = vector.shape_cast %515 : vector<2xf32> to vector<2x1xf32>
    %517 = vector.broadcast %516 : vector<2x1xf32> to vector<2x8xf32>
    %518 = arith.subf %514, %517 : vector<2x8xf32>
    %519 = math.exp %518 : vector<2x8xf32>
    %cst_146 = arith.constant dense<0.000000e+00> : vector<2xf32>
    %520 = vector.multi_reduction <add>, %519, %cst_146 [1] : vector<2x8xf32> to vector<2xf32>
    %521 = vector.shape_cast %520 : vector<2xf32> to vector<2x1xf32>
    %522 = tpu.reciprocal %521 {approx = true} : vector<2x1xf32> -> vector<2x1xf32>
    %523 = vector.broadcast %522 : vector<2x1xf32> to vector<2x8xf32>
    %524 = arith.mulf %519, %523 : vector<2x8xf32>
    %525 = vector.shape_cast %524 : vector<2x8xf32> to vector<2x1x8xf32>
    %526 = arith.truncf %525 : vector<2x1x8xf32> to vector<2x1x8xbf16>
    "tpu.trace_start"() <{level = 10 : i32, message = "bql,blh->bqh"}> : () -> ()
    %cst_147 = arith.constant dense<0.000000e+00> : vector<2x1x128xf32>
    %527 = tpu.matmul %526, %18, %cst_147 {dimension_numbers = #tpu.dot_dimension_numbers<[2], [1], [1], [2], [0, 0, 0, 1, 1, 2], [0], [0]>} : vector<2x1x8xbf16>, vector<2x8x128xbf16>, vector<2x1x128xf32> -> vector<2x1x128xf32>
    "tpu.trace_stop"() : () -> ()
    %528 = vector.shape_cast %527 : vector<2x1x128xf32> to vector<2x128xf32>
    %529 = tpu.concatenate %528, %499 in 1 : vector<2x128xf32>, vector<2x128xf32> -> vector<2x256xf32>
    %530 = arith.truncf %529 : vector<2x256xf32> to vector<2x256xbf16>
    %cst_148 = arith.constant dense<0.000000e+00> : vector<2x128xf32>
    %531 = tpu.matmul %530, %9, %cst_148 {dimension_numbers = #tpu.dot_dimension_numbers<[1], [0], [0], [1], [0, 0, 1, 1], [], []>} : vector<2x256xbf16>, vector<256x128xbf16>, vector<2x128xf32> -> vector<2x128xf32>
    %532 = vector.broadcast %10 : vector<1x128xf32> to vector<2x128xf32>
    %533 = arith.addf %531, %532 : vector<2x128xf32>
    %534 = math.tanh %533 : vector<2x128xf32>
    %cst_149 = arith.constant 9.99999993E-9 : f32
    %535 = vector.broadcast %cst_149 : f32 to vector<2x8xf32>
    %536 = arith.addf %524, %535 : vector<2x8xf32>
    %537 = arith.mulf %536, %2 : vector<2x8xf32>
    %cst_150 = arith.constant dense<0.000000e+00> : vector<2xf32>
    %538 = vector.multi_reduction <add>, %537, %cst_150 [1] : vector<2x8xf32> to vector<2xf32>
    %539 = vector.shape_cast %538 : vector<2xf32> to vector<2x1xf32>
    %540 = tpu.reciprocal %539 {approx = true} : vector<2x1xf32> -> vector<2x1xf32>
    %541 = vector.broadcast %540 : vector<2x1xf32> to vector<2x8xf32>
    %542 = arith.mulf %537, %541 : vector<2x8xf32>
    %cst_151 = arith.constant 4.000000e+00 : f32
    %543 = vector.broadcast %cst_151 : f32 to vector<2x1xf32>
    %544 = arith.cmpf oge, %21, %543 : vector<2x1xf32>
    %545 = arith.extui %544 : vector<2x1xi1> to vector<2x1xi32>
    %546 = arith.sitofp %545 : vector<2x1xi32> to vector<2x1xf32>
    %547 = vector.broadcast %546 : vector<2x1xf32> to vector<2x8xf32>
    %548 = arith.mulf %465, %547 : vector<2x8xf32>
    %549 = arith.mulf %542, %548 : vector<2x8xf32>
    %cst_152 = arith.constant dense<0xFF800000> : vector<2xf32>
    %550 = vector.multi_reduction <maximumf>, %549, %cst_152 [1] : vector<2x8xf32> to vector<2xf32>
    %551 = vector.shape_cast %550 : vector<2xf32> to vector<2x1xf32>
    %552 = vector.broadcast %551 : vector<2x1xf32> to vector<2x8xf32>
    %553 = arith.cmpf oeq, %549, %552 : vector<2x8xf32>
    %c8_i32_153 = arith.constant 8 : i32
    %554 = vector.broadcast %c8_i32_153 : i32 to vector<2x8xi32>
    %555 = arith.select %553, %19, %554 : vector<2x8xi1>, vector<2x8xi32>
    %cst_154 = arith.constant dense<2147483647> : vector<2xi32>
    %556 = vector.multi_reduction <minsi>, %555, %cst_154 [1] : vector<2x8xi32> to vector<2xi32>
    %557 = vector.shape_cast %556 : vector<2xi32> to vector<2x1xi32>
    %558 = vector.broadcast %557 : vector<2x1xi32> to vector<2x8xi32>
    %559 = arith.cmpi eq, %19, %558 : vector<2x8xi32>
    %560 = arith.extui %559 : vector<2x8xi1> to vector<2x8xi32>
    %561 = arith.sitofp %560 : vector<2x8xi32> to vector<2x8xf32>
    %cst_155 = arith.constant 9.99999993E-9 : f32
    %562 = vector.broadcast %cst_155 : f32 to vector<2x8xf32>
    %563 = arith.addf %549, %562 : vector<2x8xf32>
    %564 = arith.mulf %563, %561 : vector<2x8xf32>
    %cst_156 = arith.constant dense<0.000000e+00> : vector<2xf32>
    %565 = vector.multi_reduction <add>, %564, %cst_156 [1] : vector<2x8xf32> to vector<2xf32>
    %566 = vector.shape_cast %565 : vector<2xf32> to vector<2x1xf32>
    %567 = math.log %566 : vector<2x1xf32>
    %cst_157 = arith.constant dense<0.000000e+00> : vector<2xf32>
    %568 = vector.multi_reduction <add>, %563, %cst_157 [1] : vector<2x8xf32> to vector<2xf32>
    %569 = vector.shape_cast %568 : vector<2xf32> to vector<2x1xf32>
    %570 = math.log %569 : vector<2x1xf32>
    %571 = arith.subf %567, %570 : vector<2x1xf32>
    %c0_158 = arith.constant 0 : index
    %c4 = arith.constant 4 : index
    %572 = vector.load %arg16[%c0_158, %c4] : memref<2x8xf32, #tpu.memory_space<vmem>>, vector<2x1xf32>
    tpu.vector_store %arg16[%c0_158, %c4], %571 {strides = array<i32>} : memref<2x8xf32, #tpu.memory_space<vmem>>, vector<2x1xf32>,
    %c0_159 = arith.constant 0 : index
    %c4_160 = arith.constant 4 : index
    %573 = vector.load %arg17[%c0_159, %c4_160] : memref<2x8xi32, #tpu.memory_space<vmem>>, vector<2x1xi32>
    tpu.vector_store %arg17[%c0_159, %c4_160], %557 {strides = array<i32>} : memref<2x8xi32, #tpu.memory_space<vmem>>, vector<2x1xi32>,
    %cst_161 = arith.constant 1.000000e+00 : f32
    %574 = vector.broadcast %cst_161 : f32 to vector<2x8xf32>
    %575 = arith.subf %574, %561 : vector<2x8xf32>
    %576 = arith.mulf %465, %575 : vector<2x8xf32>
    %577 = vector.shape_cast %561 : vector<2x8xf32> to vector<2x1x8xf32>
    %578 = arith.truncf %577 : vector<2x1x8xf32> to vector<2x1x8xbf16>
    "tpu.trace_start"() <{level = 10 : i32, message = "bql,ble->bqe"}> : () -> ()
    %cst_162 = arith.constant dense<0.000000e+00> : vector<2x1x128xf32>
    %579 = tpu.matmul %578, %0, %cst_162 {dimension_numbers = #tpu.dot_dimension_numbers<[2], [1], [1], [2], [0, 0, 0, 1, 1, 2], [0], [0]>} : vector<2x1x8xbf16>, vector<2x8x128xbf16>, vector<2x1x128xf32> -> vector<2x1x128xf32>
    "tpu.trace_stop"() : () -> ()
    %580 = vector.shape_cast %579 : vector<2x1x128xf32> to vector<2x128xf32>
    %581 = tpu.concatenate %580, %534 in 1 : vector<2x128xf32>, vector<2x128xf32> -> vector<2x256xf32>
    %582 = arith.truncf %581 : vector<2x256xf32> to vector<2x256xbf16>
    %cst_163 = arith.constant dense<0.000000e+00> : vector<2x512xf32>
    %583 = tpu.matmul %582, %3, %cst_163 {dimension_numbers = #tpu.dot_dimension_numbers<[1], [0], [0], [1], [0, 0, 1, 1], [], []>} : vector<2x256xbf16>, vector<256x512xbf16>, vector<2x512xf32> -> vector<2x512xf32>
    %584 = vector.broadcast %4 : vector<1x512xf32> to vector<2x512xf32>
    %585 = arith.addf %583, %584 : vector<2x512xf32>
    %586 = vector.extract_strided_slice %585 {offsets = [0, 0], sizes = [2, 128], strides = [1, 1]} : vector<2x512xf32> to vector<2x128xf32>
    %587 = arith.negf %586 : vector<2x128xf32>
    %588 = math.exp %587 : vector<2x128xf32>
    %cst_164 = arith.constant 1.000000e+00 : f32
    %589 = vector.broadcast %cst_164 : f32 to vector<2x128xf32>
    %590 = arith.addf %589, %588 : vector<2x128xf32>
    %591 = arith.divf %589, %590 : vector<2x128xf32>
    %592 = vector.extract_strided_slice %585 {offsets = [0, 128], sizes = [2, 128], strides = [1, 1]} : vector<2x512xf32> to vector<2x128xf32>
    %593 = arith.negf %592 : vector<2x128xf32>
    %594 = math.exp %593 : vector<2x128xf32>
    %cst_165 = arith.constant 1.000000e+00 : f32
    %595 = vector.broadcast %cst_165 : f32 to vector<2x128xf32>
    %596 = arith.addf %595, %594 : vector<2x128xf32>
    %597 = arith.divf %595, %596 : vector<2x128xf32>
    %598 = vector.extract_strided_slice %585 {offsets = [0, 256], sizes = [2, 128], strides = [1, 1]} : vector<2x512xf32> to vector<2x128xf32>
    %599 = math.tanh %598 : vector<2x128xf32>
    %600 = vector.extract_strided_slice %585 {offsets = [0, 384], sizes = [2, 128], strides = [1, 1]} : vector<2x512xf32> to vector<2x128xf32>
    %601 = arith.negf %600 : vector<2x128xf32>
    %602 = math.exp %601 : vector<2x128xf32>
    %cst_166 = arith.constant 1.000000e+00 : f32
    %603 = vector.broadcast %cst_166 : f32 to vector<2x128xf32>
    %604 = arith.addf %603, %602 : vector<2x128xf32>
    %605 = arith.divf %603, %604 : vector<2x128xf32>
    %606 = arith.mulf %597, %497 : vector<2x128xf32>
    %607 = arith.mulf %591, %599 : vector<2x128xf32>
    %608 = arith.addf %606, %607 : vector<2x128xf32>
    %609 = math.tanh %608 : vector<2x128xf32>
    %610 = arith.mulf %605, %609 : vector<2x128xf32>
    %611 = arith.truncf %610 : vector<2x128xf32> to vector<2x128xbf16>
    %cst_167 = arith.constant dense<0.000000e+00> : vector<2x128xf32>
    %612 = tpu.matmul %611, %5, %cst_167 {dimension_numbers = #tpu.dot_dimension_numbers<[1], [0], [0], [1], [0, 0, 1, 1], [], []>} : vector<2x128xbf16>, vector<128x128xbf16>, vector<2x128xf32> -> vector<2x128xf32>
    %613 = vector.broadcast %6 : vector<1x128xf32> to vector<2x128xf32>
    %614 = arith.addf %612, %613 : vector<2x128xf32>
    %615 = vector.shape_cast %614 : vector<2x128xf32> to vector<2x1x128xf32>
    %616 = vector.broadcast %615 : vector<2x1x128xf32> to vector<2x8x128xf32>
    %617 = arith.addf %616, %17 : vector<2x8x128xf32>
    %618 = math.tanh %617 : vector<2x8x128xf32>
    %619 = vector.broadcast %12 : vector<1x1x128xf32> to vector<2x8x128xf32>
    %620 = arith.mulf %618, %619 : vector<2x8x128xf32>
    %cst_168 = arith.constant dense<0.000000e+00> : vector<2x8xf32>
    %621 = vector.multi_reduction <add>, %620, %cst_168 [2] : vector<2x8x128xf32> to vector<2x8xf32>
    %cst_169 = arith.constant 0.000000e+00 : f32
    %622 = vector.broadcast %cst_169 : f32 to vector<2x8xf32>
    %623 = arith.cmpf oeq, %576, %622 : vector<2x8xf32>
    %cst_170 = arith.constant -1.000000e+30 : f32
    %624 = vector.broadcast %cst_170 : f32 to vector<2x8xf32>
    %625 = arith.select %623, %624, %621 : vector<2x8xi1>, vector<2x8xf32>
    %cst_171 = arith.constant dense<0xFF800000> : vector<2xf32>
    %626 = vector.multi_reduction <maximumf>, %625, %cst_171 [1] : vector<2x8xf32> to vector<2xf32>
    %627 = vector.shape_cast %626 : vector<2xf32> to vector<2x1xf32>
    %628 = vector.broadcast %627 : vector<2x1xf32> to vector<2x8xf32>
    %629 = arith.subf %625, %628 : vector<2x8xf32>
    %630 = math.exp %629 : vector<2x8xf32>
    %cst_172 = arith.constant dense<0.000000e+00> : vector<2xf32>
    %631 = vector.multi_reduction <add>, %630, %cst_172 [1] : vector<2x8xf32> to vector<2xf32>
    %632 = vector.shape_cast %631 : vector<2xf32> to vector<2x1xf32>
    %633 = tpu.reciprocal %632 {approx = true} : vector<2x1xf32> -> vector<2x1xf32>
    %634 = vector.broadcast %633 : vector<2x1xf32> to vector<2x8xf32>
    %635 = arith.mulf %630, %634 : vector<2x8xf32>
    %636 = vector.shape_cast %635 : vector<2x8xf32> to vector<2x1x8xf32>
    %637 = arith.truncf %636 : vector<2x1x8xf32> to vector<2x1x8xbf16>
    "tpu.trace_start"() <{level = 10 : i32, message = "bql,blh->bqh"}> : () -> ()
    %cst_173 = arith.constant dense<0.000000e+00> : vector<2x1x128xf32>
    %638 = tpu.matmul %637, %18, %cst_173 {dimension_numbers = #tpu.dot_dimension_numbers<[2], [1], [1], [2], [0, 0, 0, 1, 1, 2], [0], [0]>} : vector<2x1x8xbf16>, vector<2x8x128xbf16>, vector<2x1x128xf32> -> vector<2x1x128xf32>
    "tpu.trace_stop"() : () -> ()
    %639 = vector.shape_cast %638 : vector<2x1x128xf32> to vector<2x128xf32>
    %640 = tpu.concatenate %639, %610 in 1 : vector<2x128xf32>, vector<2x128xf32> -> vector<2x256xf32>
    %641 = arith.truncf %640 : vector<2x256xf32> to vector<2x256xbf16>
    %cst_174 = arith.constant dense<0.000000e+00> : vector<2x128xf32>
    %642 = tpu.matmul %641, %9, %cst_174 {dimension_numbers = #tpu.dot_dimension_numbers<[1], [0], [0], [1], [0, 0, 1, 1], [], []>} : vector<2x256xbf16>, vector<256x128xbf16>, vector<2x128xf32> -> vector<2x128xf32>
    %643 = vector.broadcast %10 : vector<1x128xf32> to vector<2x128xf32>
    %644 = arith.addf %642, %643 : vector<2x128xf32>
    %645 = math.tanh %644 : vector<2x128xf32>
    %cst_175 = arith.constant 9.99999993E-9 : f32
    %646 = vector.broadcast %cst_175 : f32 to vector<2x8xf32>
    %647 = arith.addf %635, %646 : vector<2x8xf32>
    %648 = arith.mulf %647, %2 : vector<2x8xf32>
    %cst_176 = arith.constant dense<0.000000e+00> : vector<2xf32>
    %649 = vector.multi_reduction <add>, %648, %cst_176 [1] : vector<2x8xf32> to vector<2xf32>
    %650 = vector.shape_cast %649 : vector<2xf32> to vector<2x1xf32>
    %651 = tpu.reciprocal %650 {approx = true} : vector<2x1xf32> -> vector<2x1xf32>
    %652 = vector.broadcast %651 : vector<2x1xf32> to vector<2x8xf32>
    %653 = arith.mulf %648, %652 : vector<2x8xf32>
    %cst_177 = arith.constant 5.000000e+00 : f32
    %654 = vector.broadcast %cst_177 : f32 to vector<2x1xf32>
    %655 = arith.cmpf oge, %21, %654 : vector<2x1xf32>
    %656 = arith.extui %655 : vector<2x1xi1> to vector<2x1xi32>
    %657 = arith.sitofp %656 : vector<2x1xi32> to vector<2x1xf32>
    %658 = vector.broadcast %657 : vector<2x1xf32> to vector<2x8xf32>
    %659 = arith.mulf %576, %658 : vector<2x8xf32>
    %660 = arith.mulf %653, %659 : vector<2x8xf32>
    %cst_178 = arith.constant dense<0xFF800000> : vector<2xf32>
    %661 = vector.multi_reduction <maximumf>, %660, %cst_178 [1] : vector<2x8xf32> to vector<2xf32>
    %662 = vector.shape_cast %661 : vector<2xf32> to vector<2x1xf32>
    %663 = vector.broadcast %662 : vector<2x1xf32> to vector<2x8xf32>
    %664 = arith.cmpf oeq, %660, %663 : vector<2x8xf32>
    %c8_i32_179 = arith.constant 8 : i32
    %665 = vector.broadcast %c8_i32_179 : i32 to vector<2x8xi32>
    %666 = arith.select %664, %19, %665 : vector<2x8xi1>, vector<2x8xi32>
    %cst_180 = arith.constant dense<2147483647> : vector<2xi32>
    %667 = vector.multi_reduction <minsi>, %666, %cst_180 [1] : vector<2x8xi32> to vector<2xi32>
    %668 = vector.shape_cast %667 : vector<2xi32> to vector<2x1xi32>
    %669 = vector.broadcast %668 : vector<2x1xi32> to vector<2x8xi32>
    %670 = arith.cmpi eq, %19, %669 : vector<2x8xi32>
    %671 = arith.extui %670 : vector<2x8xi1> to vector<2x8xi32>
    %672 = arith.sitofp %671 : vector<2x8xi32> to vector<2x8xf32>
    %cst_181 = arith.constant 9.99999993E-9 : f32
    %673 = vector.broadcast %cst_181 : f32 to vector<2x8xf32>
    %674 = arith.addf %660, %673 : vector<2x8xf32>
    %675 = arith.mulf %674, %672 : vector<2x8xf32>
    %cst_182 = arith.constant dense<0.000000e+00> : vector<2xf32>
    %676 = vector.multi_reduction <add>, %675, %cst_182 [1] : vector<2x8xf32> to vector<2xf32>
    %677 = vector.shape_cast %676 : vector<2xf32> to vector<2x1xf32>
    %678 = math.log %677 : vector<2x1xf32>
    %cst_183 = arith.constant dense<0.000000e+00> : vector<2xf32>
    %679 = vector.multi_reduction <add>, %674, %cst_183 [1] : vector<2x8xf32> to vector<2xf32>
    %680 = vector.shape_cast %679 : vector<2xf32> to vector<2x1xf32>
    %681 = math.log %680 : vector<2x1xf32>
    %682 = arith.subf %678, %681 : vector<2x1xf32>
    %c0_184 = arith.constant 0 : index
    %c5 = arith.constant 5 : index
    %683 = vector.load %arg16[%c0_184, %c5] : memref<2x8xf32, #tpu.memory_space<vmem>>, vector<2x1xf32>
    tpu.vector_store %arg16[%c0_184, %c5], %682 {strides = array<i32>} : memref<2x8xf32, #tpu.memory_space<vmem>>, vector<2x1xf32>,
    %c0_185 = arith.constant 0 : index
    %c5_186 = arith.constant 5 : index
    %684 = vector.load %arg17[%c0_185, %c5_186] : memref<2x8xi32, #tpu.memory_space<vmem>>, vector<2x1xi32>
    tpu.vector_store %arg17[%c0_185, %c5_186], %668 {strides = array<i32>} : memref<2x8xi32, #tpu.memory_space<vmem>>, vector<2x1xi32>,
    %cst_187 = arith.constant 1.000000e+00 : f32
    %685 = vector.broadcast %cst_187 : f32 to vector<2x8xf32>
    %686 = arith.subf %685, %672 : vector<2x8xf32>
    %687 = arith.mulf %576, %686 : vector<2x8xf32>
    %688 = vector.shape_cast %672 : vector<2x8xf32> to vector<2x1x8xf32>
    %689 = arith.truncf %688 : vector<2x1x8xf32> to vector<2x1x8xbf16>
    "tpu.trace_start"() <{level = 10 : i32, message = "bql,ble->bqe"}> : () -> ()
    %cst_188 = arith.constant dense<0.000000e+00> : vector<2x1x128xf32>
    %690 = tpu.matmul %689, %0, %cst_188 {dimension_numbers = #tpu.dot_dimension_numbers<[2], [1], [1], [2], [0, 0, 0, 1, 1, 2], [0], [0]>} : vector<2x1x8xbf16>, vector<2x8x128xbf16>, vector<2x1x128xf32> -> vector<2x1x128xf32>
    "tpu.trace_stop"() : () -> ()
    %691 = vector.shape_cast %690 : vector<2x1x128xf32> to vector<2x128xf32>
    %692 = tpu.concatenate %691, %645 in 1 : vector<2x128xf32>, vector<2x128xf32> -> vector<2x256xf32>
    %693 = arith.truncf %692 : vector<2x256xf32> to vector<2x256xbf16>
    %cst_189 = arith.constant dense<0.000000e+00> : vector<2x512xf32>
    %694 = tpu.matmul %693, %3, %cst_189 {dimension_numbers = #tpu.dot_dimension_numbers<[1], [0], [0], [1], [0, 0, 1, 1], [], []>} : vector<2x256xbf16>, vector<256x512xbf16>, vector<2x512xf32> -> vector<2x512xf32>
    %695 = vector.broadcast %4 : vector<1x512xf32> to vector<2x512xf32>
    %696 = arith.addf %694, %695 : vector<2x512xf32>
    %697 = vector.extract_strided_slice %696 {offsets = [0, 0], sizes = [2, 128], strides = [1, 1]} : vector<2x512xf32> to vector<2x128xf32>
    %698 = arith.negf %697 : vector<2x128xf32>
    %699 = math.exp %698 : vector<2x128xf32>
    %cst_190 = arith.constant 1.000000e+00 : f32
    %700 = vector.broadcast %cst_190 : f32 to vector<2x128xf32>
    %701 = arith.addf %700, %699 : vector<2x128xf32>
    %702 = arith.divf %700, %701 : vector<2x128xf32>
    %703 = vector.extract_strided_slice %696 {offsets = [0, 128], sizes = [2, 128], strides = [1, 1]} : vector<2x512xf32> to vector<2x128xf32>
    %704 = arith.negf %703 : vector<2x128xf32>
    %705 = math.exp %704 : vector<2x128xf32>
    %cst_191 = arith.constant 1.000000e+00 : f32
    %706 = vector.broadcast %cst_191 : f32 to vector<2x128xf32>
    %707 = arith.addf %706, %705 : vector<2x128xf32>
    %708 = arith.divf %706, %707 : vector<2x128xf32>
    %709 = vector.extract_strided_slice %696 {offsets = [0, 256], sizes = [2, 128], strides = [1, 1]} : vector<2x512xf32> to vector<2x128xf32>
    %710 = math.tanh %709 : vector<2x128xf32>
    %711 = vector.extract_strided_slice %696 {offsets = [0, 384], sizes = [2, 128], strides = [1, 1]} : vector<2x512xf32> to vector<2x128xf32>
    %712 = arith.negf %711 : vector<2x128xf32>
    %713 = math.exp %712 : vector<2x128xf32>
    %cst_192 = arith.constant 1.000000e+00 : f32
    %714 = vector.broadcast %cst_192 : f32 to vector<2x128xf32>
    %715 = arith.addf %714, %713 : vector<2x128xf32>
    %716 = arith.divf %714, %715 : vector<2x128xf32>
    %717 = arith.mulf %708, %608 : vector<2x128xf32>
    %718 = arith.mulf %702, %710 : vector<2x128xf32>
    %719 = arith.addf %717, %718 : vector<2x128xf32>
    %720 = math.tanh %719 : vector<2x128xf32>
    %721 = arith.mulf %716, %720 : vector<2x128xf32>
    %722 = arith.truncf %721 : vector<2x128xf32> to vector<2x128xbf16>
    %cst_193 = arith.constant dense<0.000000e+00> : vector<2x128xf32>
    %723 = tpu.matmul %722, %5, %cst_193 {dimension_numbers = #tpu.dot_dimension_numbers<[1], [0], [0], [1], [0, 0, 1, 1], [], []>} : vector<2x128xbf16>, vector<128x128xbf16>, vector<2x128xf32> -> vector<2x128xf32>
    %724 = vector.broadcast %6 : vector<1x128xf32> to vector<2x128xf32>
    %725 = arith.addf %723, %724 : vector<2x128xf32>
    %726 = vector.shape_cast %725 : vector<2x128xf32> to vector<2x1x128xf32>
    %727 = vector.broadcast %726 : vector<2x1x128xf32> to vector<2x8x128xf32>
    %728 = arith.addf %727, %17 : vector<2x8x128xf32>
    %729 = math.tanh %728 : vector<2x8x128xf32>
    %730 = vector.broadcast %12 : vector<1x1x128xf32> to vector<2x8x128xf32>
    %731 = arith.mulf %729, %730 : vector<2x8x128xf32>
    %cst_194 = arith.constant dense<0.000000e+00> : vector<2x8xf32>
    %732 = vector.multi_reduction <add>, %731, %cst_194 [2] : vector<2x8x128xf32> to vector<2x8xf32>
    %cst_195 = arith.constant 0.000000e+00 : f32
    %733 = vector.broadcast %cst_195 : f32 to vector<2x8xf32>
    %734 = arith.cmpf oeq, %687, %733 : vector<2x8xf32>
    %cst_196 = arith.constant -1.000000e+30 : f32
    %735 = vector.broadcast %cst_196 : f32 to vector<2x8xf32>
    %736 = arith.select %734, %735, %732 : vector<2x8xi1>, vector<2x8xf32>
    %cst_197 = arith.constant dense<0xFF800000> : vector<2xf32>
    %737 = vector.multi_reduction <maximumf>, %736, %cst_197 [1] : vector<2x8xf32> to vector<2xf32>
    %738 = vector.shape_cast %737 : vector<2xf32> to vector<2x1xf32>
    %739 = vector.broadcast %738 : vector<2x1xf32> to vector<2x8xf32>
    %740 = arith.subf %736, %739 : vector<2x8xf32>
    %741 = math.exp %740 : vector<2x8xf32>
    %cst_198 = arith.constant dense<0.000000e+00> : vector<2xf32>
    %742 = vector.multi_reduction <add>, %741, %cst_198 [1] : vector<2x8xf32> to vector<2xf32>
    %743 = vector.shape_cast %742 : vector<2xf32> to vector<2x1xf32>
    %744 = tpu.reciprocal %743 {approx = true} : vector<2x1xf32> -> vector<2x1xf32>
    %745 = vector.broadcast %744 : vector<2x1xf32> to vector<2x8xf32>
    %746 = arith.mulf %741, %745 : vector<2x8xf32>
    %747 = vector.shape_cast %746 : vector<2x8xf32> to vector<2x1x8xf32>
    %748 = arith.truncf %747 : vector<2x1x8xf32> to vector<2x1x8xbf16>
    "tpu.trace_start"() <{level = 10 : i32, message = "bql,blh->bqh"}> : () -> ()
    %cst_199 = arith.constant dense<0.000000e+00> : vector<2x1x128xf32>
    %749 = tpu.matmul %748, %18, %cst_199 {dimension_numbers = #tpu.dot_dimension_numbers<[2], [1], [1], [2], [0, 0, 0, 1, 1, 2], [0], [0]>} : vector<2x1x8xbf16>, vector<2x8x128xbf16>, vector<2x1x128xf32> -> vector<2x1x128xf32>
    "tpu.trace_stop"() : () -> ()
    %750 = vector.shape_cast %749 : vector<2x1x128xf32> to vector<2x128xf32>
    %751 = tpu.concatenate %750, %721 in 1 : vector<2x128xf32>, vector<2x128xf32> -> vector<2x256xf32>
    %752 = arith.truncf %751 : vector<2x256xf32> to vector<2x256xbf16>
    %cst_200 = arith.constant dense<0.000000e+00> : vector<2x128xf32>
    %753 = tpu.matmul %752, %9, %cst_200 {dimension_numbers = #tpu.dot_dimension_numbers<[1], [0], [0], [1], [0, 0, 1, 1], [], []>} : vector<2x256xbf16>, vector<256x128xbf16>, vector<2x128xf32> -> vector<2x128xf32>
    %754 = vector.broadcast %10 : vector<1x128xf32> to vector<2x128xf32>
    %755 = arith.addf %753, %754 : vector<2x128xf32>
    %756 = math.tanh %755 : vector<2x128xf32>
    %cst_201 = arith.constant 9.99999993E-9 : f32
    %757 = vector.broadcast %cst_201 : f32 to vector<2x8xf32>
    %758 = arith.addf %746, %757 : vector<2x8xf32>
    %759 = arith.mulf %758, %2 : vector<2x8xf32>
    %cst_202 = arith.constant dense<0.000000e+00> : vector<2xf32>
    %760 = vector.multi_reduction <add>, %759, %cst_202 [1] : vector<2x8xf32> to vector<2xf32>
    %761 = vector.shape_cast %760 : vector<2xf32> to vector<2x1xf32>
    %762 = tpu.reciprocal %761 {approx = true} : vector<2x1xf32> -> vector<2x1xf32>
    %763 = vector.broadcast %762 : vector<2x1xf32> to vector<2x8xf32>
    %764 = arith.mulf %759, %763 : vector<2x8xf32>
    %cst_203 = arith.constant 6.000000e+00 : f32
    %765 = vector.broadcast %cst_203 : f32 to vector<2x1xf32>
    %766 = arith.cmpf oge, %21, %765 : vector<2x1xf32>
    %767 = arith.extui %766 : vector<2x1xi1> to vector<2x1xi32>
    %768 = arith.sitofp %767 : vector<2x1xi32> to vector<2x1xf32>
    %769 = vector.broadcast %768 : vector<2x1xf32> to vector<2x8xf32>
    %770 = arith.mulf %687, %769 : vector<2x8xf32>
    %771 = arith.mulf %764, %770 : vector<2x8xf32>
    %cst_204 = arith.constant dense<0xFF800000> : vector<2xf32>
    %772 = vector.multi_reduction <maximumf>, %771, %cst_204 [1] : vector<2x8xf32> to vector<2xf32>
    %773 = vector.shape_cast %772 : vector<2xf32> to vector<2x1xf32>
    %774 = vector.broadcast %773 : vector<2x1xf32> to vector<2x8xf32>
    %775 = arith.cmpf oeq, %771, %774 : vector<2x8xf32>
    %c8_i32_205 = arith.constant 8 : i32
    %776 = vector.broadcast %c8_i32_205 : i32 to vector<2x8xi32>
    %777 = arith.select %775, %19, %776 : vector<2x8xi1>, vector<2x8xi32>
    %cst_206 = arith.constant dense<2147483647> : vector<2xi32>
    %778 = vector.multi_reduction <minsi>, %777, %cst_206 [1] : vector<2x8xi32> to vector<2xi32>
    %779 = vector.shape_cast %778 : vector<2xi32> to vector<2x1xi32>
    %780 = vector.broadcast %779 : vector<2x1xi32> to vector<2x8xi32>
    %781 = arith.cmpi eq, %19, %780 : vector<2x8xi32>
    %782 = arith.extui %781 : vector<2x8xi1> to vector<2x8xi32>
    %783 = arith.sitofp %782 : vector<2x8xi32> to vector<2x8xf32>
    %cst_207 = arith.constant 9.99999993E-9 : f32
    %784 = vector.broadcast %cst_207 : f32 to vector<2x8xf32>
    %785 = arith.addf %771, %784 : vector<2x8xf32>
    %786 = arith.mulf %785, %783 : vector<2x8xf32>
    %cst_208 = arith.constant dense<0.000000e+00> : vector<2xf32>
    %787 = vector.multi_reduction <add>, %786, %cst_208 [1] : vector<2x8xf32> to vector<2xf32>
    %788 = vector.shape_cast %787 : vector<2xf32> to vector<2x1xf32>
    %789 = math.log %788 : vector<2x1xf32>
    %cst_209 = arith.constant dense<0.000000e+00> : vector<2xf32>
    %790 = vector.multi_reduction <add>, %785, %cst_209 [1] : vector<2x8xf32> to vector<2xf32>
    %791 = vector.shape_cast %790 : vector<2xf32> to vector<2x1xf32>
    %792 = math.log %791 : vector<2x1xf32>
    %793 = arith.subf %789, %792 : vector<2x1xf32>
    %c0_210 = arith.constant 0 : index
    %c6 = arith.constant 6 : index
    %794 = vector.load %arg16[%c0_210, %c6] : memref<2x8xf32, #tpu.memory_space<vmem>>, vector<2x1xf32>
    tpu.vector_store %arg16[%c0_210, %c6], %793 {strides = array<i32>} : memref<2x8xf32, #tpu.memory_space<vmem>>, vector<2x1xf32>,
    %c0_211 = arith.constant 0 : index
    %c6_212 = arith.constant 6 : index
    %795 = vector.load %arg17[%c0_211, %c6_212] : memref<2x8xi32, #tpu.memory_space<vmem>>, vector<2x1xi32>
    tpu.vector_store %arg17[%c0_211, %c6_212], %779 {strides = array<i32>} : memref<2x8xi32, #tpu.memory_space<vmem>>, vector<2x1xi32>,
    %cst_213 = arith.constant 1.000000e+00 : f32
    %796 = vector.broadcast %cst_213 : f32 to vector<2x8xf32>
    %797 = arith.subf %796, %783 : vector<2x8xf32>
    %798 = arith.mulf %687, %797 : vector<2x8xf32>
    %799 = vector.shape_cast %783 : vector<2x8xf32> to vector<2x1x8xf32>
    %800 = arith.truncf %799 : vector<2x1x8xf32> to vector<2x1x8xbf16>
    "tpu.trace_start"() <{level = 10 : i32, message = "bql,ble->bqe"}> : () -> ()
    %cst_214 = arith.constant dense<0.000000e+00> : vector<2x1x128xf32>
    %801 = tpu.matmul %800, %0, %cst_214 {dimension_numbers = #tpu.dot_dimension_numbers<[2], [1], [1], [2], [0, 0, 0, 1, 1, 2], [0], [0]>} : vector<2x1x8xbf16>, vector<2x8x128xbf16>, vector<2x1x128xf32> -> vector<2x1x128xf32>
    "tpu.trace_stop"() : () -> ()
    %802 = vector.shape_cast %801 : vector<2x1x128xf32> to vector<2x128xf32>
    %803 = tpu.concatenate %802, %756 in 1 : vector<2x128xf32>, vector<2x128xf32> -> vector<2x256xf32>
    %804 = arith.truncf %803 : vector<2x256xf32> to vector<2x256xbf16>
    %cst_215 = arith.constant dense<0.000000e+00> : vector<2x512xf32>
    %805 = tpu.matmul %804, %3, %cst_215 {dimension_numbers = #tpu.dot_dimension_numbers<[1], [0], [0], [1], [0, 0, 1, 1], [], []>} : vector<2x256xbf16>, vector<256x512xbf16>, vector<2x512xf32> -> vector<2x512xf32>
    %806 = vector.broadcast %4 : vector<1x512xf32> to vector<2x512xf32>
    %807 = arith.addf %805, %806 : vector<2x512xf32>
    %808 = vector.extract_strided_slice %807 {offsets = [0, 0], sizes = [2, 128], strides = [1, 1]} : vector<2x512xf32> to vector<2x128xf32>
    %809 = arith.negf %808 : vector<2x128xf32>
    %810 = math.exp %809 : vector<2x128xf32>
    %cst_216 = arith.constant 1.000000e+00 : f32
    %811 = vector.broadcast %cst_216 : f32 to vector<2x128xf32>
    %812 = arith.addf %811, %810 : vector<2x128xf32>
    %813 = arith.divf %811, %812 : vector<2x128xf32>
    %814 = vector.extract_strided_slice %807 {offsets = [0, 128], sizes = [2, 128], strides = [1, 1]} : vector<2x512xf32> to vector<2x128xf32>
    %815 = arith.negf %814 : vector<2x128xf32>
    %816 = math.exp %815 : vector<2x128xf32>
    %cst_217 = arith.constant 1.000000e+00 : f32
    %817 = vector.broadcast %cst_217 : f32 to vector<2x128xf32>
    %818 = arith.addf %817, %816 : vector<2x128xf32>
    %819 = arith.divf %817, %818 : vector<2x128xf32>
    %820 = vector.extract_strided_slice %807 {offsets = [0, 256], sizes = [2, 128], strides = [1, 1]} : vector<2x512xf32> to vector<2x128xf32>
    %821 = math.tanh %820 : vector<2x128xf32>
    %822 = vector.extract_strided_slice %807 {offsets = [0, 384], sizes = [2, 128], strides = [1, 1]} : vector<2x512xf32> to vector<2x128xf32>
    %823 = arith.negf %822 : vector<2x128xf32>
    %824 = math.exp %823 : vector<2x128xf32>
    %cst_218 = arith.constant 1.000000e+00 : f32
    %825 = vector.broadcast %cst_218 : f32 to vector<2x128xf32>
    %826 = arith.addf %825, %824 : vector<2x128xf32>
    %827 = arith.divf %825, %826 : vector<2x128xf32>
    %828 = arith.mulf %819, %719 : vector<2x128xf32>
    %829 = arith.mulf %813, %821 : vector<2x128xf32>
    %830 = arith.addf %828, %829 : vector<2x128xf32>
    %831 = math.tanh %830 : vector<2x128xf32>
    %832 = arith.mulf %827, %831 : vector<2x128xf32>
    %833 = arith.truncf %832 : vector<2x128xf32> to vector<2x128xbf16>
    %cst_219 = arith.constant dense<0.000000e+00> : vector<2x128xf32>
    %834 = tpu.matmul %833, %5, %cst_219 {dimension_numbers = #tpu.dot_dimension_numbers<[1], [0], [0], [1], [0, 0, 1, 1], [], []>} : vector<2x128xbf16>, vector<128x128xbf16>, vector<2x128xf32> -> vector<2x128xf32>
    %835 = vector.broadcast %6 : vector<1x128xf32> to vector<2x128xf32>
    %836 = arith.addf %834, %835 : vector<2x128xf32>
    %837 = vector.shape_cast %836 : vector<2x128xf32> to vector<2x1x128xf32>
    %838 = vector.broadcast %837 : vector<2x1x128xf32> to vector<2x8x128xf32>
    %839 = arith.addf %838, %17 : vector<2x8x128xf32>
    %840 = math.tanh %839 : vector<2x8x128xf32>
    %841 = vector.broadcast %12 : vector<1x1x128xf32> to vector<2x8x128xf32>
    %842 = arith.mulf %840, %841 : vector<2x8x128xf32>
    %cst_220 = arith.constant dense<0.000000e+00> : vector<2x8xf32>
    %843 = vector.multi_reduction <add>, %842, %cst_220 [2] : vector<2x8x128xf32> to vector<2x8xf32>
    %cst_221 = arith.constant 0.000000e+00 : f32
    %844 = vector.broadcast %cst_221 : f32 to vector<2x8xf32>
    %845 = arith.cmpf oeq, %798, %844 : vector<2x8xf32>
    %cst_222 = arith.constant -1.000000e+30 : f32
    %846 = vector.broadcast %cst_222 : f32 to vector<2x8xf32>
    %847 = arith.select %845, %846, %843 : vector<2x8xi1>, vector<2x8xf32>
    %cst_223 = arith.constant dense<0xFF800000> : vector<2xf32>
    %848 = vector.multi_reduction <maximumf>, %847, %cst_223 [1] : vector<2x8xf32> to vector<2xf32>
    %849 = vector.shape_cast %848 : vector<2xf32> to vector<2x1xf32>
    %850 = vector.broadcast %849 : vector<2x1xf32> to vector<2x8xf32>
    %851 = arith.subf %847, %850 : vector<2x8xf32>
    %852 = math.exp %851 : vector<2x8xf32>
    %cst_224 = arith.constant dense<0.000000e+00> : vector<2xf32>
    %853 = vector.multi_reduction <add>, %852, %cst_224 [1] : vector<2x8xf32> to vector<2xf32>
    %854 = vector.shape_cast %853 : vector<2xf32> to vector<2x1xf32>
    %855 = tpu.reciprocal %854 {approx = true} : vector<2x1xf32> -> vector<2x1xf32>
    %856 = vector.broadcast %855 : vector<2x1xf32> to vector<2x8xf32>
    %857 = arith.mulf %852, %856 : vector<2x8xf32>
    %858 = vector.shape_cast %857 : vector<2x8xf32> to vector<2x1x8xf32>
    %859 = arith.truncf %858 : vector<2x1x8xf32> to vector<2x1x8xbf16>
    "tpu.trace_start"() <{level = 10 : i32, message = "bql,blh->bqh"}> : () -> ()
    %cst_225 = arith.constant dense<0.000000e+00> : vector<2x1x128xf32>
    %860 = tpu.matmul %859, %18, %cst_225 {dimension_numbers = #tpu.dot_dimension_numbers<[2], [1], [1], [2], [0, 0, 0, 1, 1, 2], [0], [0]>} : vector<2x1x8xbf16>, vector<2x8x128xbf16>, vector<2x1x128xf32> -> vector<2x1x128xf32>
    "tpu.trace_stop"() : () -> ()
    %861 = vector.shape_cast %860 : vector<2x1x128xf32> to vector<2x128xf32>
    %862 = tpu.concatenate %861, %832 in 1 : vector<2x128xf32>, vector<2x128xf32> -> vector<2x256xf32>
    %863 = arith.truncf %862 : vector<2x256xf32> to vector<2x256xbf16>
    %cst_226 = arith.constant dense<0.000000e+00> : vector<2x128xf32>
    %864 = tpu.matmul %863, %9, %cst_226 {dimension_numbers = #tpu.dot_dimension_numbers<[1], [0], [0], [1], [0, 0, 1, 1], [], []>} : vector<2x256xbf16>, vector<256x128xbf16>, vector<2x128xf32> -> vector<2x128xf32>
    %865 = vector.broadcast %10 : vector<1x128xf32> to vector<2x128xf32>
    %866 = arith.addf %864, %865 : vector<2x128xf32>
    %867 = math.tanh %866 : vector<2x128xf32>
    %cst_227 = arith.constant 9.99999993E-9 : f32
    %868 = vector.broadcast %cst_227 : f32 to vector<2x8xf32>
    %869 = arith.addf %857, %868 : vector<2x8xf32>
    %870 = arith.mulf %869, %2 : vector<2x8xf32>
    %cst_228 = arith.constant dense<0.000000e+00> : vector<2xf32>
    %871 = vector.multi_reduction <add>, %870, %cst_228 [1] : vector<2x8xf32> to vector<2xf32>
    %872 = vector.shape_cast %871 : vector<2xf32> to vector<2x1xf32>
    %873 = tpu.reciprocal %872 {approx = true} : vector<2x1xf32> -> vector<2x1xf32>
    %874 = vector.broadcast %873 : vector<2x1xf32> to vector<2x8xf32>
    %875 = arith.mulf %870, %874 : vector<2x8xf32>
    %cst_229 = arith.constant 7.000000e+00 : f32
    %876 = vector.broadcast %cst_229 : f32 to vector<2x1xf32>
    %877 = arith.cmpf oge, %21, %876 : vector<2x1xf32>
    %878 = arith.extui %877 : vector<2x1xi1> to vector<2x1xi32>
    %879 = arith.sitofp %878 : vector<2x1xi32> to vector<2x1xf32>
    %880 = vector.broadcast %879 : vector<2x1xf32> to vector<2x8xf32>
    %881 = arith.mulf %798, %880 : vector<2x8xf32>
    %882 = arith.mulf %875, %881 : vector<2x8xf32>
    %cst_230 = arith.constant dense<0xFF800000> : vector<2xf32>
    %883 = vector.multi_reduction <maximumf>, %882, %cst_230 [1] : vector<2x8xf32> to vector<2xf32>
    %884 = vector.shape_cast %883 : vector<2xf32> to vector<2x1xf32>
    %885 = vector.broadcast %884 : vector<2x1xf32> to vector<2x8xf32>
    %886 = arith.cmpf oeq, %882, %885 : vector<2x8xf32>
    %c8_i32_231 = arith.constant 8 : i32
    %887 = vector.broadcast %c8_i32_231 : i32 to vector<2x8xi32>
    %888 = arith.select %886, %19, %887 : vector<2x8xi1>, vector<2x8xi32>
    %cst_232 = arith.constant dense<2147483647> : vector<2xi32>
    %889 = vector.multi_reduction <minsi>, %888, %cst_232 [1] : vector<2x8xi32> to vector<2xi32>
    %890 = vector.shape_cast %889 : vector<2xi32> to vector<2x1xi32>
    %891 = vector.broadcast %890 : vector<2x1xi32> to vector<2x8xi32>
    %892 = arith.cmpi eq, %19, %891 : vector<2x8xi32>
    %893 = arith.extui %892 : vector<2x8xi1> to vector<2x8xi32>
    %894 = arith.sitofp %893 : vector<2x8xi32> to vector<2x8xf32>
    %cst_233 = arith.constant 9.99999993E-9 : f32
    %895 = vector.broadcast %cst_233 : f32 to vector<2x8xf32>
    %896 = arith.addf %882, %895 : vector<2x8xf32>
    %897 = arith.mulf %896, %894 : vector<2x8xf32>
    %cst_234 = arith.constant dense<0.000000e+00> : vector<2xf32>
    %898 = vector.multi_reduction <add>, %897, %cst_234 [1] : vector<2x8xf32> to vector<2xf32>
    %899 = vector.shape_cast %898 : vector<2xf32> to vector<2x1xf32>
    %900 = math.log %899 : vector<2x1xf32>
    %cst_235 = arith.constant dense<0.000000e+00> : vector<2xf32>
    %901 = vector.multi_reduction <add>, %896, %cst_235 [1] : vector<2x8xf32> to vector<2xf32>
    %902 = vector.shape_cast %901 : vector<2xf32> to vector<2x1xf32>
    %903 = math.log %902 : vector<2x1xf32>
    %904 = arith.subf %900, %903 : vector<2x1xf32>
    %c0_236 = arith.constant 0 : index
    %c7 = arith.constant 7 : index
    %905 = vector.load %arg16[%c0_236, %c7] : memref<2x8xf32, #tpu.memory_space<vmem>>, vector<2x1xf32>
    tpu.vector_store %arg16[%c0_236, %c7], %904 {strides = array<i32>} : memref<2x8xf32, #tpu.memory_space<vmem>>, vector<2x1xf32>,
    %c0_237 = arith.constant 0 : index
    %c7_238 = arith.constant 7 : index
    %906 = vector.load %arg17[%c0_237, %c7_238] : memref<2x8xi32, #tpu.memory_space<vmem>>, vector<2x1xi32>
    tpu.vector_store %arg17[%c0_237, %c7_238], %890 {strides = array<i32>} : memref<2x8xi32, #tpu.memory_space<vmem>>, vector<2x1xi32>,
    %c0_239 = arith.constant 0 : index
    %c0_240 = arith.constant 0 : index
    %907 = vector.load %arg18[%c0_239, %c0_240] : memref<2x128xf32, #tpu.memory_space<vmem>>, vector<2x128xf32>
    tpu.vector_store %arg18[%c0_239, %c0_240], %867 {strides = array<i32>} : memref<2x128xf32, #tpu.memory_space<vmem>>, vector<2x128xf32>,
    %c0_241 = arith.constant 0 : index
    %c0_242 = arith.constant 0 : index
    %908 = vector.load %arg19[%c0_241, %c0_242] : memref<2x128xf32, #tpu.memory_space<vmem>>, vector<2x128xf32>
    tpu.vector_store %arg19[%c0_241, %c0_242], %830 {strides = array<i32>} : memref<2x128xf32, #tpu.memory_space<vmem>>, vector<2x128xf32>,
    return
  }
  func.func @transform_0(%arg0: i32) -> (i32, i32, i32) {
    %c0_i32 = arith.constant 0 : i32
    %c0_i32_0 = arith.constant 0 : i32
    %c0_i32_1 = arith.constant 0 : i32
    return %arg0, %c0_i32, %c0_i32_0 : i32, i32, i32
  }
  func.func @transform_1(%arg0: i32) -> (i32, i32) {
    %c0_i32 = arith.constant 0 : i32
    %c0_i32_0 = arith.constant 0 : i32
    return %arg0, %c0_i32 : i32, i32
  }
  func.func @transform_2(%arg0: i32) -> (i32, i32) {
    %c0_i32 = arith.constant 0 : i32
    %c0_i32_0 = arith.constant 0 : i32
    return %arg0, %c0_i32 : i32, i32
  }
  func.func @transform_3(%arg0: i32) -> (i32, i32) {
    %c0_i32 = arith.constant 0 : i32
    %c0_i32_0 = arith.constant 0 : i32
    return %arg0, %c0_i32 : i32, i32
  }
  func.func @transform_4(%arg0: i32) -> (i32, i32, i32) {
    %c0_i32 = arith.constant 0 : i32
    %c0_i32_0 = arith.constant 0 : i32
    %c0_i32_1 = arith.constant 0 : i32
    return %arg0, %c0_i32, %c0_i32_0 : i32, i32, i32
  }
  func.func @transform_5(%arg0: i32) -> (i32, i32) {
    %c0_i32 = arith.constant 0 : i32
    %c0_i32_0 = arith.constant 0 : i32
    return %arg0, %c0_i32 : i32, i32
  }
  func.func @transform_6(%arg0: i32) -> (i32, i32) {
    %c0_i32 = arith.constant 0 : i32
    %c0_i32_0 = arith.constant 0 : i32
    %c0_i32_1 = arith.constant 0 : i32
    return %c0_i32, %c0_i32_0 : i32, i32
  }
  func.func @transform_7(%arg0: i32) -> (i32, i32) {
    %c0_i32 = arith.constant 0 : i32
    %c0_i32_0 = arith.constant 0 : i32
    %c0_i32_1 = arith.constant 0 : i32
    return %c0_i32, %c0_i32_0 : i32, i32
  }
  func.func @transform_8(%arg0: i32) -> (i32, i32) {
    %c0_i32 = arith.constant 0 : i32
    %c0_i32_0 = arith.constant 0 : i32
    %c0_i32_1 = arith.constant 0 : i32
    return %c0_i32, %c0_i32_0 : i32, i32
  }
  func.func @transform_9(%arg0: i32) -> (i32, i32) {
    %c0_i32 = arith.constant 0 : i32
    %c0_i32_0 = arith.constant 0 : i32
    %c0_i32_1 = arith.constant 0 : i32
    return %c0_i32, %c0_i32_0 : i32, i32
  }
  func.func @transform_10(%arg0: i32) -> (i32, i32) {
    %c0_i32 = arith.constant 0 : i32
    %c0_i32_0 = arith.constant 0 : i32
    %c0_i32_1 = arith.constant 0 : i32
    return %c0_i32, %c0_i32_0 : i32, i32
  }
  func.func @transform_11(%arg0: i32) -> (i32, i32) {
    %c0_i32 = arith.constant 0 : i32
    %c0_i32_0 = arith.constant 0 : i32
    %c0_i32_1 = arith.constant 0 : i32
    return %c0_i32, %c0_i32_0 : i32, i32
  }
  func.func @transform_12(%arg0: i32) -> (i32, i32) {
    %c0_i32 = arith.constant 0 : i32
    %c0_i32_0 = arith.constant 0 : i32
    %c0_i32_1 = arith.constant 0 : i32
    return %c0_i32, %c0_i32_0 : i32, i32
  }
  func.func @transform_13(%arg0: i32) -> (i32, i32) {
    %c0_i32 = arith.constant 0 : i32
    %c0_i32_0 = arith.constant 0 : i32
    %c0_i32_1 = arith.constant 0 : i32
    return %c0_i32, %c0_i32_0 : i32, i32
  }
  func.func @transform_14(%arg0: i32) -> (i32, i32) {
    %c0_i32 = arith.constant 0 : i32
    %c0_i32_0 = arith.constant 0 : i32
    %c0_i32_1 = arith.constant 0 : i32
    return %c0_i32, %c0_i32_0 : i32, i32
  }
  func.func @transform_15(%arg0: i32) -> (i32, i32) {
    %c0_i32 = arith.constant 0 : i32
    %c0_i32_0 = arith.constant 0 : i32
    return %arg0, %c0_i32 : i32, i32
  }
  func.func @transform_16(%arg0: i32) -> (i32, i32) {
    %c0_i32 = arith.constant 0 : i32
    %c0_i32_0 = arith.constant 0 : i32
    return %arg0, %c0_i32 : i32, i32
  }
  func.func @transform_17(%arg0: i32) -> (i32, i32) {
    %c0_i32 = arith.constant 0 : i32
    %c0_i32_0 = arith.constant 0 : i32
    return %arg0, %c0_i32 : i32, i32
  }
  func.func @transform_18(%arg0: i32) -> (i32, i32) {
    %c0_i32 = arith.constant 0 : i32
    %c0_i32_0 = arith.constant 0 : i32
    return %arg0, %c0_i32 : i32, i32
  }
}

</mosaic_0001>

<llo_original>
// kernel: decoder_forward.1
$region0: #{decoder_forward.1}
  #allocation0 [shape = 'u32[]', space=smem, size = 0x4, offset = 0x4, fixed_abs, tag = 'smem constant byte address 0x4 - core index']
  #allocation1 [shape = 'u32[72,128]{1,0:T(1,128)}', space=vmem, size = 0x9000, scoped, tag = 'internal scratch']
  %s0 = inlined_call_operand.vmem [shape: bf16[2,8,128], index: 0, kind: input, shape index: {}]
  %s1 = inlined_call_operand.vmem [shape: f32[2,128], index: 1, kind: input, shape index: {}]
  %s2 = inlined_call_operand.vmem [shape: f32[2,128], index: 2, kind: input, shape index: {}]
  %s3 = inlined_call_operand.vmem [shape: f32[2,128], index: 3, kind: input, shape index: {}]
  %s4 = inlined_call_operand.vmem [shape: bf16[2,8,128], index: 4, kind: input, shape index: {}]
  %s5 = inlined_call_operand.vmem [shape: f32[2,8], index: 5, kind: input, shape index: {}]
  %s6 = inlined_call_operand.vmem [shape: bf16[256,512], index: 6, kind: input, shape index: {}]
  %s7 = inlined_call_operand.vmem [shape: f32[1,512], index: 7, kind: input, shape index: {}]
  %s8 = inlined_call_operand.vmem [shape: bf16[128,128], index: 8, kind: input, shape index: {}]
  %s9 = inlined_call_operand.vmem [shape: f32[1,128], index: 9, kind: input, shape index: {}]
  %s10 = inlined_call_operand.vmem [shape: bf16[128,128], index: 10, kind: input, shape index: {}]
  %s11 = inlined_call_operand.vmem [shape: f32[1,128], index: 11, kind: input, shape index: {}]
  %s12 = inlined_call_operand.vmem [shape: f32[1,128], index: 12, kind: input, shape index: {}]
  %s13 = inlined_call_operand.vmem [shape: bf16[256,128], index: 13, kind: input, shape index: {}]
  %s14 = inlined_call_operand.vmem [shape: f32[1,128], index: 14, kind: input, shape index: {}]
  %s15 = inlined_call_operand.hbm [shape: f32[2,8], index: 15, kind: output, shape index: {0}]
  %s16 = inlined_call_operand.hbm [shape: s32[2,8], index: 16, kind: output, shape index: {1}]
  %s17 = inlined_call_operand.hbm [shape: f32[2,128], index: 17, kind: output, shape index: {2}]
  %s18 = inlined_call_operand.hbm [shape: f32[2,128], index: 18, kind: output, shape index: {3}]
  %19 = xla_tuple %s15, %s16, %s17, %s18
  %s20 = sld [smem:[#allocation0]]
  $region94: #{decoder_forward.1} parent=0
    _
  %s22 = ssub.s32 1, %s20
  %s23 = scalar_select 0, %s22, %s20
  $region1: #{decoder_forward.1} parent=0
    #allocation2 [shape = 'u8[1024]{0}', space=vmem, size = 0x400, scoped, tag = 'output window, operand 0, single buffered']
    #allocation3 [shape = 's32[1]{0}', space=sflag, size = 0x4, scoped, tag = 'scoped memory for decoder_forward.1']
    #allocation4 [shape = 'u8[1024]{0}', space=vmem, size = 0x400, scoped, tag = 'output window, operand 1, single buffered']
    #allocation5 [shape = 's32[1]{0}', space=sflag, size = 0x4, scoped, tag = 'scoped memory for decoder_forward.1']
    #allocation6 [shape = 'u8[1024]{0}', space=vmem, size = 0x400, scoped, tag = 'output window, operand 2, single buffered']
    #allocation7 [shape = 'u8[1024]{0}', space=vmem, size = 0x400, scoped, tag = 'output window, operand 3, single buffered']
    #allocation8 [shape = 's32[1]{0}', space=sflag, size = 0x4, scoped, tag = 'scoped memory for decoder_forward.1']
    %24 = vsyncpa [#allocation3], 0
    %25 = vsyncpa [#allocation5], 0
    %26 = vsyncpa [#allocation8], 0
    // Predicated region
    $region2: #{decoder_forward.1} parent=1 // pred_check
      _
    $region3: #{decoder_forward.1} parent=1 // pred_check_branch
      %28 = sbr.rel (0) target = $region5
    $region4: #{decoder_forward.1} parent=1 // pred_region
      _
    $region5: #{decoder_forward.1} parent=1 // pred_fallthru
      _
    // Predicated region
    $region6: #{decoder_forward.1} parent=1 // pred_check
      _
    $region7: #{decoder_forward.1} parent=1 // pred_check_branch
      %30 = sbr.rel (0) target = $region9
    $region8: #{decoder_forward.1} parent=1 // pred_region
      _
    $region9: #{decoder_forward.1} parent=1 // pred_fallthru
      _
    // Predicated region
    $region10: #{decoder_forward.1} parent=1 // pred_check
      _
    $region11: #{decoder_forward.1} parent=1 // pred_check_branch
      %32 = sbr.rel (0) target = $region13
    $region12: #{decoder_forward.1} parent=1 // pred_region
      _
    $region13: #{decoder_forward.1} parent=1 // pred_fallthru
      _
    // Predicated region
    $region14: #{decoder_forward.1} parent=1 // pred_check
      _
    $region15: #{decoder_forward.1} parent=1 // pred_check_branch
      %34 = sbr.rel (0) target = $region17
    $region16: #{decoder_forward.1} parent=1 // pred_region
      _
    $region17: #{decoder_forward.1} parent=1 // pred_fallthru
      _
    // Predicated region
    $region18: #{decoder_forward.1} parent=1 // pred_check
      _
    $region19: #{decoder_forward.1} parent=1 // pred_check_branch
      %36 = sbr.rel (0) target = $region21
    $region20: #{decoder_forward.1} parent=1 // pred_region
      _
    $region21: #{decoder_forward.1} parent=1 // pred_fallthru
      _
    // Predicated region
    $region22: #{decoder_forward.1} parent=1 // pred_check
      _
    $region23: #{decoder_forward.1} parent=1 // pred_check_branch
      %38 = sbr.rel (0) target = $region25
    $region24: #{decoder_forward.1} parent=1 // pred_region
      _
    $region25: #{decoder_forward.1} parent=1 // pred_fallthru
      _
    // Predicated region
    $region26: #{decoder_forward.1} parent=1 // pred_check
      _
    $region27: #{decoder_forward.1} parent=1 // pred_check_branch
      %40 = sbr.rel (0) target = $region29
    $region28: #{decoder_forward.1} parent=1 // pred_region
      _
    $region29: #{decoder_forward.1} parent=1 // pred_fallthru
      _
    // Predicated region
    $region30: #{decoder_forward.1} parent=1 // pred_check
      _
    $region31: #{decoder_forward.1} parent=1 // pred_check_branch
      %42 = sbr.rel (0) target = $region33
    $region32: #{decoder_forward.1} parent=1 // pred_region
      _
    $region33: #{decoder_forward.1} parent=1 // pred_fallthru
      _
    // Predicated region
    $region34: #{decoder_forward.1} parent=1 // pred_check
      _
    $region35: #{decoder_forward.1} parent=1 // pred_check_branch
      %44 = sbr.rel (0) target = $region37
    $region36: #{decoder_forward.1} parent=1 // pred_region
      _
    $region37: #{decoder_forward.1} parent=1 // pred_fallthru
      _
    // Predicated region
    $region38: #{decoder_forward.1} parent=1 // pred_check
      _
    $region39: #{decoder_forward.1} parent=1 // pred_check_branch
      %46 = sbr.rel (0) target = $region41
    $region40: #{decoder_forward.1} parent=1 // pred_region
      _
    $region41: #{decoder_forward.1} parent=1 // pred_fallthru
      _
    // Predicated region
    $region42: #{decoder_forward.1} parent=1 // pred_check
      _
    $region43: #{decoder_forward.1} parent=1 // pred_check_branch
      %48 = sbr.rel (0) target = $region45
    $region44: #{decoder_forward.1} parent=1 // pred_region
      _
    $region45: #{decoder_forward.1} parent=1 // pred_fallthru
      _
    // Predicated region
    $region46: #{decoder_forward.1} parent=1 // pred_check
      _
    $region47: #{decoder_forward.1} parent=1 // pred_check_branch
      %50 = sbr.rel (0) target = $region49
    $region48: #{decoder_forward.1} parent=1 // pred_region
      _
    $region49: #{decoder_forward.1} parent=1 // pred_fallthru
      _
    // Predicated region
    $region50: #{decoder_forward.1} parent=1 // pred_check
      _
    $region51: #{decoder_forward.1} parent=1 // pred_check_branch
      %52 = sbr.rel (0) target = $region53
    $region52: #{decoder_forward.1} parent=1 // pred_region
      _
    $region53: #{decoder_forward.1} parent=1 // pred_fallthru
      _
    // Predicated region
    $region54: #{decoder_forward.1} parent=1 // pred_check
      _
    $region55: #{decoder_forward.1} parent=1 // pred_check_branch
      %54 = sbr.rel (0) target = $region57
    $region56: #{decoder_forward.1} parent=1 // pred_region
      _
    $region57: #{decoder_forward.1} parent=1 // pred_fallthru
      _
    // Predicated region
    $region58: #{decoder_forward.1} parent=1 // pred_check
      _
    $region59: #{decoder_forward.1} parent=1 // pred_check_branch
      %56 = sbr.rel (0) target = $region61
    $region60: #{decoder_forward.1} parent=1 // pred_region
      _
    $region61: #{decoder_forward.1} parent=1 // pred_fallthru
      _
    %v58 = vld [vmem:[%s0] sm:$0xf]
    %v59 = vld [vmem:[%s0 + $0x4] sm:$0xf]
    %v60 = vld [vmem:[%s4] sm:$0xf]
    %v61 = vld [vmem:[%s4 + $0x4] sm:$0xf]
    %v62 = vld [vmem:[%s5] sm:$0x3]
    %v63 = vld [vmem:[%s6] sm:$0xff]
    %v64 = vld [vmem:[%s6 + $0x8] sm:$0xff]
    %v65 = vld [vmem:[%s6 + $0x10] sm:$0xff]
    %v66 = vld [vmem:[%s6 + $0x18] sm:$0xff]
    %v67 = vld [vmem:[%s6 + $0x20] sm:$0xff]
    %v68 = vld [vmem:[%s6 + $0x28] sm:$0xff]
    %v69 = vld [vmem:[%s6 + $0x30] sm:$0xff]
    %v70 = vld [vmem:[%s6 + $0x38] sm:$0xff]
    %v71 = vld [vmem:[%s6 + $0x40] sm:$0xff]
    %v72 = vld [vmem:[%s6 + $0x48] sm:$0xff]
    %v73 = vld [vmem:[%s6 + $0x50] sm:$0xff]
    %v74 = vld [vmem:[%s6 + $0x58] sm:$0xff]
    %v75 = vld [vmem:[%s6 + $0x60] sm:$0xff]
    %v76 = vld [vmem:[%s6 + $0x68] sm:$0xff]
    %v77 = vld [vmem:[%s6 + $0x70] sm:$0xff]
    %v78 = vld [vmem:[%s6 + $0x78] sm:$0xff]
    %v79 = vld [vmem:[%s6 + $0x80] sm:$0xff]
    %v80 = vld [vmem:[%s6 + $0x88] sm:$0xff]
    %v81 = vld [vmem:[%s6 + $0x90] sm:$0xff]
    %v82 = vld [vmem:[%s6 + $0x98] sm:$0xff]
    %v83 = vld [vmem:[%s6 + $0xa0] sm:$0xff]
    %v84 = vld [vmem:[%s6 + $0xa8] sm:$0xff]
    %v85 = vld [vmem:[%s6 + $0xb0] sm:$0xff]
    %v86 = vld [vmem:[%s6 + $0xb8] sm:$0xff]
    %v87 = vld [vmem:[%s6 + $0xc0] sm:$0xff]
    %v88 = vld [vmem:[%s6 + $0xc8] sm:$0xff]
    %v89 = vld [vmem:[%s6 + $0xd0] sm:$0xff]
    %v90 = vld [vmem:[%s6 + $0xd8] sm:$0xff]
    %v91 = vld [vmem:[%s6 + $0xe0] sm:$0xff]
    %v92 = vld [vmem:[%s6 + $0xe8] sm:$0xff]
    %v93 = vld [vmem:[%s6 + $0xf0] sm:$0xff]
    %v94 = vld [vmem:[%s6 + $0xf8] sm:$0xff]
    %v95 = vld [vmem:[%s6 + $0x100] sm:$0xff]
    %v96 = vld [vmem:[%s6 + $0x108] sm:$0xff]
    %v97 = vld [vmem:[%s6 + $0x110] sm:$0xff]
    %v98 = vld [vmem:[%s6 + $0x118] sm:$0xff]
    %v99 = vld [vmem:[%s6 + $0x120] sm:$0xff]
    %v100 = vld [vmem:[%s6 + $0x128] sm:$0xff]
    %v101 = vld [vmem:[%s6 + $0x130] sm:$0xff]
    %v102 = vld [vmem:[%s6 + $0x138] sm:$0xff]
    %v103 = vld [vmem:[%s6 + $0x140] sm:$0xff]
    %v104 = vld [vmem:[%s6 + $0x148] sm:$0xff]
    %v105 = vld [vmem:[%s6 + $0x150] sm:$0xff]
    %v106 = vld [vmem:[%s6 + $0x158] sm:$0xff]
    %v107 = vld [vmem:[%s6 + $0x160] sm:$0xff]
    %v108 = vld [vmem:[%s6 + $0x168] sm:$0xff]
    %v109 = vld [vmem:[%s6 + $0x170] sm:$0xff]
    %v110 = vld [vmem:[%s6 + $0x178] sm:$0xff]
    %v111 = vld [vmem:[%s6 + $0x180] sm:$0xff]
    %v112 = vld [vmem:[%s6 + $0x188] sm:$0xff]
    %v113 = vld [vmem:[%s6 + $0x190] sm:$0xff]
    %v114 = vld [vmem:[%s6 + $0x198] sm:$0xff]
    %v115 = vld [vmem:[%s6 + $0x1a0] sm:$0xff]
    %v116 = vld [vmem:[%s6 + $0x1a8] sm:$0xff]
    %v117 = vld [vmem:[%s6 + $0x1b0] sm:$0xff]
    %v118 = vld [vmem:[%s6 + $0x1b8] sm:$0xff]
    %v119 = vld [vmem:[%s6 + $0x1c0] sm:$0xff]
    %v120 = vld [vmem:[%s6 + $0x1c8] sm:$0xff]
    %v121 = vld [vmem:[%s6 + $0x1d0] sm:$0xff]
    %v122 = vld [vmem:[%s6 + $0x1d8] sm:$0xff]
    %v123 = vld [vmem:[%s6 + $0x1e0] sm:$0xff]
    %v124 = vld [vmem:[%s6 + $0x1e8] sm:$0xff]
    %v125 = vld [vmem:[%s6 + $0x1f0] sm:$0xff]
    %v126 = vld [vmem:[%s6 + $0x1f8] sm:$0xff]
    %v127 = vld [vmem:[%s7] sm:$0xf]
    %v128 = vld [vmem:[%s8] sm:$0xf]
    %v129 = vld [vmem:[%s8 + $0x4] sm:$0xf]
    %v130 = vld [vmem:[%s8 + $0x8] sm:$0xf]
    %v131 = vld [vmem:[%s8 + $0xc] sm:$0xf]
    %v132 = vld [vmem:[%s8 + $0x10] sm:$0xf]
    %v133 = vld [vmem:[%s8 + $0x14] sm:$0xf]
    %v134 = vld [vmem:[%s8 + $0x18] sm:$0xf]
    %v135 = vld [vmem:[%s8 + $0x1c] sm:$0xf]
    %v136 = vld [vmem:[%s8 + $0x20] sm:$0xf]
    %v137 = vld [vmem:[%s8 + $0x24] sm:$0xf]
    %v138 = vld [vmem:[%s8 + $0x28] sm:$0xf]
    %v139 = vld [vmem:[%s8 + $0x2c] sm:$0xf]
    %v140 = vld [vmem:[%s8 + $0x30] sm:$0xf]
    %v141 = vld [vmem:[%s8 + $0x34] sm:$0xf]
    %v142 = vld [vmem:[%s8 + $0x38] sm:$0xf]
    %v143 = vld [vmem:[%s8 + $0x3c] sm:$0xf]
    %v144 = vld [vmem:[%s9] sm:$0x1]
    %v145 = vld [vmem:[%s10] sm:$0xf]
    %v146 = vld [vmem:[%s10 + $0x4] sm:$0xf]
    %v147 = vld [vmem:[%s10 + $0x8] sm:$0xf]
    %v148 = vld [vmem:[%s10 + $0xc] sm:$0xf]
    %v149 = vld [vmem:[%s10 + $0x10] sm:$0xf]
    %v150 = vld [vmem:[%s10 + $0x14] sm:$0xf]
    %v151 = vld [vmem:[%s10 + $0x18] sm:$0xf]
    %v152 = vld [vmem:[%s10 + $0x1c] sm:$0xf]
    %v153 = vld [vmem:[%s10 + $0x20] sm:$0xf]
    %v154 = vld [vmem:[%s10 + $0x24] sm:$0xf]
    %v155 = vld [vmem:[%s10 + $0x28] sm:$0xf]
    %v156 = vld [vmem:[%s10 + $0x2c] sm:$0xf]
    %v157 = vld [vmem:[%s10 + $0x30] sm:$0xf]
    %v158 = vld [vmem:[%s10 + $0x34] sm:$0xf]
    %v159 = vld [vmem:[%s10 + $0x38] sm:$0xf]
    %v160 = vld [vmem:[%s10 + $0x3c] sm:$0xf]
    %v161 = vld [vmem:[%s11] sm:$0x1]
    %v162 = vld [vmem:[%s13] sm:$0xf]
    %v163 = vld [vmem:[%s13 + $0x4] sm:$0xf]
    %v164 = vld [vmem:[%s13 + $0x8] sm:$0xf]
    %v165 = vld [vmem:[%s13 + $0xc] sm:$0xf]
    %v166 = vld [vmem:[%s13 + $0x10] sm:$0xf]
    %v167 = vld [vmem:[%s13 + $0x14] sm:$0xf]
    %v168 = vld [vmem:[%s13 + $0x18] sm:$0xf]
    %v169 = vld [vmem:[%s13 + $0x1c] sm:$0xf]
    %v170 = vld [vmem:[%s13 + $0x20] sm:$0xf]
    %v171 = vld [vmem:[%s13 + $0x24] sm:$0xf]
    %v172 = vld [vmem:[%s13 + $0x28] sm:$0xf]
    %v173 = vld [vmem:[%s13 + $0x2c] sm:$0xf]
    %v174 = vld [vmem:[%s13 + $0x30] sm:$0xf]
    %v175 = vld [vmem:[%s13 + $0x34] sm:$0xf]
    %v176 = vld [vmem:[%s13 + $0x38] sm:$0xf]
    %v177 = vld [vmem:[%s13 + $0x3c] sm:$0xf]
    %v178 = vld [vmem:[%s13 + $0x40] sm:$0xf]
    %v179 = vld [vmem:[%s13 + $0x44] sm:$0xf]
    %v180 = vld [vmem:[%s13 + $0x48] sm:$0xf]
    %v181 = vld [vmem:[%s13 + $0x4c] sm:$0xf]
    %v182 = vld [vmem:[%s13 + $0x50] sm:$0xf]
    %v183 = vld [vmem:[%s13 + $0x54] sm:$0xf]
    %v184 = vld [vmem:[%s13 + $0x58] sm:$0xf]
    %v185 = vld [vmem:[%s13 + $0x5c] sm:$0xf]
    %v186 = vld [vmem:[%s13 + $0x60] sm:$0xf]
    %v187 = vld [vmem:[%s13 + $0x64] sm:$0xf]
    %v188 = vld [vmem:[%s13 + $0x68] sm:$0xf]
    %v189 = vld [vmem:[%s13 + $0x6c] sm:$0xf]
    %v190 = vld [vmem:[%s13 + $0x70] sm:$0xf]
    %v191 = vld [vmem:[%s13 + $0x74] sm:$0xf]
    %v192 = vld [vmem:[%s13 + $0x78] sm:$0xf]
    %v193 = vld [vmem:[%s13 + $0x7c] sm:$0xf]
    %v194 = vld [vmem:[%s14] sm:$0x1]
    %v195 = vld [vmem:[%s12] sm:$0x1]
    %v197 = vperm.slane %v161, 0
    %v201 = vunpack.c.l.b16 %v60
    %v202 = vunpack.c.l.b16 %v61
    %v203 = vpack.c.b16 %v202, %v201
    %v221 = vunpack.c.l.b16 %v145
    %v222 = vunpack.c.l.b16 %v146
    %v223 = vunpack.c.l.b16 %v147
    %v224 = vunpack.c.l.b16 %v148
    %v225 = vunpack.c.l.b16 %v149
    %v226 = vunpack.c.l.b16 %v150
    %v227 = vunpack.c.l.b16 %v151
    %v228 = vunpack.c.l.b16 %v152
    %v229 = vunpack.c.l.b16 %v153
    %v230 = vunpack.c.l.b16 %v154
    %v231 = vunpack.c.l.b16 %v155
    %v232 = vunpack.c.l.b16 %v156
    %v233 = vunpack.c.l.b16 %v157
    %v234 = vunpack.c.l.b16 %v158
    %v235 = vunpack.c.l.b16 %v159
    %v236 = vunpack.c.l.b16 %v160
    %v237 = vpack.c.b16 %v222, %v221
    %v238 = vpack.c.b16 %v224, %v223
    %v239 = vpack.c.b16 %v226, %v225
    %v240 = vpack.c.b16 %v228, %v227
    %v241 = vpack.c.b16 %v230, %v229
    %v242 = vpack.c.b16 %v232, %v231
    %v243 = vpack.c.b16 %v234, %v233
    %v244 = vpack.c.b16 %v236, %v235
    %253 = vmatpush.bf16.msra.mxu0 %v244
    %254 = vmatpush.bf16.msra.mxu0 %v243
    %255 = vmatpush.bf16.msra.mxu0 %v242
    %256 = vmatpush.bf16.msra.mxu0 %v241
    %257 = vmatpush.bf16.msra.mxu0 %v240
    %258 = vmatpush.bf16.msra.mxu0 %v239
    %259 = vmatpush.bf16.msra.mxu0 %v238
    %260 = vmatpush.bf16.msra.mxu0 %v237
    %261 = vmatmul.bf16.gmra.mxu0 %v203
    %v262 = vpop.f32.mrf.mxu0
    %v263 = vadd.f32 %v197, %v262
    %v264 = vpop.f32.mrf.mxu0
    %v265 = vadd.f32 %v197, %v264
    %266 = vdwg.mxu0
    %v267 = vpack.c.bf16 %v263, %v263
    %v268 = vpack.c.bf16 %v265, %v265
    %v269 = vlaneseq
    %v270 = vand.u32 %v269, 127
    %vm271 = vcmask 58368
    %v272 = vsel %vm271, %v62, 0.0
    %273 = vadd.xlane.f32.xlu0 %v272
    %v274 = vpop.xlane.xlu0 %273
    %v275 = vld [vmem:[%s1] sm:$0x3]
    %v276 = vld [vmem:[%s2] sm:$0x3]
    %v277 = vld [vmem:[%s3] sm:$0x3]
    %v278 = vpack.c.bf16 %v275, %v275
    %v279 = vpack.c.bf16 %v276, %v276
    %v281 = vperm.slane %v127, 0
    %v282 = vperm.slane %v127, 1
    %v283 = vperm.slane %v127, 2
    %v284 = vperm.slane %v127, 3
    %v353 = vunpack.c.l.b16 %v63
    %v354 = vunpack.c.h.b16 %v63
    %v355 = vunpack.c.l.b16 %v64
    %v356 = vunpack.c.h.b16 %v64
    %v357 = vunpack.c.l.b16 %v65
    %v358 = vunpack.c.h.b16 %v65
    %v359 = vunpack.c.l.b16 %v66
    %v360 = vunpack.c.h.b16 %v66
    %v361 = vunpack.c.l.b16 %v67
    %v362 = vunpack.c.h.b16 %v67
    %v363 = vunpack.c.l.b16 %v68
    %v364 = vunpack.c.h.b16 %v68
    %v365 = vunpack.c.l.b16 %v69
    %v366 = vunpack.c.h.b16 %v69
    %v367 = vunpack.c.l.b16 %v70
    %v368 = vunpack.c.h.b16 %v70
    %v369 = vunpack.c.l.b16 %v71
    %v370 = vunpack.c.h.b16 %v71
    %v371 = vunpack.c.l.b16 %v72
    %v372 = vunpack.c.h.b16 %v72
    %v373 = vunpack.c.l.b16 %v73
    %v374 = vunpack.c.h.b16 %v73
    %v375 = vunpack.c.l.b16 %v74
    %v376 = vunpack.c.h.b16 %v74
    %v377 = vunpack.c.l.b16 %v75
    %v378 = vunpack.c.h.b16 %v75
    %v379 = vunpack.c.l.b16 %v76
    %v380 = vunpack.c.h.b16 %v76
    %v381 = vunpack.c.l.b16 %v77
    %v382 = vunpack.c.h.b16 %v77
    %v383 = vunpack.c.l.b16 %v78
    %v384 = vunpack.c.h.b16 %v78
    %v385 = vunpack.c.l.b16 %v79
    %v386 = vunpack.c.h.b16 %v79
    %v387 = vunpack.c.l.b16 %v80
    %v388 = vunpack.c.h.b16 %v80
    %v389 = vunpack.c.l.b16 %v81
    %v390 = vunpack.c.h.b16 %v81
    %v391 = vunpack.c.l.b16 %v82
    %v392 = vunpack.c.h.b16 %v82
    %v393 = vunpack.c.l.b16 %v83
    %v394 = vunpack.c.h.b16 %v83
    %v395 = vunpack.c.l.b16 %v84
    %v396 = vunpack.c.h.b16 %v84
    %v397 = vunpack.c.l.b16 %v85
    %v398 = vunpack.c.h.b16 %v85
    %v399 = vunpack.c.l.b16 %v86
    %v400 = vunpack.c.h.b16 %v86
    %v401 = vunpack.c.l.b16 %v87
    %v402 = vunpack.c.h.b16 %v87
    %v403 = vunpack.c.l.b16 %v88
    %v404 = vunpack.c.h.b16 %v88
    %v405 = vunpack.c.l.b16 %v89
    %v406 = vunpack.c.h.b16 %v89
    %v407 = vunpack.c.l.b16 %v90
    %v408 = vunpack.c.h.b16 %v90
    %v409 = vunpack.c.l.b16 %v91
    %v410 = vunpack.c.h.b16 %v91
    %v411 = vunpack.c.l.b16 %v92
    %v412 = vunpack.c.h.b16 %v92
    %v413 = vunpack.c.l.b16 %v93
    %v414 = vunpack.c.h.b16 %v93
    %v415 = vunpack.c.l.b16 %v94
    %v416 = vunpack.c.h.b16 %v94
    %v417 = vunpack.c.l.b16 %v95
    %v418 = vunpack.c.h.b16 %v95
    %v419 = vunpack.c.l.b16 %v96
    %v420 = vunpack.c.h.b16 %v96
    %v421 = vunpack.c.l.b16 %v97
    %v422 = vunpack.c.h.b16 %v97
    %v423 = vunpack.c.l.b16 %v98
    %v424 = vunpack.c.h.b16 %v98
    %v425 = vunpack.c.l.b16 %v99
    %v426 = vunpack.c.h.b16 %v99
    %v427 = vunpack.c.l.b16 %v100
    %v428 = vunpack.c.h.b16 %v100
    %v429 = vunpack.c.l.b16 %v101
    %v430 = vunpack.c.h.b16 %v101
    %v431 = vunpack.c.l.b16 %v102
    %v432 = vunpack.c.h.b16 %v102
    %v433 = vunpack.c.l.b16 %v103
    %v434 = vunpack.c.h.b16 %v103
    %v435 = vunpack.c.l.b16 %v104
    %v436 = vunpack.c.h.b16 %v104
    %v437 = vunpack.c.l.b16 %v105
    %v438 = vunpack.c.h.b16 %v105
    %v439 = vunpack.c.l.b16 %v106
    %v440 = vunpack.c.h.b16 %v106
    %v441 = vunpack.c.l.b16 %v107
    %v442 = vunpack.c.h.b16 %v107
    %v443 = vunpack.c.l.b16 %v108
    %v444 = vunpack.c.h.b16 %v108
    %v445 = vunpack.c.l.b16 %v109
    %v446 = vunpack.c.h.b16 %v109
    %v447 = vunpack.c.l.b16 %v110
    %v448 = vunpack.c.h.b16 %v110
    %v449 = vunpack.c.l.b16 %v111
    %v450 = vunpack.c.h.b16 %v111
    %v451 = vunpack.c.l.b16 %v112
    %v452 = vunpack.c.h.b16 %v112
    %v453 = vunpack.c.l.b16 %v113
    %v454 = vunpack.c.h.b16 %v113
    %v455 = vunpack.c.l.b16 %v114
    %v456 = vunpack.c.h.b16 %v114
    %v457 = vunpack.c.l.b16 %v115
    %v458 = vunpack.c.h.b16 %v115
    %v459 = vunpack.c.l.b16 %v116
    %v460 = vunpack.c.h.b16 %v116
    %v461 = vunpack.c.l.b16 %v117
    %v462 = vunpack.c.h.b16 %v117
    %v463 = vunpack.c.l.b16 %v118
    %v464 = vunpack.c.h.b16 %v118
    %v465 = vunpack.c.l.b16 %v119
    %v466 = vunpack.c.h.b16 %v119
    %v467 = vunpack.c.l.b16 %v120
    %v468 = vunpack.c.h.b16 %v120
    %v469 = vunpack.c.l.b16 %v121
    %v470 = vunpack.c.h.b16 %v121
    %v471 = vunpack.c.l.b16 %v122
    %v472 = vunpack.c.h.b16 %v122
    %v473 = vunpack.c.l.b16 %v123
    %v474 = vunpack.c.h.b16 %v123
    %v475 = vunpack.c.l.b16 %v124
    %v476 = vunpack.c.h.b16 %v124
    %v477 = vunpack.c.l.b16 %v125
    %v478 = vunpack.c.h.b16 %v125
    %v479 = vunpack.c.l.b16 %v126
    %v480 = vunpack.c.h.b16 %v126
    %v481 = vpack.c.b16 %v357, %v353
    %v482 = vpack.c.b16 %v358, %v354
    %v483 = vpack.c.b16 %v359, %v355
    %v484 = vpack.c.b16 %v360, %v356
    %v485 = vpack.c.b16 %v365, %v361
    %v486 = vpack.c.b16 %v366, %v362
    %v487 = vpack.c.b16 %v367, %v363
    %v488 = vpack.c.b16 %v368, %v364
    %v489 = vpack.c.b16 %v373, %v369
    %v490 = vpack.c.b16 %v374, %v370
    %v491 = vpack.c.b16 %v375, %v371
    %v492 = vpack.c.b16 %v376, %v372
    %v493 = vpack.c.b16 %v381, %v377
    %v494 = vpack.c.b16 %v382, %v378
    %v495 = vpack.c.b16 %v383, %v379
    %v496 = vpack.c.b16 %v384, %v380
    %v497 = vpack.c.b16 %v389, %v385
    %v498 = vpack.c.b16 %v390, %v386
    %v499 = vpack.c.b16 %v391, %v387
    %v500 = vpack.c.b16 %v392, %v388
    %v501 = vpack.c.b16 %v397, %v393
    %v502 = vpack.c.b16 %v398, %v394
    %v503 = vpack.c.b16 %v399, %v395
    %v504 = vpack.c.b16 %v400, %v396
    %v505 = vpack.c.b16 %v405, %v401
    %v506 = vpack.c.b16 %v406, %v402
    %v507 = vpack.c.b16 %v407, %v403
    %v508 = vpack.c.b16 %v408, %v404
    %v509 = vpack.c.b16 %v413, %v409
    %v510 = vpack.c.b16 %v414, %v410
    %v511 = vpack.c.b16 %v415, %v411
    %v512 = vpack.c.b16 %v416, %v412
    %v513 = vpack.c.b16 %v421, %v417
    %v514 = vpack.c.b16 %v422, %v418
    %v515 = vpack.c.b16 %v423, %v419
    %v516 = vpack.c.b16 %v424, %v420
    %v517 = vpack.c.b16 %v429, %v425
    %v518 = vpack.c.b16 %v430, %v426
    %v519 = vpack.c.b16 %v431, %v427
    %v520 = vpack.c.b16 %v432, %v428
    %v521 = vpack.c.b16 %v437, %v433
    %v522 = vpack.c.b16 %v438, %v434
    %v523 = vpack.c.b16 %v439, %v435
    %v524 = vpack.c.b16 %v440, %v436
    %v525 = vpack.c.b16 %v445, %v441
    %v526 = vpack.c.b16 %v446, %v442
    %v527 = vpack.c.b16 %v447, %v443
    %v528 = vpack.c.b16 %v448, %v444
    %v529 = vpack.c.b16 %v453, %v449
    %v530 = vpack.c.b16 %v454, %v450
    %v531 = vpack.c.b16 %v455, %v451
    %v532 = vpack.c.b16 %v456, %v452
    %v533 = vpack.c.b16 %v461, %v457
    %v534 = vpack.c.b16 %v462, %v458
    %v535 = vpack.c.b16 %v463, %v459
    %v536 = vpack.c.b16 %v464, %v460
    %v537 = vpack.c.b16 %v469, %v465
    %v538 = vpack.c.b16 %v470, %v466
    %v539 = vpack.c.b16 %v471, %v467
    %v540 = vpack.c.b16 %v472, %v468
    %v541 = vpack.c.b16 %v477, %v473
    %v542 = vpack.c.b16 %v478, %v474
    %v543 = vpack.c.b16 %v479, %v475
    %v544 = vpack.c.b16 %v480, %v476
    %609 = vmatpush.bf16.msra.mxu0 %v509
    %610 = vmatpush.bf16.msra.mxu0 %v505
    %611 = vmatpush.bf16.msra.mxu0 %v501
    %612 = vmatpush.bf16.msra.mxu0 %v497
    %613 = vmatpush.bf16.msra.mxu0 %v493
    %614 = vmatpush.bf16.msra.mxu0 %v489
    %615 = vmatpush.bf16.msra.mxu0 %v485
    %616 = vmatpush.bf16.msra.mxu0 %v481
    %617 = vmatmul.bf16.gmra.mxu0 %v278
    %v618 = vpop.f32.mrf.mxu0
    %v619 = vadd.f32 %v281, %v618
    %v620 = vpop.f32.mrf.mxu0
    %621 = vdwg.mxu0
    %622 = vmatpush.bf16.msra.mxu0 %v541
    %623 = vmatpush.bf16.msra.mxu0 %v537
    %624 = vmatpush.bf16.msra.mxu0 %v533
    %625 = vmatpush.bf16.msra.mxu0 %v529
    %626 = vmatpush.bf16.msra.mxu0 %v525
    %627 = vmatpush.bf16.msra.mxu0 %v521
    %628 = vmatpush.bf16.msra.mxu0 %v517
    %629 = vmatpush.bf16.msra.mxu0 %v513
    %630 = vmatmul.bf16.gmra.mxu0 %v279
    %v631 = vpop.f32.mrf.mxu0
    %v632 = vadd.f32 %v619, %v631
    %v633 = vpop.f32.mrf.mxu0
    %634 = vdwg.mxu0
    %635 = vmatpush.bf16.msra.mxu0 %v510
    %636 = vmatpush.bf16.msra.mxu0 %v506
    %637 = vmatpush.bf16.msra.mxu0 %v502
    %638 = vmatpush.bf16.msra.mxu0 %v498
    %639 = vmatpush.bf16.msra.mxu0 %v494
    %640 = vmatpush.bf16.msra.mxu0 %v490
    %641 = vmatpush.bf16.msra.mxu0 %v486
    %642 = vmatpush.bf16.msra.mxu0 %v482
    %643 = vmatmul.bf16.gmra.mxu0 %v278
    %v644 = vpop.f32.mrf.mxu0
    %v645 = vadd.f32 %v282, %v644
    %v646 = vpop.f32.mrf.mxu0
    %647 = vdwg.mxu0
    %648 = vmatpush.bf16.msra.mxu0 %v542
    %649 = vmatpush.bf16.msra.mxu0 %v538
    %650 = vmatpush.bf16.msra.mxu0 %v534
    %651 = vmatpush.bf16.msra.mxu0 %v530
    %652 = vmatpush.bf16.msra.mxu0 %v526
    %653 = vmatpush.bf16.msra.mxu0 %v522
    %654 = vmatpush.bf16.msra.mxu0 %v518
    %655 = vmatpush.bf16.msra.mxu0 %v514
    %656 = vmatmul.bf16.gmra.mxu0 %v279
    %v657 = vpop.f32.mrf.mxu0
    %v658 = vadd.f32 %v645, %v657
    %v659 = vpop.f32.mrf.mxu0
    %660 = vdwg.mxu0
    %661 = vmatpush.bf16.msra.mxu0 %v511
    %662 = vmatpush.bf16.msra.mxu0 %v507
    %663 = vmatpush.bf16.msra.mxu0 %v503
    %664 = vmatpush.bf16.msra.mxu0 %v499
    %665 = vmatpush.bf16.msra.mxu0 %v495
    %666 = vmatpush.bf16.msra.mxu0 %v491
    %667 = vmatpush.bf16.msra.mxu0 %v487
    %668 = vmatpush.bf16.msra.mxu0 %v483
    %669 = vmatmul.bf16.gmra.mxu0 %v278
    %v670 = vpop.f32.mrf.mxu0
    %v671 = vadd.f32 %v283, %v670
    %v672 = vpop.f32.mrf.mxu0
    %673 = vdwg.mxu0
    %674 = vmatpush.bf16.msra.mxu0 %v543
    %675 = vmatpush.bf16.msra.mxu0 %v539
    %676 = vmatpush.bf16.msra.mxu0 %v535
    %677 = vmatpush.bf16.msra.mxu0 %v531
    %678 = vmatpush.bf16.msra.mxu0 %v527
    %679 = vmatpush.bf16.msra.mxu0 %v523
    %680 = vmatpush.bf16.msra.mxu0 %v519
    %681 = vmatpush.bf16.msra.mxu0 %v515
    %682 = vmatmul.bf16.gmra.mxu0 %v279
    %v683 = vpop.f32.mrf.mxu0
    %v684 = vadd.f32 %v671, %v683
    %v685 = vpop.f32.mrf.mxu0
    %686 = vdwg.mxu0
    %687 = vmatpush.bf16.msra.mxu0 %v512
    %688 = vmatpush.bf16.msra.mxu0 %v508
    %689 = vmatpush.bf16.msra.mxu0 %v504
    %690 = vmatpush.bf16.msra.mxu0 %v500
    %691 = vmatpush.bf16.msra.mxu0 %v496
    %692 = vmatpush.bf16.msra.mxu0 %v492
    %693 = vmatpush.bf16.msra.mxu0 %v488
    %694 = vmatpush.bf16.msra.mxu0 %v484
    %695 = vmatmul.bf16.gmra.mxu0 %v278
    %v696 = vpop.f32.mrf.mxu0
    %v697 = vadd.f32 %v284, %v696
    %v698 = vpop.f32.mrf.mxu0
    %699 = vdwg.mxu0
    %700 = vmatpush.bf16.msra.mxu0 %v544
    %701 = vmatpush.bf16.msra.mxu0 %v540
    %702 = vmatpush.bf16.msra.mxu0 %v536
    %703 = vmatpush.bf16.msra.mxu0 %v532
    %704 = vmatpush.bf16.msra.mxu0 %v528
    %705 = vmatpush.bf16.msra.mxu0 %v524
    %706 = vmatpush.bf16.msra.mxu0 %v520
    %707 = vmatpush.bf16.msra.mxu0 %v516
    %708 = vmatmul.bf16.gmra.mxu0 %v279
    %v709 = vpop.f32.mrf.mxu0
    %v710 = vadd.f32 %v697, %v709
    %v711 = vpop.f32.mrf.mxu0
    %712 = vdwg.mxu0
    %v713 = vxor.u32 %v632, 2147483648
    %v714 = vmul.f32 %v713, 1.442695
    %v715 = vpow.pop %v714
    %v716 = vadd.f32 %v715, 1.0
    %v717 = vrcp.pop %v716
    %v718 = vmul.f32 %v716, %v717
    %v719 = vsub.f32 1.0, %v718
    %v720 = vmul.f32 %v717, %v719
    %v721 = vadd.f32 %v717, %v720
    %vm722 = vweird.f32 %v716
    %vm723 = vweird.f32 %v717
    %vm724 = vmor %vm722, %vm723
    %v725 = vsel %vm724, %v717, %v721
    %v726 = vand.u32 2147483647, %v716
    %vm727 = vcmp.eq.f32.partialorder %v726, 8.507059e+37
    %v728 = vand.u32 %v716, 2147483648
    %v729 = vor.u32 1.1754944e-38, %v728
    %v730 = vsel %vm727, %v729, %v725
    %v731 = vmul.f32 1.0, %v730
    %v732 = vxor.u32 %v658, 2147483648
    %v733 = vmul.f32 %v732, 1.442695
    %v734 = vpow.pop %v733
    %v735 = vadd.f32 %v734, 1.0
    %v736 = vrcp.pop %v735
    %v737 = vmul.f32 %v735, %v736
    %v738 = vsub.f32 1.0, %v737
    %v739 = vmul.f32 %v736, %v738
    %v740 = vadd.f32 %v736, %v739
    %vm741 = vweird.f32 %v735
    %vm742 = vweird.f32 %v736
    %vm743 = vmor %vm741, %vm742
    %v744 = vsel %vm743, %v736, %v740
    %v745 = vand.u32 2147483647, %v735
    %vm746 = vcmp.eq.f32.partialorder %v745, 8.507059e+37
    %v747 = vand.u32 %v735, 2147483648
    %v748 = vor.u32 1.1754944e-38, %v747
    %v749 = vsel %vm746, %v748, %v744
    %v750 = vmul.f32 1.0, %v749
    %v751 = vtanh.pop %v684
    %v752 = vxor.u32 %v710, 2147483648
    %v753 = vmul.f32 %v752, 1.442695
    %v754 = vpow.pop %v753
    %v755 = vadd.f32 %v754, 1.0
    %v756 = vrcp.pop %v755
    %v757 = vmul.f32 %v755, %v756
    %v758 = vsub.f32 1.0, %v757
    %v759 = vmul.f32 %v756, %v758
    %v760 = vadd.f32 %v756, %v759
    %vm761 = vweird.f32 %v755
    %vm762 = vweird.f32 %v756
    %vm763 = vmor %vm761, %vm762
    %v764 = vsel %vm763, %v756, %v760
    %v765 = vand.u32 2147483647, %v755
    %vm766 = vcmp.eq.f32.partialorder %v765, 8.507059e+37
    %v767 = vand.u32 %v755, 2147483648
    %v768 = vor.u32 1.1754944e-38, %v767
    %v769 = vsel %vm766, %v768, %v764
    %v770 = vmul.f32 1.0, %v769
    %v771 = vmul.f32 %v750, %v277
    %v772 = vmul.f32 %v731, %v751
    %v773 = vadd.f32 %v771, %v772
    %v774 = vtanh.pop %v773
    %v775 = vmul.f32 %v770, %v774
    %v776 = vpack.c.bf16 %v775, %v775
    %v778 = vperm.slane %v144, 0
    %v796 = vunpack.c.l.b16 %v128
    %v797 = vunpack.c.l.b16 %v129
    %v798 = vunpack.c.l.b16 %v130
    %v799 = vunpack.c.l.b16 %v131
    %v800 = vunpack.c.l.b16 %v132
    %v801 = vunpack.c.l.b16 %v133
    %v802 = vunpack.c.l.b16 %v134
    %v803 = vunpack.c.l.b16 %v135
    %v804 = vunpack.c.l.b16 %v136
    %v805 = vunpack.c.l.b16 %v137
    %v806 = vunpack.c.l.b16 %v138
    %v807 = vunpack.c.l.b16 %v139
    %v808 = vunpack.c.l.b16 %v140
    %v809 = vunpack.c.l.b16 %v141
    %v810 = vunpack.c.l.b16 %v142
    %v811 = vunpack.c.l.b16 %v143
    %v812 = vpack.c.b16 %v797, %v796
    %v813 = vpack.c.b16 %v799, %v798
    %v814 = vpack.c.b16 %v801, %v800
    %v815 = vpack.c.b16 %v803, %v802
    %v816 = vpack.c.b16 %v805, %v804
    %v817 = vpack.c.b16 %v807, %v806
    %v818 = vpack.c.b16 %v809, %v808
    %v819 = vpack.c.b16 %v811, %v810
    %828 = vmatpush.bf16.msra.mxu0 %v819
    %829 = vmatpush.bf16.msra.mxu0 %v818
    %830 = vmatpush.bf16.msra.mxu0 %v817
    %831 = vmatpush.bf16.msra.mxu0 %v816
    %832 = vmatpush.bf16.msra.mxu0 %v815
    %833 = vmatpush.bf16.msra.mxu0 %v814
    %834 = vmatpush.bf16.msra.mxu0 %v813
    %835 = vmatpush.bf16.msra.mxu0 %v812
    %836 = vmatmul.bf16.gmra.mxu0 %v776
    %v837 = vpop.f32.mrf.mxu0
    %v838 = vadd.f32 %v778, %v837
    %v839 = vpop.f32.mrf.mxu0
    %840 = vdwg.mxu0
    %v842 = vrot.slane %v838, 1
    %v843 = vperm.slane %v838, 0
    %v844 = vperm.slane %v842, 0
    %v847 = vadd.f32 %v843, %v263
    %v848 = vadd.f32 %v844, %v265
    %v849 = vtanh.pop %v847
    %v850 = vtanh.pop %v848
    %v852 = vperm.slane %v195, 0
    %v854 = vmul.f32 %v849, %v852
    %v855 = vmul.f32 %v850, %v852
    %856 = vadd.xlane.f32.xlu0 %v854
    %v857 = vpop.xlane.xlu0 %856
    %858 = vadd.xlane.f32.xlu0 %v855
    %v859 = vpop.xlane.xlu0 %858
    %vm860 = vcmp.eq.f32.partialorder 1.0, 0.0
    %v861 = vsel %vm860, -1e+30, %v857
    %v862 = vsel %vm860, -1e+30, %v859
    %v865 = vperm.slane %v861, %v270
    %v866 = vperm.slane %v862, %v270
    %vm867 = vcmask 1041409
    %v868 = vsel %vm867, %v866, %v865
    %v870 = vsel %vm271, %v868, -inf
    %871 = vmax.xlane.f32.xlu0 %v870
    %v872 = vpop.xlane.xlu0 %871
    %v874 = vperm.slane %v872, 0
    %v875 = vperm.slane %v872, 1
    %v878 = vsub.f32 %v861, %v874
    %v879 = vsub.f32 %v862, %v875
    %v880 = vmul.f32 %v878, 1.442695
    %v881 = vpow.pop %v880
    %v882 = vmul.f32 %v879, 1.442695
    %v883 = vpow.pop %v882
    %886 = vset.pattern.permute.xlu0 0
    %887 = vperm.xlu0 %886, %v881
    %v888 = vpop.permute.xlu0 %887
    %889 = vset.pattern.permute.xlu0 0
    %890 = vperm.xlu0 %889, %v883
    %v891 = vpop.permute.xlu0 %890
    %v892 = vperm.slane %v888, %v270
    %v893 = vperm.slane %v891, %v270
    %v894 = vsel %vm867, %v893, %v892
    %v896 = vsel %vm271, %v894, 0.0
    %897 = vadd.xlane.f32.xlu0 %v896
    %v898 = vpop.xlane.xlu0 %897
    %v899 = vrcp.pop %v898
    %v901 = vperm.slane %v899, 0
    %v902 = vperm.slane %v899, 1
    %v905 = vmul.f32 %v881, %v901
    %v906 = vmul.f32 %v883, %v902
    %v907 = vpack.c.bf16 %v905, %v905
    %v908 = vpack.c.bf16 %v906, %v906
    %v910 = vunpack.c.l.b16 %v907
    %v911 = vpack.c.b16 %v910, %v910
    %v912 = vunpack.c.l.b16 %v911
    %913 = vset.pattern.permute.xlu0 0
    %914 = vperm.xlu0 %913, %v912
    %v915 = vpop.permute.xlu0 %914
    %v916 = vperm.slane %v915, %v270
    %v917 = vpack.c.b16 %v916, %v916
    %vm918 = vcmask 64512
    %v920 = vsel %vm918, %v917, 0
    %vm922 = vcmask 1043456
    %v924 = vsel %vm922, %v267, 0
    %926 = vmatpush.bf16.msra.mxu0 0
    %927 = vmatpush.bf16.msra.mxu0 0
    %928 = vmatpush.bf16.msra.mxu0 0
    %929 = vmatpush.bf16.msra.mxu0 0
    %930 = vmatpush.bf16.msra.mxu0 0
    %931 = vmatpush.bf16.msra.mxu0 0
    %932 = vmatpush.bf16.msra.mxu0 0
    %933 = vmatpush.bf16.msra.mxu0 %v924
    %934 = vmatmul.bf16.gmra.mxu0 %v920
    %v935 = vpop.f32.mrf.mxu0
    %v936 = vadd.f32 0.0, %v935
    %v937 = vpop.f32.mrf.mxu0
    %938 = vdwg.mxu0
    %v940 = vunpack.c.l.b16 %v908
    %v941 = vpack.c.b16 %v940, %v940
    %v942 = vunpack.c.l.b16 %v941
    %943 = vset.pattern.permute.xlu0 0
    %944 = vperm.xlu0 %943, %v942
    %v945 = vpop.permute.xlu0 %944
    %v946 = vperm.slane %v945, %v270
    %v947 = vpack.c.b16 %v946, %v946
    %v949 = vsel %vm918, %v947, 0
    %v952 = vsel %vm922, %v268, 0
    %954 = vmatpush.bf16.msra.mxu0 0
    %955 = vmatpush.bf16.msra.mxu0 0
    %956 = vmatpush.bf16.msra.mxu0 0
    %957 = vmatpush.bf16.msra.mxu0 0
    %958 = vmatpush.bf16.msra.mxu0 0
    %959 = vmatpush.bf16.msra.mxu0 0
    %960 = vmatpush.bf16.msra.mxu0 0
    %961 = vmatpush.bf16.msra.mxu0 %v952
    %962 = vmatmul.bf16.gmra.mxu0 %v949
    %v963 = vpop.f32.mrf.mxu0
    %v964 = vadd.f32 0.0, %v963
    %v965 = vpop.f32.mrf.mxu0
    %966 = vdwg.mxu0
    %v969 = vrot.slane %v964, 7
    %v970 = vsel %vm867, %v969, %v936
    %v972 = vpack.c.bf16 %v970, %v970
    %v974 = vperm.slane %v194, 0
    %v1008 = vunpack.c.l.b16 %v162
    %v1009 = vunpack.c.l.b16 %v163
    %v1010 = vunpack.c.l.b16 %v164
    %v1011 = vunpack.c.l.b16 %v165
    %v1012 = vunpack.c.l.b16 %v166
    %v1013 = vunpack.c.l.b16 %v167
    %v1014 = vunpack.c.l.b16 %v168
    %v1015 = vunpack.c.l.b16 %v169
    %v1016 = vunpack.c.l.b16 %v170
    %v1017 = vunpack.c.l.b16 %v171
    %v1018 = vunpack.c.l.b16 %v172
    %v1019 = vunpack.c.l.b16 %v173
    %v1020 = vunpack.c.l.b16 %v174
    %v1021 = vunpack.c.l.b16 %v175
    %v1022 = vunpack.c.l.b16 %v176
    %v1023 = vunpack.c.l.b16 %v177
    %v1024 = vunpack.c.l.b16 %v178
    %v1025 = vunpack.c.l.b16 %v179
    %v1026 = vunpack.c.l.b16 %v180
    %v1027 = vunpack.c.l.b16 %v181
    %v1028 = vunpack.c.l.b16 %v182
    %v1029 = vunpack.c.l.b16 %v183
    %v1030 = vunpack.c.l.b16 %v184
    %v1031 = vunpack.c.l.b16 %v185
    %v1032 = vunpack.c.l.b16 %v186
    %v1033 = vunpack.c.l.b16 %v187
    %v1034 = vunpack.c.l.b16 %v188
    %v1035 = vunpack.c.l.b16 %v189
    %v1036 = vunpack.c.l.b16 %v190
    %v1037 = vunpack.c.l.b16 %v191
    %v1038 = vunpack.c.l.b16 %v192
    %v1039 = vunpack.c.l.b16 %v193
    %v1040 = vpack.c.b16 %v1009, %v1008
    %v1041 = vpack.c.b16 %v1011, %v1010
    %v1042 = vpack.c.b16 %v1013, %v1012
    %v1043 = vpack.c.b16 %v1015, %v1014
    %v1044 = vpack.c.b16 %v1017, %v1016
    %v1045 = vpack.c.b16 %v1019, %v1018
    %v1046 = vpack.c.b16 %v1021, %v1020
    %v1047 = vpack.c.b16 %v1023, %v1022
    %v1048 = vpack.c.b16 %v1025, %v1024
    %v1049 = vpack.c.b16 %v1027, %v1026
    %v1050 = vpack.c.b16 %v1029, %v1028
    %v1051 = vpack.c.b16 %v1031, %v1030
    %v1052 = vpack.c.b16 %v1033, %v1032
    %v1053 = vpack.c.b16 %v1035, %v1034
    %v1054 = vpack.c.b16 %v1037, %v1036
    %v1055 = vpack.c.b16 %v1039, %v1038
    %1072 = vmatpush.bf16.msra.mxu0 %v1047
    %1073 = vmatpush.bf16.msra.mxu0 %v1046
    %1074 = vmatpush.bf16.msra.mxu0 %v1045
    %1075 = vmatpush.bf16.msra.mxu0 %v1044
    %1076 = vmatpush.bf16.msra.mxu0 %v1043
    %1077 = vmatpush.bf16.msra.mxu0 %v1042
    %1078 = vmatpush.bf16.msra.mxu0 %v1041
    %1079 = vmatpush.bf16.msra.mxu0 %v1040
    %1080 = vmatmul.bf16.gmra.mxu0 %v972
    %v1081 = vpop.f32.mrf.mxu0
    %v1082 = vadd.f32 %v974, %v1081
    %v1083 = vpop.f32.mrf.mxu0
    %1084 = vdwg.mxu0
    %1085 = vmatpush.bf16.msra.mxu0 %v1055
    %1086 = vmatpush.bf16.msra.mxu0 %v1054
    %1087 = vmatpush.bf16.msra.mxu0 %v1053
    %1088 = vmatpush.bf16.msra.mxu0 %v1052
    %1089 = vmatpush.bf16.msra.mxu0 %v1051
    %1090 = vmatpush.bf16.msra.mxu0 %v1050
    %1091 = vmatpush.bf16.msra.mxu0 %v1049
    %1092 = vmatpush.bf16.msra.mxu0 %v1048
    %1093 = vmatmul.bf16.gmra.mxu0 %v776
    %v1094 = vpop.f32.mrf.mxu0
    %v1095 = vadd.f32 %v1082, %v1094
    %v1096 = vpop.f32.mrf.mxu0
    %1097 = vdwg.mxu0
    %v1098 = vtanh.pop %v1095
    %v1099 = vadd.f32 %v905, 1e-08
    %v1100 = vadd.f32 %v906, 1e-08
    %v1102 = vperm.slane %v62, 0
    %v1103 = vlaneseq
    %v1104 = vshrl.u32 %v1103, 7
    %1106 = vset.pattern.permute.xlu0 %v1104
    %1107 = vperm.xlu0 %1106, %v1102
    %v1108 = vpop.permute.xlu0 %1107
    %v1109 = vperm.slane %v62, 1
    %v1110 = vlaneseq
    %v1111 = vshrl.u32 %v1110, 7
    %1113 = vset.pattern.permute.xlu0 %v1111
    %1114 = vperm.xlu0 %1113, %v1109
    %v1115 = vpop.permute.xlu0 %1114
    %v1118 = vmul.f32 %v1099, %v1108
    %v1119 = vmul.f32 %v1100, %v1115
    %1122 = vset.pattern.permute.xlu0 0
    %1123 = vperm.xlu0 %1122, %v1118
    %v1124 = vpop.permute.xlu0 %1123
    %1125 = vset.pattern.permute.xlu0 0
    %1126 = vperm.xlu0 %1125, %v1119
    %v1127 = vpop.permute.xlu0 %1126
    %v1128 = vperm.slane %v1124, %v270
    %v1129 = vperm.slane %v1127, %v270
    %v1130 = vsel %vm867, %v1129, %v1128
    %v1132 = vsel %vm271, %v1130, 0.0
    %1133 = vadd.xlane.f32.xlu0 %v1132
    %v1134 = vpop.xlane.xlu0 %1133
    %v1135 = vrcp.pop %v1134
    %v1137 = vperm.slane %v1135, 0
    %v1138 = vperm.slane %v1135, 1
    %v1141 = vmul.f32 %v1118, %v1137
    %v1142 = vmul.f32 %v1119, %v1138
    %vm1143 = vcmp.ge.f32.partialorder %v274, 0.0
    %v1144 = vsel %vm1143, 1, 0
    %v1145 = vcvt.s32.f32 %v1144
    %v1147 = vperm.slane %v1145, 0
    %v1148 = vperm.slane %v1145, 1
    %v1151 = vmul.f32 %v1141, %v1147
    %v1152 = vmul.f32 %v1142, %v1148
    %1155 = vset.pattern.permute.xlu0 0
    %1156 = vperm.xlu0 %1155, %v1151
    %v1157 = vpop.permute.xlu0 %1156
    %1158 = vset.pattern.permute.xlu0 0
    %1159 = vperm.xlu0 %1158, %v1152
    %v1160 = vpop.permute.xlu0 %1159
    %v1161 = vperm.slane %v1157, %v270
    %v1162 = vperm.slane %v1160, %v270
    %v1163 = vsel %vm867, %v1162, %v1161
    %v1165 = vsel %vm271, %v1163, -inf
    %1166 = vmax.xlane.f32.xlu0 %v1165
    %v1167 = vpop.xlane.xlu0 %1166
    %v1169 = vperm.slane %v1167, 0
    %v1170 = vperm.slane %v1167, 1
    %vm1173 = vcmp.eq.f32.partialorder %v1151, %v1169
    %vm1174 = vcmp.eq.f32.partialorder %v1152, %v1170
    %v1175 = vlaneseq
    %v1176 = vshrl.u32 %v1175, 7
    %1178 = vset.pattern.permute.xlu0 %v1176
    %1179 = vperm.xlu0 %1178, %v270
    %v1180 = vpop.permute.xlu0 %1179
    %v1181 = vsel %vm1173, %v1180, 8
    %v1182 = vsel %vm1174, %v1180, 8
    %1183 = vset.pattern.permute.xlu0 0
    %1184 = vperm.xlu0 %1183, %v1181
    %v1185 = vpop.permute.xlu0 %1184
    %1186 = vset.pattern.permute.xlu0 0
    %1187 = vperm.xlu0 %1186, %v1182
    %v1188 = vpop.permute.xlu0 %1187
    %v1189 = vperm.slane %v1185, %v270
    %v1190 = vperm.slane %v1188, %v270
    %v1191 = vsel %vm867, %v1190, %v1189
    %v1192 = vsel %vm271, %v1191, 2147483647
    %v1193 = vand.u32 %v1192, 65535
    %v1194 = vshra.s32 %v1192, 16
    %v1195 = vcvt.s32.f32 %v1193
    %v1196 = vcvt.s32.f32 %v1194
    %1197 = vmin.xlane.f32.xlu0 %v1196
    %v1198 = vpop.xlane.xlu0 %1197
    %vm1199 = vcmp.eq.f32.partialorder %v1196, %v1198
    %v1200 = vsel %vm1199, %v1195, inf
    %1201 = vmin.xlane.f32.xlu0 %v1200
    %v1202 = vpop.xlane.xlu0 %1201
    %v1203 = vcvt.f32.s32 %v1202
    %v1204 = vcvt.f32.s32 %v1198
    %v1205 = vshll.u32 %v1204, 16
    %v1206 = vadd.s32 %v1205, %v1203
    %vm1207 = vcmp.eq.s32.totalorder %v270, %v1206
    %v1208 = vsel %vm1207, 1, 0
    %v1209 = vcvt.s32.f32 %v1208
    %v1210 = vadd.f32 %v1151, 1e-08
    %v1211 = vadd.f32 %v1152, 1e-08
    %v1213 = vperm.slane %v1209, 0
    %v1214 = vlaneseq
    %v1215 = vshrl.u32 %v1214, 7
    %1217 = vset.pattern.permute.xlu0 %v1215
    %1218 = vperm.xlu0 %1217, %v1213
    %v1219 = vpop.permute.xlu0 %1218
    %v1220 = vperm.slane %v1209, 1
    %v1221 = vlaneseq
    %v1222 = vshrl.u32 %v1221, 7
    %1224 = vset.pattern.permute.xlu0 %v1222
    %1225 = vperm.xlu0 %1224, %v1220
    %v1226 = vpop.permute.xlu0 %1225
    %v1229 = vmul.f32 %v1210, %v1219
    %v1230 = vmul.f32 %v1211, %v1226
    %1233 = vset.pattern.permute.xlu0 0
    %1234 = vperm.xlu0 %1233, %v1229
    %v1235 = vpop.permute.xlu0 %1234
    %1236 = vset.pattern.permute.xlu0 0
    %1237 = vperm.xlu0 %1236, %v1230
    %v1238 = vpop.permute.xlu0 %1237
    %v1239 = vperm.slane %v1235, %v270
    %v1240 = vperm.slane %v1238, %v270
    %v1241 = vsel %vm867, %v1240, %v1239
    %v1243 = vsel %vm271, %v1241, 0.0
    %1244 = vadd.xlane.f32.xlu0 %v1243
    %v1245 = vpop.xlane.xlu0 %1244
    %v1246 = vlog2.pop %v1245
    %v1247 = vmul.f32 %v1246, 0.6931472
    %1250 = vset.pattern.permute.xlu0 0
    %1251 = vperm.xlu0 %1250, %v1210
    %v1252 = vpop.permute.xlu0 %1251
    %1253 = vset.pattern.permute.xlu0 0
    %1254 = vperm.xlu0 %1253, %v1211
    %v1255 = vpop.permute.xlu0 %1254
    %v1256 = vperm.slane %v1252, %v270
    %v1257 = vperm.slane %v1255, %v270
    %v1258 = vsel %vm867, %v1257, %v1256
    %v1260 = vsel %vm271, %v1258, 0.0
    %1261 = vadd.xlane.f32.xlu0 %v1260
    %v1262 = vpop.xlane.xlu0 %1261
    %v1263 = vlog2.pop %v1262
    %v1264 = vmul.f32 %v1263, 0.6931472
    %v1265 = vsub.f32 %v1247, %v1264
    %vm1266 = vcmask 1024
    %1267 = vst.msk [vmem:[#allocation2] sm:$0x3] %vm1266, %v1265
    %1268 = vst.msk [vmem:[#allocation4] sm:$0x3] %vm1266, %v1206
    %v1269 = vsub.f32 1.0, %v1209
    %v1270 = vrot.slane %v1209, 1
    %v1272 = vpack.c.bf16 %v1209, %v1209
    %v1273 = vpack.c.bf16 %v1270, %v1270
    %v1275 = vsel %vm918, %v1272, 0
    %v1278 = vsel %vm922, %v58, 0
    %1280 = vmatpush.bf16.msra.mxu0 0
    %1281 = vmatpush.bf16.msra.mxu0 0
    %1282 = vmatpush.bf16.msra.mxu0 0
    %1283 = vmatpush.bf16.msra.mxu0 0
    %1284 = vmatpush.bf16.msra.mxu0 0
    %1285 = vmatpush.bf16.msra.mxu0 0
    %1286 = vmatpush.bf16.msra.mxu0 0
    %1287 = vmatpush.bf16.msra.mxu0 %v1278
    %1288 = vmatmul.bf16.gmra.mxu0 %v1275
    %v1289 = vpop.f32.mrf.mxu0
    %v1290 = vadd.f32 0.0, %v1289
    %v1291 = vpop.f32.mrf.mxu0
    %1292 = vdwg.mxu0
    %v1294 = vsel %vm918, %v1273, 0
    %v1297 = vsel %vm922, %v59, 0
    %1299 = vmatpush.bf16.msra.mxu0 0
    %1300 = vmatpush.bf16.msra.mxu0 0
    %1301 = vmatpush.bf16.msra.mxu0 0
    %1302 = vmatpush.bf16.msra.mxu0 0
    %1303 = vmatpush.bf16.msra.mxu0 0
    %1304 = vmatpush.bf16.msra.mxu0 0
    %1305 = vmatpush.bf16.msra.mxu0 0
    %1306 = vmatpush.bf16.msra.mxu0 %v1297
    %1307 = vmatmul.bf16.gmra.mxu0 %v1294
    %v1308 = vpop.f32.mrf.mxu0
    %v1309 = vadd.f32 0.0, %v1308
    %v1310 = vpop.f32.mrf.mxu0
    %1311 = vdwg.mxu0
    %v1314 = vrot.slane %v1309, 7
    %v1315 = vsel %vm867, %v1314, %v1290
    %v1317 = vpack.c.bf16 %v1315, %v1315
    %v1318 = vpack.c.bf16 %v1098, %v1098
    %1319 = vmatpush.bf16.msra.mxu0 %v509
    %1320 = vmatpush.bf16.msra.mxu0 %v505
    %1321 = vmatpush.bf16.msra.mxu0 %v501
    %1322 = vmatpush.bf16.msra.mxu0 %v497
    %1323 = vmatpush.bf16.msra.mxu0 %v493
    %1324 = vmatpush.bf16.msra.mxu0 %v489
    %1325 = vmatpush.bf16.msra.mxu0 %v485
    %1326 = vmatpush.bf16.msra.mxu0 %v481
    %1327 = vmatmul.bf16.gmra.mxu0 %v1317
    %v1328 = vpop.f32.mrf.mxu0
    %v1329 = vadd.f32 %v281, %v1328
    %v1330 = vpop.f32.mrf.mxu0
    %1331 = vdwg.mxu0
    %1332 = vmatpush.bf16.msra.mxu0 %v541
    %1333 = vmatpush.bf16.msra.mxu0 %v537
    %1334 = vmatpush.bf16.msra.mxu0 %v533
    %1335 = vmatpush.bf16.msra.mxu0 %v529
    %1336 = vmatpush.bf16.msra.mxu0 %v525
    %1337 = vmatpush.bf16.msra.mxu0 %v521
    %1338 = vmatpush.bf16.msra.mxu0 %v517
    %1339 = vmatpush.bf16.msra.mxu0 %v513
    %1340 = vmatmul.bf16.gmra.mxu0 %v1318
    %v1341 = vpop.f32.mrf.mxu0
    %v1342 = vadd.f32 %v1329, %v1341
    %v1343 = vpop.f32.mrf.mxu0
    %1344 = vdwg.mxu0
    %1345 = vmatpush.bf16.msra.mxu0 %v510
    %1346 = vmatpush.bf16.msra.mxu0 %v506
    %1347 = vmatpush.bf16.msra.mxu0 %v502
    %1348 = vmatpush.bf16.msra.mxu0 %v498
    %1349 = vmatpush.bf16.msra.mxu0 %v494
    %1350 = vmatpush.bf16.msra.mxu0 %v490
    %1351 = vmatpush.bf16.msra.mxu0 %v486
    %1352 = vmatpush.bf16.msra.mxu0 %v482
    %1353 = vmatmul.bf16.gmra.mxu0 %v1317
    %v1354 = vpop.f32.mrf.mxu0
    %v1355 = vadd.f32 %v282, %v1354
    %v1356 = vpop.f32.mrf.mxu0
    %1357 = vdwg.mxu0
    %1358 = vmatpush.bf16.msra.mxu0 %v542
    %1359 = vmatpush.bf16.msra.mxu0 %v538
    %1360 = vmatpush.bf16.msra.mxu0 %v534
    %1361 = vmatpush.bf16.msra.mxu0 %v530
    %1362 = vmatpush.bf16.msra.mxu0 %v526
    %1363 = vmatpush.bf16.msra.mxu0 %v522
    %1364 = vmatpush.bf16.msra.mxu0 %v518
    %1365 = vmatpush.bf16.msra.mxu0 %v514
    %1366 = vmatmul.bf16.gmra.mxu0 %v1318
    %v1367 = vpop.f32.mrf.mxu0
    %v1368 = vadd.f32 %v1355, %v1367
    %v1369 = vpop.f32.mrf.mxu0
    %1370 = vdwg.mxu0
    %1371 = vmatpush.bf16.msra.mxu0 %v511
    %1372 = vmatpush.bf16.msra.mxu0 %v507
    %1373 = vmatpush.bf16.msra.mxu0 %v503
    %1374 = vmatpush.bf16.msra.mxu0 %v499
    %1375 = vmatpush.bf16.msra.mxu0 %v495
    %1376 = vmatpush.bf16.msra.mxu0 %v491
    %1377 = vmatpush.bf16.msra.mxu0 %v487
    %1378 = vmatpush.bf16.msra.mxu0 %v483
    %1379 = vmatmul.bf16.gmra.mxu0 %v1317
    %v1380 = vpop.f32.mrf.mxu0
    %v1381 = vadd.f32 %v283, %v1380
    %v1382 = vpop.f32.mrf.mxu0
    %1383 = vdwg.mxu0
    %1384 = vmatpush.bf16.msra.mxu0 %v543
    %1385 = vmatpush.bf16.msra.mxu0 %v539
    %1386 = vmatpush.bf16.msra.mxu0 %v535
    %1387 = vmatpush.bf16.msra.mxu0 %v531
    %1388 = vmatpush.bf16.msra.mxu0 %v527
    %1389 = vmatpush.bf16.msra.mxu0 %v523
    %1390 = vmatpush.bf16.msra.mxu0 %v519
    %1391 = vmatpush.bf16.msra.mxu0 %v515
    %1392 = vmatmul.bf16.gmra.mxu0 %v1318
    %v1393 = vpop.f32.mrf.mxu0
    %v1394 = vadd.f32 %v1381, %v1393
    %v1395 = vpop.f32.mrf.mxu0
    %1396 = vdwg.mxu0
    %1397 = vmatpush.bf16.msra.mxu0 %v512
    %1398 = vmatpush.bf16.msra.mxu0 %v508
    %1399 = vmatpush.bf16.msra.mxu0 %v504
    %1400 = vmatpush.bf16.msra.mxu0 %v500
    %1401 = vmatpush.bf16.msra.mxu0 %v496
    %1402 = vmatpush.bf16.msra.mxu0 %v492
    %1403 = vmatpush.bf16.msra.mxu0 %v488
    %1404 = vmatpush.bf16.msra.mxu0 %v484
    %1405 = vmatmul.bf16.gmra.mxu0 %v1317
    %v1406 = vpop.f32.mrf.mxu0
    %v1407 = vadd.f32 %v284, %v1406
    %v1408 = vpop.f32.mrf.mxu0
    %1409 = vdwg.mxu0
    %1410 = vmatpush.bf16.msra.mxu0 %v544
    %1411 = vmatpush.bf16.msra.mxu0 %v540
    %1412 = vmatpush.bf16.msra.mxu0 %v536
    %1413 = vmatpush.bf16.msra.mxu0 %v532
    %1414 = vmatpush.bf16.msra.mxu0 %v528
    %1415 = vmatpush.bf16.msra.mxu0 %v524
    %1416 = vmatpush.bf16.msra.mxu0 %v520
    %1417 = vmatpush.bf16.msra.mxu0 %v516
    %1418 = vmatmul.bf16.gmra.mxu0 %v1318
    %v1419 = vpop.f32.mrf.mxu0
    %v1420 = vadd.f32 %v1407, %v1419
    %v1421 = vpop.f32.mrf.mxu0
    %1422 = vdwg.mxu0
    %v1423 = vxor.u32 %v1342, 2147483648
    %v1424 = vmul.f32 %v1423, 1.442695
    %v1425 = vpow.pop %v1424
    %v1426 = vadd.f32 %v1425, 1.0
    %v1427 = vrcp.pop %v1426
    %v1428 = vmul.f32 %v1426, %v1427
    %v1429 = vsub.f32 1.0, %v1428
    %v1430 = vmul.f32 %v1427, %v1429
    %v1431 = vadd.f32 %v1427, %v1430
    %vm1432 = vweird.f32 %v1426
    %vm1433 = vweird.f32 %v1427
    %vm1434 = vmor %vm1432, %vm1433
    %v1435 = vsel %vm1434, %v1427, %v1431
    %v1436 = vand.u32 2147483647, %v1426
    %vm1437 = vcmp.eq.f32.partialorder %v1436, 8.507059e+37
    %v1438 = vand.u32 %v1426, 2147483648
    %v1439 = vor.u32 1.1754944e-38, %v1438
    %v1440 = vsel %vm1437, %v1439, %v1435
    %v1441 = vmul.f32 1.0, %v1440
    %v1442 = vxor.u32 %v1368, 2147483648
    %v1443 = vmul.f32 %v1442, 1.442695
    %v1444 = vpow.pop %v1443
    %v1445 = vadd.f32 %v1444, 1.0
    %v1446 = vrcp.pop %v1445
    %v1447 = vmul.f32 %v1445, %v1446
    %v1448 = vsub.f32 1.0, %v1447
    %v1449 = vmul.f32 %v1446, %v1448
    %v1450 = vadd.f32 %v1446, %v1449
    %vm1451 = vweird.f32 %v1445
    %vm1452 = vweird.f32 %v1446
    %vm1453 = vmor %vm1451, %vm1452
    %v1454 = vsel %vm1453, %v1446, %v1450
    %v1455 = vand.u32 2147483647, %v1445
    %vm1456 = vcmp.eq.f32.partialorder %v1455, 8.507059e+37
    %v1457 = vand.u32 %v1445, 2147483648
    %v1458 = vor.u32 1.1754944e-38, %v1457
    %v1459 = vsel %vm1456, %v1458, %v1454
    %v1460 = vmul.f32 1.0, %v1459
    %v1461 = vtanh.pop %v1394
    %v1462 = vxor.u32 %v1420, 2147483648
    %v1463 = vmul.f32 %v1462, 1.442695
    %v1464 = vpow.pop %v1463
    %v1465 = vadd.f32 %v1464, 1.0
    %v1466 = vrcp.pop %v1465
    %v1467 = vmul.f32 %v1465, %v1466
    %v1468 = vsub.f32 1.0, %v1467
    %v1469 = vmul.f32 %v1466, %v1468
    %v1470 = vadd.f32 %v1466, %v1469
    %vm1471 = vweird.f32 %v1465
    %vm1472 = vweird.f32 %v1466
    %vm1473 = vmor %vm1471, %vm1472
    %v1474 = vsel %vm1473, %v1466, %v1470
    %v1475 = vand.u32 2147483647, %v1465
    %vm1476 = vcmp.eq.f32.partialorder %v1475, 8.507059e+37
    %v1477 = vand.u32 %v1465, 2147483648
    %v1478 = vor.u32 1.1754944e-38, %v1477
    %v1479 = vsel %vm1476, %v1478, %v1474
    %v1480 = vmul.f32 1.0, %v1479
    %v1481 = vmul.f32 %v1460, %v773
    %v1482 = vmul.f32 %v1441, %v1461
    %v1483 = vadd.f32 %v1481, %v1482
    %v1484 = vtanh.pop %v1483
    %v1485 = vmul.f32 %v1480, %v1484
    %v1486 = vpack.c.bf16 %v1485, %v1485
    %1487 = vmatpush.bf16.msra.mxu0 %v819
    %1488 = vmatpush.bf16.msra.mxu0 %v818
    %1489 = vmatpush.bf16.msra.mxu0 %v817
    %1490 = vmatpush.bf16.msra.mxu0 %v816
    %1491 = vmatpush.bf16.msra.mxu0 %v815
    %1492 = vmatpush.bf16.msra.mxu0 %v814
    %1493 = vmatpush.bf16.msra.mxu0 %v813
    %1494 = vmatpush.bf16.msra.mxu0 %v812
    %1495 = vmatmul.bf16.gmra.mxu0 %v1486
    %v1496 = vpop.f32.mrf.mxu0
    %v1497 = vadd.f32 %v778, %v1496
    %v1498 = vpop.f32.mrf.mxu0
    %1499 = vdwg.mxu0
    %v1501 = vrot.slane %v1497, 1
    %v1502 = vperm.slane %v1497, 0
    %v1503 = vperm.slane %v1501, 0
    %v1506 = vadd.f32 %v1502, %v263
    %v1507 = vadd.f32 %v1503, %v265
    %v1508 = vtanh.pop %v1506
    %v1509 = vtanh.pop %v1507
    %v1510 = vmul.f32 %v1508, %v852
    %v1511 = vmul.f32 %v1509, %v852
    %1512 = vadd.xlane.f32.xlu0 %v1510
    %v1513 = vpop.xlane.xlu0 %1512
    %1514 = vadd.xlane.f32.xlu0 %v1511
    %v1515 = vpop.xlane.xlu0 %1514
    %vm1516 = vcmp.eq.f32.partialorder %v1269, 0.0
    %v1519 = vperm.slane %v1513, %v270
    %v1520 = vperm.slane %v1515, %v270
    %v1521 = vsel %vm867, %v1520, %v1519
    %v1523 = vsel %vm1516, -1e+30, %v1521
    %v1524 = vsel %vm271, %v1523, -inf
    %1525 = vmax.xlane.f32.xlu0 %v1524
    %v1526 = vpop.xlane.xlu0 %1525
    %v1527 = vsub.f32 %v1523, %v1526
    %v1528 = vmul.f32 %v1527, 1.442695
    %v1529 = vpow.pop %v1528
    %v1530 = vsel %vm271, %v1529, 0.0
    %1531 = vadd.xlane.f32.xlu0 %v1530
    %v1532 = vpop.xlane.xlu0 %1531
    %v1533 = vrcp.pop %v1532
    %v1534 = vmul.f32 %v1529, %v1533
    %v1536 = vrot.slane %v1534, 1
    %v1538 = vpack.c.bf16 %v1534, %v1534
    %v1539 = vpack.c.bf16 %v1536, %v1536
    %v1541 = vsel %vm918, %v1538, 0
    %1543 = vmatpush.bf16.msra.mxu0 0
    %1544 = vmatpush.bf16.msra.mxu0 0
    %1545 = vmatpush.bf16.msra.mxu0 0
    %1546 = vmatpush.bf16.msra.mxu0 0
    %1547 = vmatpush.bf16.msra.mxu0 0
    %1548 = vmatpush.bf16.msra.mxu0 0
    %1549 = vmatpush.bf16.msra.mxu0 0
    %1550 = vmatpush.bf16.msra.mxu0 %v924
    %1551 = vmatmul.bf16.gmra.mxu0 %v1541
    %v1552 = vpop.f32.mrf.mxu0
    %v1553 = vadd.f32 0.0, %v1552
    %v1554 = vpop.f32.mrf.mxu0
    %1555 = vdwg.mxu0
    %v1557 = vsel %vm918, %v1539, 0
    %1559 = vmatpush.bf16.msra.mxu0 0
    %1560 = vmatpush.bf16.msra.mxu0 0
    %1561 = vmatpush.bf16.msra.mxu0 0
    %1562 = vmatpush.bf16.msra.mxu0 0
    %1563 = vmatpush.bf16.msra.mxu0 0
    %1564 = vmatpush.bf16.msra.mxu0 0
    %1565 = vmatpush.bf16.msra.mxu0 0
    %1566 = vmatpush.bf16.msra.mxu0 %v952
    %1567 = vmatmul.bf16.gmra.mxu0 %v1557
    %v1568 = vpop.f32.mrf.mxu0
    %v1569 = vadd.f32 0.0, %v1568
    %v1570 = vpop.f32.mrf.mxu0
    %1571 = vdwg.mxu0
    %v1574 = vrot.slane %v1569, 7
    %v1575 = vsel %vm867, %v1574, %v1553
    %v1577 = vpack.c.bf16 %v1575, %v1575
    %1578 = vmatpush.bf16.msra.mxu0 %v1047
    %1579 = vmatpush.bf16.msra.mxu0 %v1046
    %1580 = vmatpush.bf16.msra.mxu0 %v1045
    %1581 = vmatpush.bf16.msra.mxu0 %v1044
    %1582 = vmatpush.bf16.msra.mxu0 %v1043
    %1583 = vmatpush.bf16.msra.mxu0 %v1042
    %1584 = vmatpush.bf16.msra.mxu0 %v1041
    %1585 = vmatpush.bf16.msra.mxu0 %v1040
    %1586 = vmatmul.bf16.gmra.mxu0 %v1577
    %v1587 = vpop.f32.mrf.mxu0
    %v1588 = vadd.f32 %v974, %v1587
    %v1589 = vpop.f32.mrf.mxu0
    %1590 = vdwg.mxu0
    %1591 = vmatpush.bf16.msra.mxu0 %v1055
    %1592 = vmatpush.bf16.msra.mxu0 %v1054
    %1593 = vmatpush.bf16.msra.mxu0 %v1053
    %1594 = vmatpush.bf16.msra.mxu0 %v1052
    %1595 = vmatpush.bf16.msra.mxu0 %v1051
    %1596 = vmatpush.bf16.msra.mxu0 %v1050
    %1597 = vmatpush.bf16.msra.mxu0 %v1049
    %1598 = vmatpush.bf16.msra.mxu0 %v1048
    %1599 = vmatmul.bf16.gmra.mxu0 %v1486
    %v1600 = vpop.f32.mrf.mxu0
    %v1601 = vadd.f32 %v1588, %v1600
    %v1602 = vpop.f32.mrf.mxu0
    %1603 = vdwg.mxu0
    %v1604 = vtanh.pop %v1601
    %v1605 = vadd.f32 %v1534, 1e-08
    %v1606 = vmul.f32 %v1605, %v62
    %v1607 = vsel %vm271, %v1606, 0.0
    %1608 = vadd.xlane.f32.xlu0 %v1607
    %v1609 = vpop.xlane.xlu0 %1608
    %v1610 = vrcp.pop %v1609
    %v1611 = vmul.f32 %v1606, %v1610
    %vm1612 = vcmp.ge.f32.partialorder %v274, 1.0
    %v1613 = vsel %vm1612, 1, 0
    %v1614 = vcvt.s32.f32 %v1613
    %v1615 = vmul.f32 %v1269, %v1614
    %v1616 = vmul.f32 %v1611, %v1615
    %v1617 = vsel %vm271, %v1616, -inf
    %1618 = vmax.xlane.f32.xlu0 %v1617
    %v1619 = vpop.xlane.xlu0 %1618
    %vm1620 = vcmp.eq.f32.partialorder %v1616, %v1619
    %v1621 = vsel %vm1620, %v270, 8
    %v1622 = vsel %vm271, %v1621, 2147483647
    %v1623 = vand.u32 %v1622, 65535
    %v1624 = vshra.s32 %v1622, 16
    %v1625 = vcvt.s32.f32 %v1623
    %v1626 = vcvt.s32.f32 %v1624
    %1627 = vmin.xlane.f32.xlu0 %v1626
    %v1628 = vpop.xlane.xlu0 %1627
    %vm1629 = vcmp.eq.f32.partialorder %v1626, %v1628
    %v1630 = vsel %vm1629, %v1625, inf
    %1631 = vmin.xlane.f32.xlu0 %v1630
    %v1632 = vpop.xlane.xlu0 %1631
    %v1633 = vcvt.f32.s32 %v1632
    %v1634 = vcvt.f32.s32 %v1628
    %v1635 = vshll.u32 %v1634, 16
    %v1636 = vadd.s32 %v1635, %v1633
    %vm1637 = vcmp.eq.s32.totalorder %v270, %v1636
    %v1638 = vsel %vm1637, 1, 0
    %v1639 = vcvt.s32.f32 %v1638
    %v1640 = vadd.f32 %v1616, 1e-08
    %v1641 = vmul.f32 %v1640, %v1639
    %v1642 = vsel %vm271, %v1641, 0.0
    %1643 = vadd.xlane.f32.xlu0 %v1642
    %v1644 = vpop.xlane.xlu0 %1643
    %v1645 = vlog2.pop %v1644
    %v1646 = vmul.f32 %v1645, 0.6931472
    %v1647 = vsel %vm271, %v1640, 0.0
    %1648 = vadd.xlane.f32.xlu0 %v1647
    %v1649 = vpop.xlane.xlu0 %1648
    %v1650 = vlog2.pop %v1649
    %v1651 = vmul.f32 %v1650, 0.6931472
    %v1652 = vsub.f32 %v1646, %v1651
    %vm1653 = vcmask 9224
    %1654 = vst.msk [vmem:[#allocation2] sm:$0x3] %vm1653, %v1652
    %1655 = vst.msk [vmem:[#allocation4] sm:$0x3] %vm1653, %v1636
    %v1656 = vsub.f32 1.0, %v1639
    %v1657 = vmul.f32 %v1269, %v1656
    %v1659 = vrot.slane %v1639, 1
    %v1661 = vpack.c.bf16 %v1639, %v1639
    %v1662 = vpack.c.bf16 %v1659, %v1659
    %v1664 = vsel %vm918, %v1661, 0
    %1666 = vmatpush.bf16.msra.mxu0 0
    %1667 = vmatpush.bf16.msra.mxu0 0
    %1668 = vmatpush.bf16.msra.mxu0 0
    %1669 = vmatpush.bf16.msra.mxu0 0
    %1670 = vmatpush.bf16.msra.mxu0 0
    %1671 = vmatpush.bf16.msra.mxu0 0
    %1672 = vmatpush.bf16.msra.mxu0 0
    %1673 = vmatpush.bf16.msra.mxu0 %v1278
    %1674 = vmatmul.bf16.gmra.mxu0 %v1664
    %v1675 = vpop.f32.mrf.mxu0
    %v1676 = vadd.f32 0.0, %v1675
    %v1677 = vpop.f32.mrf.mxu0
    %1678 = vdwg.mxu0
    %v1680 = vsel %vm918, %v1662, 0
    %1682 = vmatpush.bf16.msra.mxu0 0
    %1683 = vmatpush.bf16.msra.mxu0 0
    %1684 = vmatpush.bf16.msra.mxu0 0
    %1685 = vmatpush.bf16.msra.mxu0 0
    %1686 = vmatpush.bf16.msra.mxu0 0
    %1687 = vmatpush.bf16.msra.mxu0 0
    %1688 = vmatpush.bf16.msra.mxu0 0
    %1689 = vmatpush.bf16.msra.mxu0 %v1297
    %1690 = vmatmul.bf16.gmra.mxu0 %v1680
    %v1691 = vpop.f32.mrf.mxu0
    %v1692 = vadd.f32 0.0, %v1691
    %v1693 = vpop.f32.mrf.mxu0
    %1694 = vdwg.mxu0
    %v1697 = vrot.slane %v1692, 7
    %v1698 = vsel %vm867, %v1697, %v1676
    %v1700 = vpack.c.bf16 %v1698, %v1698
    %v1701 = vpack.c.bf16 %v1604, %v1604
    %1702 = vmatpush.bf16.msra.mxu0 %v509
    %1703 = vmatpush.bf16.msra.mxu0 %v505
    %1704 = vmatpush.bf16.msra.mxu0 %v501
    %1705 = vmatpush.bf16.msra.mxu0 %v497
    %1706 = vmatpush.bf16.msra.mxu0 %v493
    %1707 = vmatpush.bf16.msra.mxu0 %v489
    %1708 = vmatpush.bf16.msra.mxu0 %v485
    %1709 = vmatpush.bf16.msra.mxu0 %v481
    %1710 = vmatmul.bf16.gmra.mxu0 %v1700
    %v1711 = vpop.f32.mrf.mxu0
    %v1712 = vadd.f32 %v281, %v1711
    %v1713 = vpop.f32.mrf.mxu0
    %1714 = vdwg.mxu0
    %1715 = vmatpush.bf16.msra.mxu0 %v541
    %1716 = vmatpush.bf16.msra.mxu0 %v537
    %1717 = vmatpush.bf16.msra.mxu0 %v533
    %1718 = vmatpush.bf16.msra.mxu0 %v529
    %1719 = vmatpush.bf16.msra.mxu0 %v525
    %1720 = vmatpush.bf16.msra.mxu0 %v521
    %1721 = vmatpush.bf16.msra.mxu0 %v517
    %1722 = vmatpush.bf16.msra.mxu0 %v513
    %1723 = vmatmul.bf16.gmra.mxu0 %v1701
    %v1724 = vpop.f32.mrf.mxu0
    %v1725 = vadd.f32 %v1712, %v1724
    %v1726 = vpop.f32.mrf.mxu0
    %1727 = vdwg.mxu0
    %1728 = vmatpush.bf16.msra.mxu0 %v510
    %1729 = vmatpush.bf16.msra.mxu0 %v506
    %1730 = vmatpush.bf16.msra.mxu0 %v502
    %1731 = vmatpush.bf16.msra.mxu0 %v498
    %1732 = vmatpush.bf16.msra.mxu0 %v494
    %1733 = vmatpush.bf16.msra.mxu0 %v490
    %1734 = vmatpush.bf16.msra.mxu0 %v486
    %1735 = vmatpush.bf16.msra.mxu0 %v482
    %1736 = vmatmul.bf16.gmra.mxu0 %v1700
    %v1737 = vpop.f32.mrf.mxu0
    %v1738 = vadd.f32 %v282, %v1737
    %v1739 = vpop.f32.mrf.mxu0
    %1740 = vdwg.mxu0
    %1741 = vmatpush.bf16.msra.mxu0 %v542
    %1742 = vmatpush.bf16.msra.mxu0 %v538
    %1743 = vmatpush.bf16.msra.mxu0 %v534
    %1744 = vmatpush.bf16.msra.mxu0 %v530
    %1745 = vmatpush.bf16.msra.mxu0 %v526
    %1746 = vmatpush.bf16.msra.mxu0 %v522
    %1747 = vmatpush.bf16.msra.mxu0 %v518
    %1748 = vmatpush.bf16.msra.mxu0 %v514
    %1749 = vmatmul.bf16.gmra.mxu0 %v1701
    %v1750 = vpop.f32.mrf.mxu0
    %v1751 = vadd.f32 %v1738, %v1750
    %v1752 = vpop.f32.mrf.mxu0
    %1753 = vdwg.mxu0
    %1754 = vmatpush.bf16.msra.mxu0 %v511
    %1755 = vmatpush.bf16.msra.mxu0 %v507
    %1756 = vmatpush.bf16.msra.mxu0 %v503
    %1757 = vmatpush.bf16.msra.mxu0 %v499
    %1758 = vmatpush.bf16.msra.mxu0 %v495
    %1759 = vmatpush.bf16.msra.mxu0 %v491
    %1760 = vmatpush.bf16.msra.mxu0 %v487
    %1761 = vmatpush.bf16.msra.mxu0 %v483
    %1762 = vmatmul.bf16.gmra.mxu0 %v1700
    %v1763 = vpop.f32.mrf.mxu0
    %v1764 = vadd.f32 %v283, %v1763
    %v1765 = vpop.f32.mrf.mxu0
    %1766 = vdwg.mxu0
    %1767 = vmatpush.bf16.msra.mxu0 %v543
    %1768 = vmatpush.bf16.msra.mxu0 %v539
    %1769 = vmatpush.bf16.msra.mxu0 %v535
    %1770 = vmatpush.bf16.msra.mxu0 %v531
    %1771 = vmatpush.bf16.msra.mxu0 %v527
    %1772 = vmatpush.bf16.msra.mxu0 %v523
    %1773 = vmatpush.bf16.msra.mxu0 %v519
    %1774 = vmatpush.bf16.msra.mxu0 %v515
    %1775 = vmatmul.bf16.gmra.mxu0 %v1701
    %v1776 = vpop.f32.mrf.mxu0
    %v1777 = vadd.f32 %v1764, %v1776
    %v1778 = vpop.f32.mrf.mxu0
    %1779 = vdwg.mxu0
    %1780 = vmatpush.bf16.msra.mxu0 %v512
    %1781 = vmatpush.bf16.msra.mxu0 %v508
    %1782 = vmatpush.bf16.msra.mxu0 %v504
    %1783 = vmatpush.bf16.msra.mxu0 %v500
    %1784 = vmatpush.bf16.msra.mxu0 %v496
    %1785 = vmatpush.bf16.msra.mxu0 %v492
    %1786 = vmatpush.bf16.msra.mxu0 %v488
    %1787 = vmatpush.bf16.msra.mxu0 %v484
    %1788 = vmatmul.bf16.gmra.mxu0 %v1700
    %v1789 = vpop.f32.mrf.mxu0
    %v1790 = vadd.f32 %v284, %v1789
    %v1791 = vpop.f32.mrf.mxu0
    %1792 = vdwg.mxu0
    %1793 = vmatpush.bf16.msra.mxu0 %v544
    %1794 = vmatpush.bf16.msra.mxu0 %v540
    %1795 = vmatpush.bf16.msra.mxu0 %v536
    %1796 = vmatpush.bf16.msra.mxu0 %v532
    %1797 = vmatpush.bf16.msra.mxu0 %v528
    %1798 = vmatpush.bf16.msra.mxu0 %v524
    %1799 = vmatpush.bf16.msra.mxu0 %v520
    %1800 = vmatpush.bf16.msra.mxu0 %v516
    %1801 = vmatmul.bf16.gmra.mxu0 %v1701
    %v1802 = vpop.f32.mrf.mxu0
    %v1803 = vadd.f32 %v1790, %v1802
    %v1804 = vpop.f32.mrf.mxu0
    %1805 = vdwg.mxu0
    %v1806 = vxor.u32 %v1725, 2147483648
    %v1807 = vmul.f32 %v1806, 1.442695
    %v1808 = vpow.pop %v1807
    %v1809 = vadd.f32 %v1808, 1.0
    %v1810 = vrcp.pop %v1809
    %v1811 = vmul.f32 %v1809, %v1810
    %v1812 = vsub.f32 1.0, %v1811
    %v1813 = vmul.f32 %v1810, %v1812
    %v1814 = vadd.f32 %v1810, %v1813
    %vm1815 = vweird.f32 %v1809
    %vm1816 = vweird.f32 %v1810
    %vm1817 = vmor %vm1815, %vm1816
    %v1818 = vsel %vm1817, %v1810, %v1814
    %v1819 = vand.u32 2147483647, %v1809
    %vm1820 = vcmp.eq.f32.partialorder %v1819, 8.507059e+37
    %v1821 = vand.u32 %v1809, 2147483648
    %v1822 = vor.u32 1.1754944e-38, %v1821
    %v1823 = vsel %vm1820, %v1822, %v1818
    %v1824 = vmul.f32 1.0, %v1823
    %v1825 = vxor.u32 %v1751, 2147483648
    %v1826 = vmul.f32 %v1825, 1.442695
    %v1827 = vpow.pop %v1826
    %v1828 = vadd.f32 %v1827, 1.0
    %v1829 = vrcp.pop %v1828
    %v1830 = vmul.f32 %v1828, %v1829
    %v1831 = vsub.f32 1.0, %v1830
    %v1832 = vmul.f32 %v1829, %v1831
    %v1833 = vadd.f32 %v1829, %v1832
    %vm1834 = vweird.f32 %v1828
    %vm1835 = vweird.f32 %v1829
    %vm1836 = vmor %vm1834, %vm1835
    %v1837 = vsel %vm1836, %v1829, %v1833
    %v1838 = vand.u32 2147483647, %v1828
    %vm1839 = vcmp.eq.f32.partialorder %v1838, 8.507059e+37
    %v1840 = vand.u32 %v1828, 2147483648
    %v1841 = vor.u32 1.1754944e-38, %v1840
    %v1842 = vsel %vm1839, %v1841, %v1837
    %v1843 = vmul.f32 1.0, %v1842
    %v1844 = vtanh.pop %v1777
    %v1845 = vxor.u32 %v1803, 2147483648
    %v1846 = vmul.f32 %v1845, 1.442695
    %v1847 = vpow.pop %v1846
    %v1848 = vadd.f32 %v1847, 1.0
    %v1849 = vrcp.pop %v1848
    %v1850 = vmul.f32 %v1848, %v1849
    %v1851 = vsub.f32 1.0, %v1850
    %v1852 = vmul.f32 %v1849, %v1851
    %v1853 = vadd.f32 %v1849, %v1852
    %vm1854 = vweird.f32 %v1848
    %vm1855 = vweird.f32 %v1849
    %vm1856 = vmor %vm1854, %vm1855
    %v1857 = vsel %vm1856, %v1849, %v1853
    %v1858 = vand.u32 2147483647, %v1848
    %vm1859 = vcmp.eq.f32.partialorder %v1858, 8.507059e+37
    %v1860 = vand.u32 %v1848, 2147483648
    %v1861 = vor.u32 1.1754944e-38, %v1860
    %v1862 = vsel %vm1859, %v1861, %v1857
    %v1863 = vmul.f32 1.0, %v1862
    %v1864 = vmul.f32 %v1843, %v1483
    %v1865 = vmul.f32 %v1824, %v1844
    %v1866 = vadd.f32 %v1864, %v1865
    %v1867 = vtanh.pop %v1866
    %v1868 = vmul.f32 %v1863, %v1867
    %v1869 = vpack.c.bf16 %v1868, %v1868
    %1870 = vmatpush.bf16.msra.mxu0 %v819
    %1871 = vmatpush.bf16.msra.mxu0 %v818
    %1872 = vmatpush.bf16.msra.mxu0 %v817
    %1873 = vmatpush.bf16.msra.mxu0 %v816
    %1874 = vmatpush.bf16.msra.mxu0 %v815
    %1875 = vmatpush.bf16.msra.mxu0 %v814
    %1876 = vmatpush.bf16.msra.mxu0 %v813
    %1877 = vmatpush.bf16.msra.mxu0 %v812
    %1878 = vmatmul.bf16.gmra.mxu0 %v1869
    %v1879 = vpop.f32.mrf.mxu0
    %v1880 = vadd.f32 %v778, %v1879
    %v1881 = vpop.f32.mrf.mxu0
    %1882 = vdwg.mxu0
    %v1884 = vrot.slane %v1880, 1
    %v1885 = vperm.slane %v1880, 0
    %v1886 = vperm.slane %v1884, 0
    %v1889 = vadd.f32 %v1885, %v263
    %v1890 = vadd.f32 %v1886, %v265
    %v1891 = vtanh.pop %v1889
    %v1892 = vtanh.pop %v1890
    %v1893 = vmul.f32 %v1891, %v852
    %v1894 = vmul.f32 %v1892, %v852
    %1895 = vadd.xlane.f32.xlu0 %v1893
    %v1896 = vpop.xlane.xlu0 %1895
    %1897 = vadd.xlane.f32.xlu0 %v1894
    %v1898 = vpop.xlane.xlu0 %1897
    %vm1899 = vcmp.eq.f32.partialorder %v1657, 0.0
    %v1902 = vperm.slane %v1896, %v270
    %v1903 = vperm.slane %v1898, %v270
    %v1904 = vsel %vm867, %v1903, %v1902
    %v1906 = vsel %vm1899, -1e+30, %v1904
    %v1907 = vsel %vm271, %v1906, -inf
    %1908 = vmax.xlane.f32.xlu0 %v1907
    %v1909 = vpop.xlane.xlu0 %1908
    %v1910 = vsub.f32 %v1906, %v1909
    %v1911 = vmul.f32 %v1910, 1.442695
    %v1912 = vpow.pop %v1911
    %v1913 = vsel %vm271, %v1912, 0.0
    %1914 = vadd.xlane.f32.xlu0 %v1913
    %v1915 = vpop.xlane.xlu0 %1914
    %v1916 = vrcp.pop %v1915
    %v1917 = vmul.f32 %v1912, %v1916
    %v1919 = vrot.slane %v1917, 1
    %v1921 = vpack.c.bf16 %v1917, %v1917
    %v1922 = vpack.c.bf16 %v1919, %v1919
    %v1924 = vsel %vm918, %v1921, 0
    %1926 = vmatpush.bf16.msra.mxu0 0
    %1927 = vmatpush.bf16.msra.mxu0 0
    %1928 = vmatpush.bf16.msra.mxu0 0
    %1929 = vmatpush.bf16.msra.mxu0 0
    %1930 = vmatpush.bf16.msra.mxu0 0
    %1931 = vmatpush.bf16.msra.mxu0 0
    %1932 = vmatpush.bf16.msra.mxu0 0
    %1933 = vmatpush.bf16.msra.mxu0 %v924
    %1934 = vmatmul.bf16.gmra.mxu0 %v1924
    %v1935 = vpop.f32.mrf.mxu0
    %v1936 = vadd.f32 0.0, %v1935
    %v1937 = vpop.f32.mrf.mxu0
    %1938 = vdwg.mxu0
    %v1940 = vsel %vm918, %v1922, 0
    %1942 = vmatpush.bf16.msra.mxu0 0
    %1943 = vmatpush.bf16.msra.mxu0 0
    %1944 = vmatpush.bf16.msra.mxu0 0
    %1945 = vmatpush.bf16.msra.mxu0 0
    %1946 = vmatpush.bf16.msra.mxu0 0
    %1947 = vmatpush.bf16.msra.mxu0 0
    %1948 = vmatpush.bf16.msra.mxu0 0
    %1949 = vmatpush.bf16.msra.mxu0 %v952
    %1950 = vmatmul.bf16.gmra.mxu0 %v1940
    %v1951 = vpop.f32.mrf.mxu0
    %v1952 = vadd.f32 0.0, %v1951
    %v1953 = vpop.f32.mrf.mxu0
    %1954 = vdwg.mxu0
    %v1957 = vrot.slane %v1952, 7
    %v1958 = vsel %vm867, %v1957, %v1936
    %v1960 = vpack.c.bf16 %v1958, %v1958
    %1961 = vmatpush.bf16.msra.mxu0 %v1047
    %1962 = vmatpush.bf16.msra.mxu0 %v1046
    %1963 = vmatpush.bf16.msra.mxu0 %v1045
    %1964 = vmatpush.bf16.msra.mxu0 %v1044
    %1965 = vmatpush.bf16.msra.mxu0 %v1043
    %1966 = vmatpush.bf16.msra.mxu0 %v1042
    %1967 = vmatpush.bf16.msra.mxu0 %v1041
    %1968 = vmatpush.bf16.msra.mxu0 %v1040
    %1969 = vmatmul.bf16.gmra.mxu0 %v1960
    %v1970 = vpop.f32.mrf.mxu0
    %v1971 = vadd.f32 %v974, %v1970
    %v1972 = vpop.f32.mrf.mxu0
    %1973 = vdwg.mxu0
    %1974 = vmatpush.bf16.msra.mxu0 %v1055
    %1975 = vmatpush.bf16.msra.mxu0 %v1054
    %1976 = vmatpush.bf16.msra.mxu0 %v1053
    %1977 = vmatpush.bf16.msra.mxu0 %v1052
    %1978 = vmatpush.bf16.msra.mxu0 %v1051
    %1979 = vmatpush.bf16.msra.mxu0 %v1050
    %1980 = vmatpush.bf16.msra.mxu0 %v1049
    %1981 = vmatpush.bf16.msra.mxu0 %v1048
    %1982 = vmatmul.bf16.gmra.mxu0 %v1869
    %v1983 = vpop.f32.mrf.mxu0
    %v1984 = vadd.f32 %v1971, %v1983
    %v1985 = vpop.f32.mrf.mxu0
    %1986 = vdwg.mxu0
    %v1987 = vtanh.pop %v1984
    %v1988 = vadd.f32 %v1917, 1e-08
    %v1989 = vmul.f32 %v1988, %v62
    %v1990 = vsel %vm271, %v1989, 0.0
    %1991 = vadd.xlane.f32.xlu0 %v1990
    %v1992 = vpop.xlane.xlu0 %1991
    %v1993 = vrcp.pop %v1992
    %v1994 = vmul.f32 %v1989, %v1993
    %vm1995 = vcmp.ge.f32.partialorder %v274, 2.0
    %v1996 = vsel %vm1995, 1, 0
    %v1997 = vcvt.s32.f32 %v1996
    %v1998 = vmul.f32 %v1657, %v1997
    %v1999 = vmul.f32 %v1994, %v1998
    %v2000 = vsel %vm271, %v1999, -inf
    %2001 = vmax.xlane.f32.xlu0 %v2000
    %v2002 = vpop.xlane.xlu0 %2001
    %vm2003 = vcmp.eq.f32.partialorder %v1999, %v2002
    %v2004 = vsel %vm2003, %v270, 8
    %v2005 = vsel %vm271, %v2004, 2147483647
    %v2006 = vand.u32 %v2005, 65535
    %v2007 = vshra.s32 %v2005, 16
    %v2008 = vcvt.s32.f32 %v2006
    %v2009 = vcvt.s32.f32 %v2007
    %2010 = vmin.xlane.f32.xlu0 %v2009
    %v2011 = vpop.xlane.xlu0 %2010
    %vm2012 = vcmp.eq.f32.partialorder %v2009, %v2011
    %v2013 = vsel %vm2012, %v2008, inf
    %2014 = vmin.xlane.f32.xlu0 %v2013
    %v2015 = vpop.xlane.xlu0 %2014
    %v2016 = vcvt.f32.s32 %v2015
    %v2017 = vcvt.f32.s32 %v2011
    %v2018 = vshll.u32 %v2017, 16
    %v2019 = vadd.s32 %v2018, %v2016
    %vm2020 = vcmp.eq.s32.totalorder %v270, %v2019
    %v2021 = vsel %vm2020, 1, 0
    %v2022 = vcvt.s32.f32 %v2021
    %v2023 = vadd.f32 %v1999, 1e-08
    %v2024 = vmul.f32 %v2023, %v2022
    %v2025 = vsel %vm271, %v2024, 0.0
    %2026 = vadd.xlane.f32.xlu0 %v2025
    %v2027 = vpop.xlane.xlu0 %2026
    %v2028 = vlog2.pop %v2027
    %v2029 = vmul.f32 %v2028, 0.6931472
    %v2030 = vsel %vm271, %v2023, 0.0
    %2031 = vadd.xlane.f32.xlu0 %v2030
    %v2032 = vpop.xlane.xlu0 %2031
    %v2033 = vlog2.pop %v2032
    %v2034 = vmul.f32 %v2033, 0.6931472
    %v2035 = vsub.f32 %v2029, %v2034
    %vm2036 = vcmask 17424
    %2037 = vst.msk [vmem:[#allocation2] sm:$0x3] %vm2036, %v2035
    %2038 = vst.msk [vmem:[#allocation4] sm:$0x3] %vm2036, %v2019
    %v2039 = vsub.f32 1.0, %v2022
    %v2040 = vmul.f32 %v1657, %v2039
    %v2042 = vrot.slane %v2022, 1
    %v2044 = vpack.c.bf16 %v2022, %v2022
    %v2045 = vpack.c.bf16 %v2042, %v2042
    %v2047 = vsel %vm918, %v2044, 0
    %2049 = vmatpush.bf16.msra.mxu0 0
    %2050 = vmatpush.bf16.msra.mxu0 0
    %2051 = vmatpush.bf16.msra.mxu0 0
    %2052 = vmatpush.bf16.msra.mxu0 0
    %2053 = vmatpush.bf16.msra.mxu0 0
    %2054 = vmatpush.bf16.msra.mxu0 0
    %2055 = vmatpush.bf16.msra.mxu0 0
    %2056 = vmatpush.bf16.msra.mxu0 %v1278
    %2057 = vmatmul.bf16.gmra.mxu0 %v2047
    %v2058 = vpop.f32.mrf.mxu0
    %v2059 = vadd.f32 0.0, %v2058
    %v2060 = vpop.f32.mrf.mxu0
    %2061 = vdwg.mxu0
    %v2063 = vsel %vm918, %v2045, 0
    %2065 = vmatpush.bf16.msra.mxu0 0
    %2066 = vmatpush.bf16.msra.mxu0 0
    %2067 = vmatpush.bf16.msra.mxu0 0
    %2068 = vmatpush.bf16.msra.mxu0 0
    %2069 = vmatpush.bf16.msra.mxu0 0
    %2070 = vmatpush.bf16.msra.mxu0 0
    %2071 = vmatpush.bf16.msra.mxu0 0
    %2072 = vmatpush.bf16.msra.mxu0 %v1297
    %2073 = vmatmul.bf16.gmra.mxu0 %v2063
    %v2074 = vpop.f32.mrf.mxu0
    %v2075 = vadd.f32 0.0, %v2074
    %v2076 = vpop.f32.mrf.mxu0
    %2077 = vdwg.mxu0
    %v2080 = vrot.slane %v2075, 7
    %v2081 = vsel %vm867, %v2080, %v2059
    %v2083 = vpack.c.bf16 %v2081, %v2081
    %v2084 = vpack.c.bf16 %v1987, %v1987
    %2085 = vmatpush.bf16.msra.mxu0 %v509
    %2086 = vmatpush.bf16.msra.mxu0 %v505
    %2087 = vmatpush.bf16.msra.mxu0 %v501
    %2088 = vmatpush.bf16.msra.mxu0 %v497
    %2089 = vmatpush.bf16.msra.mxu0 %v493
    %2090 = vmatpush.bf16.msra.mxu0 %v489
    %2091 = vmatpush.bf16.msra.mxu0 %v485
    %2092 = vmatpush.bf16.msra.mxu0 %v481
    %2093 = vmatmul.bf16.gmra.mxu0 %v2083
    %v2094 = vpop.f32.mrf.mxu0
    %v2095 = vadd.f32 %v281, %v2094
    %v2096 = vpop.f32.mrf.mxu0
    %2097 = vdwg.mxu0
    %2098 = vmatpush.bf16.msra.mxu0 %v541
    %2099 = vmatpush.bf16.msra.mxu0 %v537
    %2100 = vmatpush.bf16.msra.mxu0 %v533
    %2101 = vmatpush.bf16.msra.mxu0 %v529
    %2102 = vmatpush.bf16.msra.mxu0 %v525
    %2103 = vmatpush.bf16.msra.mxu0 %v521
    %2104 = vmatpush.bf16.msra.mxu0 %v517
    %2105 = vmatpush.bf16.msra.mxu0 %v513
    %2106 = vmatmul.bf16.gmra.mxu0 %v2084
    %v2107 = vpop.f32.mrf.mxu0
    %v2108 = vadd.f32 %v2095, %v2107
    %v2109 = vpop.f32.mrf.mxu0
    %2110 = vdwg.mxu0
    %2111 = vmatpush.bf16.msra.mxu0 %v510
    %2112 = vmatpush.bf16.msra.mxu0 %v506
    %2113 = vmatpush.bf16.msra.mxu0 %v502
    %2114 = vmatpush.bf16.msra.mxu0 %v498
    %2115 = vmatpush.bf16.msra.mxu0 %v494
    %2116 = vmatpush.bf16.msra.mxu0 %v490
    %2117 = vmatpush.bf16.msra.mxu0 %v486
    %2118 = vmatpush.bf16.msra.mxu0 %v482
    %2119 = vmatmul.bf16.gmra.mxu0 %v2083
    %v2120 = vpop.f32.mrf.mxu0
    %v2121 = vadd.f32 %v282, %v2120
    %v2122 = vpop.f32.mrf.mxu0
    %2123 = vdwg.mxu0
    %2124 = vmatpush.bf16.msra.mxu0 %v542
    %2125 = vmatpush.bf16.msra.mxu0 %v538
    %2126 = vmatpush.bf16.msra.mxu0 %v534
    %2127 = vmatpush.bf16.msra.mxu0 %v530
    %2128 = vmatpush.bf16.msra.mxu0 %v526
    %2129 = vmatpush.bf16.msra.mxu0 %v522
    %2130 = vmatpush.bf16.msra.mxu0 %v518
    %2131 = vmatpush.bf16.msra.mxu0 %v514
    %2132 = vmatmul.bf16.gmra.mxu0 %v2084
    %v2133 = vpop.f32.mrf.mxu0
    %v2134 = vadd.f32 %v2121, %v2133
    %v2135 = vpop.f32.mrf.mxu0
    %2136 = vdwg.mxu0
    %2137 = vmatpush.bf16.msra.mxu0 %v511
    %2138 = vmatpush.bf16.msra.mxu0 %v507
    %2139 = vmatpush.bf16.msra.mxu0 %v503
    %2140 = vmatpush.bf16.msra.mxu0 %v499
    %2141 = vmatpush.bf16.msra.mxu0 %v495
    %2142 = vmatpush.bf16.msra.mxu0 %v491
    %2143 = vmatpush.bf16.msra.mxu0 %v487
    %2144 = vmatpush.bf16.msra.mxu0 %v483
    %2145 = vmatmul.bf16.gmra.mxu0 %v2083
    %v2146 = vpop.f32.mrf.mxu0
    %v2147 = vadd.f32 %v283, %v2146
    %v2148 = vpop.f32.mrf.mxu0
    %2149 = vdwg.mxu0
    %2150 = vmatpush.bf16.msra.mxu0 %v543
    %2151 = vmatpush.bf16.msra.mxu0 %v539
    %2152 = vmatpush.bf16.msra.mxu0 %v535
    %2153 = vmatpush.bf16.msra.mxu0 %v531
    %2154 = vmatpush.bf16.msra.mxu0 %v527
    %2155 = vmatpush.bf16.msra.mxu0 %v523
    %2156 = vmatpush.bf16.msra.mxu0 %v519
    %2157 = vmatpush.bf16.msra.mxu0 %v515
    %2158 = vmatmul.bf16.gmra.mxu0 %v2084
    %v2159 = vpop.f32.mrf.mxu0
    %v2160 = vadd.f32 %v2147, %v2159
    %v2161 = vpop.f32.mrf.mxu0
    %2162 = vdwg.mxu0
    %2163 = vmatpush.bf16.msra.mxu0 %v512
    %2164 = vmatpush.bf16.msra.mxu0 %v508
    %2165 = vmatpush.bf16.msra.mxu0 %v504
    %2166 = vmatpush.bf16.msra.mxu0 %v500
    %2167 = vmatpush.bf16.msra.mxu0 %v496
    %2168 = vmatpush.bf16.msra.mxu0 %v492
    %2169 = vmatpush.bf16.msra.mxu0 %v488
    %2170 = vmatpush.bf16.msra.mxu0 %v484
    %2171 = vmatmul.bf16.gmra.mxu0 %v2083
    %v2172 = vpop.f32.mrf.mxu0
    %v2173 = vadd.f32 %v284, %v2172
    %v2174 = vpop.f32.mrf.mxu0
    %2175 = vdwg.mxu0
    %2176 = vmatpush.bf16.msra.mxu0 %v544
    %2177 = vmatpush.bf16.msra.mxu0 %v540
    %2178 = vmatpush.bf16.msra.mxu0 %v536
    %2179 = vmatpush.bf16.msra.mxu0 %v532
    %2180 = vmatpush.bf16.msra.mxu0 %v528
    %2181 = vmatpush.bf16.msra.mxu0 %v524
    %2182 = vmatpush.bf16.msra.mxu0 %v520
    %2183 = vmatpush.bf16.msra.mxu0 %v516
    %2184 = vmatmul.bf16.gmra.mxu0 %v2084
    %v2185 = vpop.f32.mrf.mxu0
    %v2186 = vadd.f32 %v2173, %v2185
    %v2187 = vpop.f32.mrf.mxu0
    %2188 = vdwg.mxu0
    %v2189 = vxor.u32 %v2108, 2147483648
    %v2190 = vmul.f32 %v2189, 1.442695
    %v2191 = vpow.pop %v2190
    %v2192 = vadd.f32 %v2191, 1.0
    %v2193 = vrcp.pop %v2192
    %v2194 = vmul.f32 %v2192, %v2193
    %v2195 = vsub.f32 1.0, %v2194
    %v2196 = vmul.f32 %v2193, %v2195
    %v2197 = vadd.f32 %v2193, %v2196
    %vm2198 = vweird.f32 %v2192
    %vm2199 = vweird.f32 %v2193
    %vm2200 = vmor %vm2198, %vm2199
    %v2201 = vsel %vm2200, %v2193, %v2197
    %v2202 = vand.u32 2147483647, %v2192
    %vm2203 = vcmp.eq.f32.partialorder %v2202, 8.507059e+37
    %v2204 = vand.u32 %v2192, 2147483648
    %v2205 = vor.u32 1.1754944e-38, %v2204
    %v2206 = vsel %vm2203, %v2205, %v2201
    %v2207 = vmul.f32 1.0, %v2206
    %v2208 = vxor.u32 %v2134, 2147483648
    %v2209 = vmul.f32 %v2208, 1.442695
    %v2210 = vpow.pop %v2209
    %v2211 = vadd.f32 %v2210, 1.0
    %v2212 = vrcp.pop %v2211
    %v2213 = vmul.f32 %v2211, %v2212
    %v2214 = vsub.f32 1.0, %v2213
    %v2215 = vmul.f32 %v2212, %v2214
    %v2216 = vadd.f32 %v2212, %v2215
    %vm2217 = vweird.f32 %v2211
    %vm2218 = vweird.f32 %v2212
    %vm2219 = vmor %vm2217, %vm2218
    %v2220 = vsel %vm2219, %v2212, %v2216
    %v2221 = vand.u32 2147483647, %v2211
    %vm2222 = vcmp.eq.f32.partialorder %v2221, 8.507059e+37
    %v2223 = vand.u32 %v2211, 2147483648
    %v2224 = vor.u32 1.1754944e-38, %v2223
    %v2225 = vsel %vm2222, %v2224, %v2220
    %v2226 = vmul.f32 1.0, %v2225
    %v2227 = vtanh.pop %v2160
    %v2228 = vxor.u32 %v2186, 2147483648
    %v2229 = vmul.f32 %v2228, 1.442695
    %v2230 = vpow.pop %v2229
    %v2231 = vadd.f32 %v2230, 1.0
    %v2232 = vrcp.pop %v2231
    %v2233 = vmul.f32 %v2231, %v2232
    %v2234 = vsub.f32 1.0, %v2233
    %v2235 = vmul.f32 %v2232, %v2234
    %v2236 = vadd.f32 %v2232, %v2235
    %vm2237 = vweird.f32 %v2231
    %vm2238 = vweird.f32 %v2232
    %vm2239 = vmor %vm2237, %vm2238
    %v2240 = vsel %vm2239, %v2232, %v2236
    %v2241 = vand.u32 2147483647, %v2231
    %vm2242 = vcmp.eq.f32.partialorder %v2241, 8.507059e+37
    %v2243 = vand.u32 %v2231, 2147483648
    %v2244 = vor.u32 1.1754944e-38, %v2243
    %v2245 = vsel %vm2242, %v2244, %v2240
    %v2246 = vmul.f32 1.0, %v2245
    %v2247 = vmul.f32 %v2226, %v1866
    %v2248 = vmul.f32 %v2207, %v2227
    %v2249 = vadd.f32 %v2247, %v2248
    %v2250 = vtanh.pop %v2249
    %v2251 = vmul.f32 %v2246, %v2250
    %v2252 = vpack.c.bf16 %v2251, %v2251
    %2253 = vmatpush.bf16.msra.mxu0 %v819
    %2254 = vmatpush.bf16.msra.mxu0 %v818
    %2255 = vmatpush.bf16.msra.mxu0 %v817
    %2256 = vmatpush.bf16.msra.mxu0 %v816
    %2257 = vmatpush.bf16.msra.mxu0 %v815
    %2258 = vmatpush.bf16.msra.mxu0 %v814
    %2259 = vmatpush.bf16.msra.mxu0 %v813
    %2260 = vmatpush.bf16.msra.mxu0 %v812
    %2261 = vmatmul.bf16.gmra.mxu0 %v2252
    %v2262 = vpop.f32.mrf.mxu0
    %v2263 = vadd.f32 %v778, %v2262
    %v2264 = vpop.f32.mrf.mxu0
    %2265 = vdwg.mxu0
    %v2267 = vrot.slane %v2263, 1
    %v2268 = vperm.slane %v2263, 0
    %v2269 = vperm.slane %v2267, 0
    %v2272 = vadd.f32 %v2268, %v263
    %v2273 = vadd.f32 %v2269, %v265
    %v2274 = vtanh.pop %v2272
    %v2275 = vtanh.pop %v2273
    %v2276 = vmul.f32 %v2274, %v852
    %v2277 = vmul.f32 %v2275, %v852
    %2278 = vadd.xlane.f32.xlu0 %v2276
    %v2279 = vpop.xlane.xlu0 %2278
    %2280 = vadd.xlane.f32.xlu0 %v2277
    %v2281 = vpop.xlane.xlu0 %2280
    %vm2282 = vcmp.eq.f32.partialorder %v2040, 0.0
    %v2285 = vperm.slane %v2279, %v270
    %v2286 = vperm.slane %v2281, %v270
    %v2287 = vsel %vm867, %v2286, %v2285
    %v2289 = vsel %vm2282, -1e+30, %v2287
    %v2290 = vsel %vm271, %v2289, -inf
    %2291 = vmax.xlane.f32.xlu0 %v2290
    %v2292 = vpop.xlane.xlu0 %2291
    %v2293 = vsub.f32 %v2289, %v2292
    %v2294 = vmul.f32 %v2293, 1.442695
    %v2295 = vpow.pop %v2294
    %v2296 = vsel %vm271, %v2295, 0.0
    %2297 = vadd.xlane.f32.xlu0 %v2296
    %v2298 = vpop.xlane.xlu0 %2297
    %v2299 = vrcp.pop %v2298
    %v2300 = vmul.f32 %v2295, %v2299
    %v2302 = vrot.slane %v2300, 1
    %v2304 = vpack.c.bf16 %v2300, %v2300
    %v2305 = vpack.c.bf16 %v2302, %v2302
    %v2307 = vsel %vm918, %v2304, 0
    %2309 = vmatpush.bf16.msra.mxu0 0
    %2310 = vmatpush.bf16.msra.mxu0 0
    %2311 = vmatpush.bf16.msra.mxu0 0
    %2312 = vmatpush.bf16.msra.mxu0 0
    %2313 = vmatpush.bf16.msra.mxu0 0
    %2314 = vmatpush.bf16.msra.mxu0 0
    %2315 = vmatpush.bf16.msra.mxu0 0
    %2316 = vmatpush.bf16.msra.mxu0 %v924
    %2317 = vmatmul.bf16.gmra.mxu0 %v2307
    %v2318 = vpop.f32.mrf.mxu0
    %v2319 = vadd.f32 0.0, %v2318
    %v2320 = vpop.f32.mrf.mxu0
    %2321 = vdwg.mxu0
    %v2323 = vsel %vm918, %v2305, 0
    %2325 = vmatpush.bf16.msra.mxu0 0
    %2326 = vmatpush.bf16.msra.mxu0 0
    %2327 = vmatpush.bf16.msra.mxu0 0
    %2328 = vmatpush.bf16.msra.mxu0 0
    %2329 = vmatpush.bf16.msra.mxu0 0
    %2330 = vmatpush.bf16.msra.mxu0 0
    %2331 = vmatpush.bf16.msra.mxu0 0
    %2332 = vmatpush.bf16.msra.mxu0 %v952
    %2333 = vmatmul.bf16.gmra.mxu0 %v2323
    %v2334 = vpop.f32.mrf.mxu0
    %v2335 = vadd.f32 0.0, %v2334
    %v2336 = vpop.f32.mrf.mxu0
    %2337 = vdwg.mxu0
    %v2340 = vrot.slane %v2335, 7
    %v2341 = vsel %vm867, %v2340, %v2319
    %v2343 = vpack.c.bf16 %v2341, %v2341
    %2344 = vmatpush.bf16.msra.mxu0 %v1047
    %2345 = vmatpush.bf16.msra.mxu0 %v1046
    %2346 = vmatpush.bf16.msra.mxu0 %v1045
    %2347 = vmatpush.bf16.msra.mxu0 %v1044
    %2348 = vmatpush.bf16.msra.mxu0 %v1043
    %2349 = vmatpush.bf16.msra.mxu0 %v1042
    %2350 = vmatpush.bf16.msra.mxu0 %v1041
    %2351 = vmatpush.bf16.msra.mxu0 %v1040
    %2352 = vmatmul.bf16.gmra.mxu0 %v2343
    %v2353 = vpop.f32.mrf.mxu0
    %v2354 = vadd.f32 %v974, %v2353
    %v2355 = vpop.f32.mrf.mxu0
    %2356 = vdwg.mxu0
    %2357 = vmatpush.bf16.msra.mxu0 %v1055
    %2358 = vmatpush.bf16.msra.mxu0 %v1054
    %2359 = vmatpush.bf16.msra.mxu0 %v1053
    %2360 = vmatpush.bf16.msra.mxu0 %v1052
    %2361 = vmatpush.bf16.msra.mxu0 %v1051
    %2362 = vmatpush.bf16.msra.mxu0 %v1050
    %2363 = vmatpush.bf16.msra.mxu0 %v1049
    %2364 = vmatpush.bf16.msra.mxu0 %v1048
    %2365 = vmatmul.bf16.gmra.mxu0 %v2252
    %v2366 = vpop.f32.mrf.mxu0
    %v2367 = vadd.f32 %v2354, %v2366
    %v2368 = vpop.f32.mrf.mxu0
    %2369 = vdwg.mxu0
    %v2370 = vtanh.pop %v2367
    %v2371 = vadd.f32 %v2300, 1e-08
    %v2372 = vmul.f32 %v2371, %v62
    %v2373 = vsel %vm271, %v2372, 0.0
    %2374 = vadd.xlane.f32.xlu0 %v2373
    %v2375 = vpop.xlane.xlu0 %2374
    %v2376 = vrcp.pop %v2375
    %v2377 = vmul.f32 %v2372, %v2376
    %vm2378 = vcmp.ge.f32.partialorder %v274, 3.0
    %v2379 = vsel %vm2378, 1, 0
    %v2380 = vcvt.s32.f32 %v2379
    %v2381 = vmul.f32 %v2040, %v2380
    %v2382 = vmul.f32 %v2377, %v2381
    %v2383 = vsel %vm271, %v2382, -inf
    %2384 = vmax.xlane.f32.xlu0 %v2383
    %v2385 = vpop.xlane.xlu0 %2384
    %vm2386 = vcmp.eq.f32.partialorder %v2382, %v2385
    %v2387 = vsel %vm2386, %v270, 8
    %v2388 = vsel %vm271, %v2387, 2147483647
    %v2389 = vand.u32 %v2388, 65535
    %v2390 = vshra.s32 %v2388, 16
    %v2391 = vcvt.s32.f32 %v2389
    %v2392 = vcvt.s32.f32 %v2390
    %2393 = vmin.xlane.f32.xlu0 %v2392
    %v2394 = vpop.xlane.xlu0 %2393
    %vm2395 = vcmp.eq.f32.partialorder %v2392, %v2394
    %v2396 = vsel %vm2395, %v2391, inf
    %2397 = vmin.xlane.f32.xlu0 %v2396
    %v2398 = vpop.xlane.xlu0 %2397
    %v2399 = vcvt.f32.s32 %v2398
    %v2400 = vcvt.f32.s32 %v2394
    %v2401 = vshll.u32 %v2400, 16
    %v2402 = vadd.s32 %v2401, %v2399
    %vm2403 = vcmp.eq.s32.totalorder %v270, %v2402
    %v2404 = vsel %vm2403, 1, 0
    %v2405 = vcvt.s32.f32 %v2404
    %v2406 = vadd.f32 %v2382, 1e-08
    %v2407 = vmul.f32 %v2406, %v2405
    %v2408 = vsel %vm271, %v2407, 0.0
    %2409 = vadd.xlane.f32.xlu0 %v2408
    %v2410 = vpop.xlane.xlu0 %2409
    %v2411 = vlog2.pop %v2410
    %v2412 = vmul.f32 %v2411, 0.6931472
    %v2413 = vsel %vm271, %v2406, 0.0
    %2414 = vadd.xlane.f32.xlu0 %v2413
    %v2415 = vpop.xlane.xlu0 %2414
    %v2416 = vlog2.pop %v2415
    %v2417 = vmul.f32 %v2416, 0.6931472
    %v2418 = vsub.f32 %v2412, %v2417
    %vm2419 = vcmask 25624
    %2420 = vst.msk [vmem:[#allocation2] sm:$0x3] %vm2419, %v2418
    %2421 = vst.msk [vmem:[#allocation4] sm:$0x3] %vm2419, %v2402
    %v2422 = vsub.f32 1.0, %v2405
    %v2423 = vmul.f32 %v2040, %v2422
    %v2425 = vrot.slane %v2405, 1
    %v2427 = vpack.c.bf16 %v2405, %v2405
    %v2428 = vpack.c.bf16 %v2425, %v2425
    %v2430 = vsel %vm918, %v2427, 0
    %2432 = vmatpush.bf16.msra.mxu0 0
    %2433 = vmatpush.bf16.msra.mxu0 0
    %2434 = vmatpush.bf16.msra.mxu0 0
    %2435 = vmatpush.bf16.msra.mxu0 0
    %2436 = vmatpush.bf16.msra.mxu0 0
    %2437 = vmatpush.bf16.msra.mxu0 0
    %2438 = vmatpush.bf16.msra.mxu0 0
    %2439 = vmatpush.bf16.msra.mxu0 %v1278
    %2440 = vmatmul.bf16.gmra.mxu0 %v2430
    %v2441 = vpop.f32.mrf.mxu0
    %v2442 = vadd.f32 0.0, %v2441
    %v2443 = vpop.f32.mrf.mxu0
    %2444 = vdwg.mxu0
    %v2446 = vsel %vm918, %v2428, 0
    %2448 = vmatpush.bf16.msra.mxu0 0
    %2449 = vmatpush.bf16.msra.mxu0 0
    %2450 = vmatpush.bf16.msra.mxu0 0
    %2451 = vmatpush.bf16.msra.mxu0 0
    %2452 = vmatpush.bf16.msra.mxu0 0
    %2453 = vmatpush.bf16.msra.mxu0 0
    %2454 = vmatpush.bf16.msra.mxu0 0
    %2455 = vmatpush.bf16.msra.mxu0 %v1297
    %2456 = vmatmul.bf16.gmra.mxu0 %v2446
    %v2457 = vpop.f32.mrf.mxu0
    %v2458 = vadd.f32 0.0, %v2457
    %v2459 = vpop.f32.mrf.mxu0
    %2460 = vdwg.mxu0
    %v2463 = vrot.slane %v2458, 7
    %v2464 = vsel %vm867, %v2463, %v2442
    %v2466 = vpack.c.bf16 %v2464, %v2464
    %v2467 = vpack.c.bf16 %v2370, %v2370
    %2468 = vmatpush.bf16.msra.mxu0 %v509
    %2469 = vmatpush.bf16.msra.mxu0 %v505
    %2470 = vmatpush.bf16.msra.mxu0 %v501
    %2471 = vmatpush.bf16.msra.mxu0 %v497
    %2472 = vmatpush.bf16.msra.mxu0 %v493
    %2473 = vmatpush.bf16.msra.mxu0 %v489
    %2474 = vmatpush.bf16.msra.mxu0 %v485
    %2475 = vmatpush.bf16.msra.mxu0 %v481
    %2476 = vmatmul.bf16.gmra.mxu0 %v2466
    %v2477 = vpop.f32.mrf.mxu0
    %v2478 = vadd.f32 %v281, %v2477
    %v2479 = vpop.f32.mrf.mxu0
    %2480 = vdwg.mxu0
    %2481 = vmatpush.bf16.msra.mxu0 %v541
    %2482 = vmatpush.bf16.msra.mxu0 %v537
    %2483 = vmatpush.bf16.msra.mxu0 %v533
    %2484 = vmatpush.bf16.msra.mxu0 %v529
    %2485 = vmatpush.bf16.msra.mxu0 %v525
    %2486 = vmatpush.bf16.msra.mxu0 %v521
    %2487 = vmatpush.bf16.msra.mxu0 %v517
    %2488 = vmatpush.bf16.msra.mxu0 %v513
    %2489 = vmatmul.bf16.gmra.mxu0 %v2467
    %v2490 = vpop.f32.mrf.mxu0
    %v2491 = vadd.f32 %v2478, %v2490
    %v2492 = vpop.f32.mrf.mxu0
    %2493 = vdwg.mxu0
    %2494 = vmatpush.bf16.msra.mxu0 %v510
    %2495 = vmatpush.bf16.msra.mxu0 %v506
    %2496 = vmatpush.bf16.msra.mxu0 %v502
    %2497 = vmatpush.bf16.msra.mxu0 %v498
    %2498 = vmatpush.bf16.msra.mxu0 %v494
    %2499 = vmatpush.bf16.msra.mxu0 %v490
    %2500 = vmatpush.bf16.msra.mxu0 %v486
    %2501 = vmatpush.bf16.msra.mxu0 %v482
    %2502 = vmatmul.bf16.gmra.mxu0 %v2466
    %v2503 = vpop.f32.mrf.mxu0
    %v2504 = vadd.f32 %v282, %v2503
    %v2505 = vpop.f32.mrf.mxu0
    %2506 = vdwg.mxu0
    %2507 = vmatpush.bf16.msra.mxu0 %v542
    %2508 = vmatpush.bf16.msra.mxu0 %v538
    %2509 = vmatpush.bf16.msra.mxu0 %v534
    %2510 = vmatpush.bf16.msra.mxu0 %v530
    %2511 = vmatpush.bf16.msra.mxu0 %v526
    %2512 = vmatpush.bf16.msra.mxu0 %v522
    %2513 = vmatpush.bf16.msra.mxu0 %v518
    %2514 = vmatpush.bf16.msra.mxu0 %v514
    %2515 = vmatmul.bf16.gmra.mxu0 %v2467
    %v2516 = vpop.f32.mrf.mxu0
    %v2517 = vadd.f32 %v2504, %v2516
    %v2518 = vpop.f32.mrf.mxu0
    %2519 = vdwg.mxu0
    %2520 = vmatpush.bf16.msra.mxu0 %v511
    %2521 = vmatpush.bf16.msra.mxu0 %v507
    %2522 = vmatpush.bf16.msra.mxu0 %v503
    %2523 = vmatpush.bf16.msra.mxu0 %v499
    %2524 = vmatpush.bf16.msra.mxu0 %v495
    %2525 = vmatpush.bf16.msra.mxu0 %v491
    %2526 = vmatpush.bf16.msra.mxu0 %v487
    %2527 = vmatpush.bf16.msra.mxu0 %v483
    %2528 = vmatmul.bf16.gmra.mxu0 %v2466
    %v2529 = vpop.f32.mrf.mxu0
    %v2530 = vadd.f32 %v283, %v2529
    %v2531 = vpop.f32.mrf.mxu0
    %2532 = vdwg.mxu0
    %2533 = vmatpush.bf16.msra.mxu0 %v543
    %2534 = vmatpush.bf16.msra.mxu0 %v539
    %2535 = vmatpush.bf16.msra.mxu0 %v535
    %2536 = vmatpush.bf16.msra.mxu0 %v531
    %2537 = vmatpush.bf16.msra.mxu0 %v527
    %2538 = vmatpush.bf16.msra.mxu0 %v523
    %2539 = vmatpush.bf16.msra.mxu0 %v519
    %2540 = vmatpush.bf16.msra.mxu0 %v515
    %2541 = vmatmul.bf16.gmra.mxu0 %v2467
    %v2542 = vpop.f32.mrf.mxu0
    %v2543 = vadd.f32 %v2530, %v2542
    %v2544 = vpop.f32.mrf.mxu0
    %2545 = vdwg.mxu0
    %2546 = vmatpush.bf16.msra.mxu0 %v512
    %2547 = vmatpush.bf16.msra.mxu0 %v508
    %2548 = vmatpush.bf16.msra.mxu0 %v504
    %2549 = vmatpush.bf16.msra.mxu0 %v500
    %2550 = vmatpush.bf16.msra.mxu0 %v496
    %2551 = vmatpush.bf16.msra.mxu0 %v492
    %2552 = vmatpush.bf16.msra.mxu0 %v488
    %2553 = vmatpush.bf16.msra.mxu0 %v484
    %2554 = vmatmul.bf16.gmra.mxu0 %v2466
    %v2555 = vpop.f32.mrf.mxu0
    %v2556 = vadd.f32 %v284, %v2555
    %v2557 = vpop.f32.mrf.mxu0
    %2558 = vdwg.mxu0
    %2559 = vmatpush.bf16.msra.mxu0 %v544
    %2560 = vmatpush.bf16.msra.mxu0 %v540
    %2561 = vmatpush.bf16.msra.mxu0 %v536
    %2562 = vmatpush.bf16.msra.mxu0 %v532
    %2563 = vmatpush.bf16.msra.mxu0 %v528
    %2564 = vmatpush.bf16.msra.mxu0 %v524
    %2565 = vmatpush.bf16.msra.mxu0 %v520
    %2566 = vmatpush.bf16.msra.mxu0 %v516
    %2567 = vmatmul.bf16.gmra.mxu0 %v2467
    %v2568 = vpop.f32.mrf.mxu0
    %v2569 = vadd.f32 %v2556, %v2568
    %v2570 = vpop.f32.mrf.mxu0
    %2571 = vdwg.mxu0
    %v2572 = vxor.u32 %v2491, 2147483648
    %v2573 = vmul.f32 %v2572, 1.442695
    %v2574 = vpow.pop %v2573
    %v2575 = vadd.f32 %v2574, 1.0
    %v2576 = vrcp.pop %v2575
    %v2577 = vmul.f32 %v2575, %v2576
    %v2578 = vsub.f32 1.0, %v2577
    %v2579 = vmul.f32 %v2576, %v2578
    %v2580 = vadd.f32 %v2576, %v2579
    %vm2581 = vweird.f32 %v2575
    %vm2582 = vweird.f32 %v2576
    %vm2583 = vmor %vm2581, %vm2582
    %v2584 = vsel %vm2583, %v2576, %v2580
    %v2585 = vand.u32 2147483647, %v2575
    %vm2586 = vcmp.eq.f32.partialorder %v2585, 8.507059e+37
    %v2587 = vand.u32 %v2575, 2147483648
    %v2588 = vor.u32 1.1754944e-38, %v2587
    %v2589 = vsel %vm2586, %v2588, %v2584
    %v2590 = vmul.f32 1.0, %v2589
    %v2591 = vxor.u32 %v2517, 2147483648
    %v2592 = vmul.f32 %v2591, 1.442695
    %v2593 = vpow.pop %v2592
    %v2594 = vadd.f32 %v2593, 1.0
    %v2595 = vrcp.pop %v2594
    %v2596 = vmul.f32 %v2594, %v2595
    %v2597 = vsub.f32 1.0, %v2596
    %v2598 = vmul.f32 %v2595, %v2597
    %v2599 = vadd.f32 %v2595, %v2598
    %vm2600 = vweird.f32 %v2594
    %vm2601 = vweird.f32 %v2595
    %vm2602 = vmor %vm2600, %vm2601
    %v2603 = vsel %vm2602, %v2595, %v2599
    %v2604 = vand.u32 2147483647, %v2594
    %vm2605 = vcmp.eq.f32.partialorder %v2604, 8.507059e+37
    %v2606 = vand.u32 %v2594, 2147483648
    %v2607 = vor.u32 1.1754944e-38, %v2606
    %v2608 = vsel %vm2605, %v2607, %v2603
    %v2609 = vmul.f32 1.0, %v2608
    %v2610 = vtanh.pop %v2543
    %v2611 = vxor.u32 %v2569, 2147483648
    %v2612 = vmul.f32 %v2611, 1.442695
    %v2613 = vpow.pop %v2612
    %v2614 = vadd.f32 %v2613, 1.0
    %v2615 = vrcp.pop %v2614
    %v2616 = vmul.f32 %v2614, %v2615
    %v2617 = vsub.f32 1.0, %v2616
    %v2618 = vmul.f32 %v2615, %v2617
    %v2619 = vadd.f32 %v2615, %v2618
    %vm2620 = vweird.f32 %v2614
    %vm2621 = vweird.f32 %v2615
    %vm2622 = vmor %vm2620, %vm2621
    %v2623 = vsel %vm2622, %v2615, %v2619
    %v2624 = vand.u32 2147483647, %v2614
    %vm2625 = vcmp.eq.f32.partialorder %v2624, 8.507059e+37
    %v2626 = vand.u32 %v2614, 2147483648
    %v2627 = vor.u32 1.1754944e-38, %v2626
    %v2628 = vsel %vm2625, %v2627, %v2623
    %v2629 = vmul.f32 1.0, %v2628
    %v2630 = vmul.f32 %v2609, %v2249
    %v2631 = vmul.f32 %v2590, %v2610
    %v2632 = vadd.f32 %v2630, %v2631
    %v2633 = vtanh.pop %v2632
    %v2634 = vmul.f32 %v2629, %v2633
    %v2635 = vpack.c.bf16 %v2634, %v2634
    %2636 = vmatpush.bf16.msra.mxu0 %v819
    %2637 = vmatpush.bf16.msra.mxu0 %v818
    %2638 = vmatpush.bf16.msra.mxu0 %v817
    %2639 = vmatpush.bf16.msra.mxu0 %v816
    %2640 = vmatpush.bf16.msra.mxu0 %v815
    %2641 = vmatpush.bf16.msra.mxu0 %v814
    %2642 = vmatpush.bf16.msra.mxu0 %v813
    %2643 = vmatpush.bf16.msra.mxu0 %v812
    %2644 = vmatmul.bf16.gmra.mxu0 %v2635
    %v2645 = vpop.f32.mrf.mxu0
    %v2646 = vadd.f32 %v778, %v2645
    %v2647 = vpop.f32.mrf.mxu0
    %2648 = vdwg.mxu0
    %v2650 = vrot.slane %v2646, 1
    %v2651 = vperm.slane %v2646, 0
    %v2652 = vperm.slane %v2650, 0
    %v2655 = vadd.f32 %v2651, %v263
    %v2656 = vadd.f32 %v2652, %v265
    %v2657 = vtanh.pop %v2655
    %v2658 = vtanh.pop %v2656
    %v2659 = vmul.f32 %v2657, %v852
    %v2660 = vmul.f32 %v2658, %v852
    %2661 = vadd.xlane.f32.xlu0 %v2659
    %v2662 = vpop.xlane.xlu0 %2661
    %2663 = vadd.xlane.f32.xlu0 %v2660
    %v2664 = vpop.xlane.xlu0 %2663
    %vm2665 = vcmp.eq.f32.partialorder %v2423, 0.0
    %v2668 = vperm.slane %v2662, %v270
    %v2669 = vperm.slane %v2664, %v270
    %v2670 = vsel %vm867, %v2669, %v2668
    %v2672 = vsel %vm2665, -1e+30, %v2670
    %v2673 = vsel %vm271, %v2672, -inf
    %2674 = vmax.xlane.f32.xlu0 %v2673
    %v2675 = vpop.xlane.xlu0 %2674
    %v2676 = vsub.f32 %v2672, %v2675
    %v2677 = vmul.f32 %v2676, 1.442695
    %v2678 = vpow.pop %v2677
    %v2679 = vsel %vm271, %v2678, 0.0
    %2680 = vadd.xlane.f32.xlu0 %v2679
    %v2681 = vpop.xlane.xlu0 %2680
    %v2682 = vrcp.pop %v2681
    %v2683 = vmul.f32 %v2678, %v2682
    %v2685 = vrot.slane %v2683, 1
    %v2687 = vpack.c.bf16 %v2683, %v2683
    %v2688 = vpack.c.bf16 %v2685, %v2685
    %v2690 = vsel %vm918, %v2687, 0
    %2692 = vmatpush.bf16.msra.mxu0 0
    %2693 = vmatpush.bf16.msra.mxu0 0
    %2694 = vmatpush.bf16.msra.mxu0 0
    %2695 = vmatpush.bf16.msra.mxu0 0
    %2696 = vmatpush.bf16.msra.mxu0 0
    %2697 = vmatpush.bf16.msra.mxu0 0
    %2698 = vmatpush.bf16.msra.mxu0 0
    %2699 = vmatpush.bf16.msra.mxu0 %v924
    %2700 = vmatmul.bf16.gmra.mxu0 %v2690
    %v2701 = vpop.f32.mrf.mxu0
    %v2702 = vadd.f32 0.0, %v2701
    %v2703 = vpop.f32.mrf.mxu0
    %2704 = vdwg.mxu0
    %v2706 = vsel %vm918, %v2688, 0
    %2708 = vmatpush.bf16.msra.mxu0 0
    %2709 = vmatpush.bf16.msra.mxu0 0
    %2710 = vmatpush.bf16.msra.mxu0 0
    %2711 = vmatpush.bf16.msra.mxu0 0
    %2712 = vmatpush.bf16.msra.mxu0 0
    %2713 = vmatpush.bf16.msra.mxu0 0
    %2714 = vmatpush.bf16.msra.mxu0 0
    %2715 = vmatpush.bf16.msra.mxu0 %v952
    %2716 = vmatmul.bf16.gmra.mxu0 %v2706
    %v2717 = vpop.f32.mrf.mxu0
    %v2718 = vadd.f32 0.0, %v2717
    %v2719 = vpop.f32.mrf.mxu0
    %2720 = vdwg.mxu0
    %v2723 = vrot.slane %v2718, 7
    %v2724 = vsel %vm867, %v2723, %v2702
    %v2726 = vpack.c.bf16 %v2724, %v2724
    %2727 = vmatpush.bf16.msra.mxu0 %v1047
    %2728 = vmatpush.bf16.msra.mxu0 %v1046
    %2729 = vmatpush.bf16.msra.mxu0 %v1045
    %2730 = vmatpush.bf16.msra.mxu0 %v1044
    %2731 = vmatpush.bf16.msra.mxu0 %v1043
    %2732 = vmatpush.bf16.msra.mxu0 %v1042
    %2733 = vmatpush.bf16.msra.mxu0 %v1041
    %2734 = vmatpush.bf16.msra.mxu0 %v1040
    %2735 = vmatmul.bf16.gmra.mxu0 %v2726
    %v2736 = vpop.f32.mrf.mxu0
    %v2737 = vadd.f32 %v974, %v2736
    %v2738 = vpop.f32.mrf.mxu0
    %2739 = vdwg.mxu0
    %2740 = vmatpush.bf16.msra.mxu0 %v1055
    %2741 = vmatpush.bf16.msra.mxu0 %v1054
    %2742 = vmatpush.bf16.msra.mxu0 %v1053
    %2743 = vmatpush.bf16.msra.mxu0 %v1052
    %2744 = vmatpush.bf16.msra.mxu0 %v1051
    %2745 = vmatpush.bf16.msra.mxu0 %v1050
    %2746 = vmatpush.bf16.msra.mxu0 %v1049
    %2747 = vmatpush.bf16.msra.mxu0 %v1048
    %2748 = vmatmul.bf16.gmra.mxu0 %v2635
    %v2749 = vpop.f32.mrf.mxu0
    %v2750 = vadd.f32 %v2737, %v2749
    %v2751 = vpop.f32.mrf.mxu0
    %2752 = vdwg.mxu0
    %v2753 = vtanh.pop %v2750
    %v2754 = vadd.f32 %v2683, 1e-08
    %v2755 = vmul.f32 %v2754, %v62
    %v2756 = vsel %vm271, %v2755, 0.0
    %2757 = vadd.xlane.f32.xlu0 %v2756
    %v2758 = vpop.xlane.xlu0 %2757
    %v2759 = vrcp.pop %v2758
    %v2760 = vmul.f32 %v2755, %v2759
    %vm2761 = vcmp.ge.f32.partialorder %v274, 4.0
    %v2762 = vsel %vm2761, 1, 0
    %v2763 = vcvt.s32.f32 %v2762
    %v2764 = vmul.f32 %v2423, %v2763
    %v2765 = vmul.f32 %v2760, %v2764
    %v2766 = vsel %vm271, %v2765, -inf
    %2767 = vmax.xlane.f32.xlu0 %v2766
    %v2768 = vpop.xlane.xlu0 %2767
    %vm2769 = vcmp.eq.f32.partialorder %v2765, %v2768
    %v2770 = vsel %vm2769, %v270, 8
    %v2771 = vsel %vm271, %v2770, 2147483647
    %v2772 = vand.u32 %v2771, 65535
    %v2773 = vshra.s32 %v2771, 16
    %v2774 = vcvt.s32.f32 %v2772
    %v2775 = vcvt.s32.f32 %v2773
    %2776 = vmin.xlane.f32.xlu0 %v2775
    %v2777 = vpop.xlane.xlu0 %2776
    %vm2778 = vcmp.eq.f32.partialorder %v2775, %v2777
    %v2779 = vsel %vm2778, %v2774, inf
    %2780 = vmin.xlane.f32.xlu0 %v2779
    %v2781 = vpop.xlane.xlu0 %2780
    %v2782 = vcvt.f32.s32 %v2781
    %v2783 = vcvt.f32.s32 %v2777
    %v2784 = vshll.u32 %v2783, 16
    %v2785 = vadd.s32 %v2784, %v2782
    %vm2786 = vcmp.eq.s32.totalorder %v270, %v2785
    %v2787 = vsel %vm2786, 1, 0
    %v2788 = vcvt.s32.f32 %v2787
    %v2789 = vadd.f32 %v2765, 1e-08
    %v2790 = vmul.f32 %v2789, %v2788
    %v2791 = vsel %vm271, %v2790, 0.0
    %2792 = vadd.xlane.f32.xlu0 %v2791
    %v2793 = vpop.xlane.xlu0 %2792
    %v2794 = vlog2.pop %v2793
    %v2795 = vmul.f32 %v2794, 0.6931472
    %v2796 = vsel %vm271, %v2789, 0.0
    %2797 = vadd.xlane.f32.xlu0 %v2796
    %v2798 = vpop.xlane.xlu0 %2797
    %v2799 = vlog2.pop %v2798
    %v2800 = vmul.f32 %v2799, 0.6931472
    %v2801 = vsub.f32 %v2795, %v2800
    %vm2802 = vcmask 33824
    %2803 = vst.msk [vmem:[#allocation2] sm:$0x3] %vm2802, %v2801
    %2804 = vst.msk [vmem:[#allocation4] sm:$0x3] %vm2802, %v2785
    %v2805 = vsub.f32 1.0, %v2788
    %v2806 = vmul.f32 %v2423, %v2805
    %v2808 = vrot.slane %v2788, 1
    %v2810 = vpack.c.bf16 %v2788, %v2788
    %v2811 = vpack.c.bf16 %v2808, %v2808
    %v2813 = vsel %vm918, %v2810, 0
    %2815 = vmatpush.bf16.msra.mxu0 0
    %2816 = vmatpush.bf16.msra.mxu0 0
    %2817 = vmatpush.bf16.msra.mxu0 0
    %2818 = vmatpush.bf16.msra.mxu0 0
    %2819 = vmatpush.bf16.msra.mxu0 0
    %2820 = vmatpush.bf16.msra.mxu0 0
    %2821 = vmatpush.bf16.msra.mxu0 0
    %2822 = vmatpush.bf16.msra.mxu0 %v1278
    %2823 = vmatmul.bf16.gmra.mxu0 %v2813
    %v2824 = vpop.f32.mrf.mxu0
    %v2825 = vadd.f32 0.0, %v2824
    %v2826 = vpop.f32.mrf.mxu0
    %2827 = vdwg.mxu0
    %v2829 = vsel %vm918, %v2811, 0
    %2831 = vmatpush.bf16.msra.mxu0 0
    %2832 = vmatpush.bf16.msra.mxu0 0
    %2833 = vmatpush.bf16.msra.mxu0 0
    %2834 = vmatpush.bf16.msra.mxu0 0
    %2835 = vmatpush.bf16.msra.mxu0 0
    %2836 = vmatpush.bf16.msra.mxu0 0
    %2837 = vmatpush.bf16.msra.mxu0 0
    %2838 = vmatpush.bf16.msra.mxu0 %v1297
    %2839 = vmatmul.bf16.gmra.mxu0 %v2829
    %v2840 = vpop.f32.mrf.mxu0
    %v2841 = vadd.f32 0.0, %v2840
    %v2842 = vpop.f32.mrf.mxu0
    %2843 = vdwg.mxu0
    %v2846 = vrot.slane %v2841, 7
    %v2847 = vsel %vm867, %v2846, %v2825
    %v2849 = vpack.c.bf16 %v2847, %v2847
    %v2850 = vpack.c.bf16 %v2753, %v2753
    %2851 = vmatpush.bf16.msra.mxu0 %v509
    %2852 = vmatpush.bf16.msra.mxu0 %v505
    %2853 = vmatpush.bf16.msra.mxu0 %v501
    %2854 = vmatpush.bf16.msra.mxu0 %v497
    %2855 = vmatpush.bf16.msra.mxu0 %v493
    %2856 = vmatpush.bf16.msra.mxu0 %v489
    %2857 = vmatpush.bf16.msra.mxu0 %v485
    %2858 = vmatpush.bf16.msra.mxu0 %v481
    %2859 = vmatmul.bf16.gmra.mxu0 %v2849
    %v2860 = vpop.f32.mrf.mxu0
    %v2861 = vadd.f32 %v281, %v2860
    %v2862 = vpop.f32.mrf.mxu0
    %2863 = vdwg.mxu0
    %2864 = vmatpush.bf16.msra.mxu0 %v541
    %2865 = vmatpush.bf16.msra.mxu0 %v537
    %2866 = vmatpush.bf16.msra.mxu0 %v533
    %2867 = vmatpush.bf16.msra.mxu0 %v529
    %2868 = vmatpush.bf16.msra.mxu0 %v525
    %2869 = vmatpush.bf16.msra.mxu0 %v521
    %2870 = vmatpush.bf16.msra.mxu0 %v517
    %2871 = vmatpush.bf16.msra.mxu0 %v513
    %2872 = vmatmul.bf16.gmra.mxu0 %v2850
    %v2873 = vpop.f32.mrf.mxu0
    %v2874 = vadd.f32 %v2861, %v2873
    %v2875 = vpop.f32.mrf.mxu0
    %2876 = vdwg.mxu0
    %2877 = vmatpush.bf16.msra.mxu0 %v510
    %2878 = vmatpush.bf16.msra.mxu0 %v506
    %2879 = vmatpush.bf16.msra.mxu0 %v502
    %2880 = vmatpush.bf16.msra.mxu0 %v498
    %2881 = vmatpush.bf16.msra.mxu0 %v494
    %2882 = vmatpush.bf16.msra.mxu0 %v490
    %2883 = vmatpush.bf16.msra.mxu0 %v486
    %2884 = vmatpush.bf16.msra.mxu0 %v482
    %2885 = vmatmul.bf16.gmra.mxu0 %v2849
    %v2886 = vpop.f32.mrf.mxu0
    %v2887 = vadd.f32 %v282, %v2886
    %v2888 = vpop.f32.mrf.mxu0
    %2889 = vdwg.mxu0
    %2890 = vmatpush.bf16.msra.mxu0 %v542
    %2891 = vmatpush.bf16.msra.mxu0 %v538
    %2892 = vmatpush.bf16.msra.mxu0 %v534
    %2893 = vmatpush.bf16.msra.mxu0 %v530
    %2894 = vmatpush.bf16.msra.mxu0 %v526
    %2895 = vmatpush.bf16.msra.mxu0 %v522
    %2896 = vmatpush.bf16.msra.mxu0 %v518
    %2897 = vmatpush.bf16.msra.mxu0 %v514
    %2898 = vmatmul.bf16.gmra.mxu0 %v2850
    %v2899 = vpop.f32.mrf.mxu0
    %v2900 = vadd.f32 %v2887, %v2899
    %v2901 = vpop.f32.mrf.mxu0
    %2902 = vdwg.mxu0
    %2903 = vmatpush.bf16.msra.mxu0 %v511
    %2904 = vmatpush.bf16.msra.mxu0 %v507
    %2905 = vmatpush.bf16.msra.mxu0 %v503
    %2906 = vmatpush.bf16.msra.mxu0 %v499
    %2907 = vmatpush.bf16.msra.mxu0 %v495
    %2908 = vmatpush.bf16.msra.mxu0 %v491
    %2909 = vmatpush.bf16.msra.mxu0 %v487
    %2910 = vmatpush.bf16.msra.mxu0 %v483
    %2911 = vmatmul.bf16.gmra.mxu0 %v2849
    %v2912 = vpop.f32.mrf.mxu0
    %v2913 = vadd.f32 %v283, %v2912
    %v2914 = vpop.f32.mrf.mxu0
    %2915 = vdwg.mxu0
    %2916 = vmatpush.bf16.msra.mxu0 %v543
    %2917 = vmatpush.bf16.msra.mxu0 %v539
    %2918 = vmatpush.bf16.msra.mxu0 %v535
    %2919 = vmatpush.bf16.msra.mxu0 %v531
    %2920 = vmatpush.bf16.msra.mxu0 %v527
    %2921 = vmatpush.bf16.msra.mxu0 %v523
    %2922 = vmatpush.bf16.msra.mxu0 %v519
    %2923 = vmatpush.bf16.msra.mxu0 %v515
    %2924 = vmatmul.bf16.gmra.mxu0 %v2850
    %v2925 = vpop.f32.mrf.mxu0
    %v2926 = vadd.f32 %v2913, %v2925
    %v2927 = vpop.f32.mrf.mxu0
    %2928 = vdwg.mxu0
    %2929 = vmatpush.bf16.msra.mxu0 %v512
    %2930 = vmatpush.bf16.msra.mxu0 %v508
    %2931 = vmatpush.bf16.msra.mxu0 %v504
    %2932 = vmatpush.bf16.msra.mxu0 %v500
    %2933 = vmatpush.bf16.msra.mxu0 %v496
    %2934 = vmatpush.bf16.msra.mxu0 %v492
    %2935 = vmatpush.bf16.msra.mxu0 %v488
    %2936 = vmatpush.bf16.msra.mxu0 %v484
    %2937 = vmatmul.bf16.gmra.mxu0 %v2849
    %v2938 = vpop.f32.mrf.mxu0
    %v2939 = vadd.f32 %v284, %v2938
    %v2940 = vpop.f32.mrf.mxu0
    %2941 = vdwg.mxu0
    %2942 = vmatpush.bf16.msra.mxu0 %v544
    %2943 = vmatpush.bf16.msra.mxu0 %v540
    %2944 = vmatpush.bf16.msra.mxu0 %v536
    %2945 = vmatpush.bf16.msra.mxu0 %v532
    %2946 = vmatpush.bf16.msra.mxu0 %v528
    %2947 = vmatpush.bf16.msra.mxu0 %v524
    %2948 = vmatpush.bf16.msra.mxu0 %v520
    %2949 = vmatpush.bf16.msra.mxu0 %v516
    %2950 = vmatmul.bf16.gmra.mxu0 %v2850
    %v2951 = vpop.f32.mrf.mxu0
    %v2952 = vadd.f32 %v2939, %v2951
    %v2953 = vpop.f32.mrf.mxu0
    %2954 = vdwg.mxu0
    %v2955 = vxor.u32 %v2874, 2147483648
    %v2956 = vmul.f32 %v2955, 1.442695
    %v2957 = vpow.pop %v2956
    %v2958 = vadd.f32 %v2957, 1.0
    %v2959 = vrcp.pop %v2958
    %v2960 = vmul.f32 %v2958, %v2959
    %v2961 = vsub.f32 1.0, %v2960
    %v2962 = vmul.f32 %v2959, %v2961
    %v2963 = vadd.f32 %v2959, %v2962
    %vm2964 = vweird.f32 %v2958
    %vm2965 = vweird.f32 %v2959
    %vm2966 = vmor %vm2964, %vm2965
    %v2967 = vsel %vm2966, %v2959, %v2963
    %v2968 = vand.u32 2147483647, %v2958
    %vm2969 = vcmp.eq.f32.partialorder %v2968, 8.507059e+37
    %v2970 = vand.u32 %v2958, 2147483648
    %v2971 = vor.u32 1.1754944e-38, %v2970
    %v2972 = vsel %vm2969, %v2971, %v2967
    %v2973 = vmul.f32 1.0, %v2972
    %v2974 = vxor.u32 %v2900, 2147483648
    %v2975 = vmul.f32 %v2974, 1.442695
    %v2976 = vpow.pop %v2975
    %v2977 = vadd.f32 %v2976, 1.0
    %v2978 = vrcp.pop %v2977
    %v2979 = vmul.f32 %v2977, %v2978
    %v2980 = vsub.f32 1.0, %v2979
    %v2981 = vmul.f32 %v2978, %v2980
    %v2982 = vadd.f32 %v2978, %v2981
    %vm2983 = vweird.f32 %v2977
    %vm2984 = vweird.f32 %v2978
    %vm2985 = vmor %vm2983, %vm2984
    %v2986 = vsel %vm2985, %v2978, %v2982
    %v2987 = vand.u32 2147483647, %v2977
    %vm2988 = vcmp.eq.f32.partialorder %v2987, 8.507059e+37
    %v2989 = vand.u32 %v2977, 2147483648
    %v2990 = vor.u32 1.1754944e-38, %v2989
    %v2991 = vsel %vm2988, %v2990, %v2986
    %v2992 = vmul.f32 1.0, %v2991
    %v2993 = vtanh.pop %v2926
    %v2994 = vxor.u32 %v2952, 2147483648
    %v2995 = vmul.f32 %v2994, 1.442695
    %v2996 = vpow.pop %v2995
    %v2997 = vadd.f32 %v2996, 1.0
    %v2998 = vrcp.pop %v2997
    %v2999 = vmul.f32 %v2997, %v2998
    %v3000 = vsub.f32 1.0, %v2999
    %v3001 = vmul.f32 %v2998, %v3000
    %v3002 = vadd.f32 %v2998, %v3001
    %vm3003 = vweird.f32 %v2997
    %vm3004 = vweird.f32 %v2998
    %vm3005 = vmor %vm3003, %vm3004
    %v3006 = vsel %vm3005, %v2998, %v3002
    %v3007 = vand.u32 2147483647, %v2997
    %vm3008 = vcmp.eq.f32.partialorder %v3007, 8.507059e+37
    %v3009 = vand.u32 %v2997, 2147483648
    %v3010 = vor.u32 1.1754944e-38, %v3009
    %v3011 = vsel %vm3008, %v3010, %v3006
    %v3012 = vmul.f32 1.0, %v3011
    %v3013 = vmul.f32 %v2992, %v2632
    %v3014 = vmul.f32 %v2973, %v2993
    %v3015 = vadd.f32 %v3013, %v3014
    %v3016 = vtanh.pop %v3015
    %v3017 = vmul.f32 %v3012, %v3016
    %v3018 = vpack.c.bf16 %v3017, %v3017
    %3019 = vmatpush.bf16.msra.mxu0 %v819
    %3020 = vmatpush.bf16.msra.mxu0 %v818
    %3021 = vmatpush.bf16.msra.mxu0 %v817
    %3022 = vmatpush.bf16.msra.mxu0 %v816
    %3023 = vmatpush.bf16.msra.mxu0 %v815
    %3024 = vmatpush.bf16.msra.mxu0 %v814
    %3025 = vmatpush.bf16.msra.mxu0 %v813
    %3026 = vmatpush.bf16.msra.mxu0 %v812
    %3027 = vmatmul.bf16.gmra.mxu0 %v3018
    %v3028 = vpop.f32.mrf.mxu0
    %v3029 = vadd.f32 %v778, %v3028
    %v3030 = vpop.f32.mrf.mxu0
    %3031 = vdwg.mxu0
    %v3033 = vrot.slane %v3029, 1
    %v3034 = vperm.slane %v3029, 0
    %v3035 = vperm.slane %v3033, 0
    %v3038 = vadd.f32 %v3034, %v263
    %v3039 = vadd.f32 %v3035, %v265
    %v3040 = vtanh.pop %v3038
    %v3041 = vtanh.pop %v3039
    %v3042 = vmul.f32 %v3040, %v852
    %v3043 = vmul.f32 %v3041, %v852
    %3044 = vadd.xlane.f32.xlu0 %v3042
    %v3045 = vpop.xlane.xlu0 %3044
    %3046 = vadd.xlane.f32.xlu0 %v3043
    %v3047 = vpop.xlane.xlu0 %3046
    %vm3048 = vcmp.eq.f32.partialorder %v2806, 0.0
    %v3051 = vperm.slane %v3045, %v270
    %v3052 = vperm.slane %v3047, %v270
    %v3053 = vsel %vm867, %v3052, %v3051
    %v3055 = vsel %vm3048, -1e+30, %v3053
    %v3056 = vsel %vm271, %v3055, -inf
    %3057 = vmax.xlane.f32.xlu0 %v3056
    %v3058 = vpop.xlane.xlu0 %3057
    %v3059 = vsub.f32 %v3055, %v3058
    %v3060 = vmul.f32 %v3059, 1.442695
    %v3061 = vpow.pop %v3060
    %v3062 = vsel %vm271, %v3061, 0.0
    %3063 = vadd.xlane.f32.xlu0 %v3062
    %v3064 = vpop.xlane.xlu0 %3063
    %v3065 = vrcp.pop %v3064
    %v3066 = vmul.f32 %v3061, %v3065
    %v3068 = vrot.slane %v3066, 1
    %v3070 = vpack.c.bf16 %v3066, %v3066
    %v3071 = vpack.c.bf16 %v3068, %v3068
    %v3073 = vsel %vm918, %v3070, 0
    %3075 = vmatpush.bf16.msra.mxu0 0
    %3076 = vmatpush.bf16.msra.mxu0 0
    %3077 = vmatpush.bf16.msra.mxu0 0
    %3078 = vmatpush.bf16.msra.mxu0 0
    %3079 = vmatpush.bf16.msra.mxu0 0
    %3080 = vmatpush.bf16.msra.mxu0 0
    %3081 = vmatpush.bf16.msra.mxu0 0
    %3082 = vmatpush.bf16.msra.mxu0 %v924
    %3083 = vmatmul.bf16.gmra.mxu0 %v3073
    %v3084 = vpop.f32.mrf.mxu0
    %v3085 = vadd.f32 0.0, %v3084
    %v3086 = vpop.f32.mrf.mxu0
    %3087 = vdwg.mxu0
    %v3089 = vsel %vm918, %v3071, 0
    %3091 = vmatpush.bf16.msra.mxu0 0
    %3092 = vmatpush.bf16.msra.mxu0 0
    %3093 = vmatpush.bf16.msra.mxu0 0
    %3094 = vmatpush.bf16.msra.mxu0 0
    %3095 = vmatpush.bf16.msra.mxu0 0
    %3096 = vmatpush.bf16.msra.mxu0 0
    %3097 = vmatpush.bf16.msra.mxu0 0
    %3098 = vmatpush.bf16.msra.mxu0 %v952
    %3099 = vmatmul.bf16.gmra.mxu0 %v3089
    %v3100 = vpop.f32.mrf.mxu0
    %v3101 = vadd.f32 0.0, %v3100
    %v3102 = vpop.f32.mrf.mxu0
    %3103 = vdwg.mxu0
    %v3106 = vrot.slane %v3101, 7
    %v3107 = vsel %vm867, %v3106, %v3085
    %v3109 = vpack.c.bf16 %v3107, %v3107
    %3110 = vmatpush.bf16.msra.mxu0 %v1047
    %3111 = vmatpush.bf16.msra.mxu0 %v1046
    %3112 = vmatpush.bf16.msra.mxu0 %v1045
    %3113 = vmatpush.bf16.msra.mxu0 %v1044
    %3114 = vmatpush.bf16.msra.mxu0 %v1043
    %3115 = vmatpush.bf16.msra.mxu0 %v1042
    %3116 = vmatpush.bf16.msra.mxu0 %v1041
    %3117 = vmatpush.bf16.msra.mxu0 %v1040
    %3118 = vmatmul.bf16.gmra.mxu0 %v3109
    %v3119 = vpop.f32.mrf.mxu0
    %v3120 = vadd.f32 %v974, %v3119
    %v3121 = vpop.f32.mrf.mxu0
    %3122 = vdwg.mxu0
    %3123 = vmatpush.bf16.msra.mxu0 %v1055
    %3124 = vmatpush.bf16.msra.mxu0 %v1054
    %3125 = vmatpush.bf16.msra.mxu0 %v1053
    %3126 = vmatpush.bf16.msra.mxu0 %v1052
    %3127 = vmatpush.bf16.msra.mxu0 %v1051
    %3128 = vmatpush.bf16.msra.mxu0 %v1050
    %3129 = vmatpush.bf16.msra.mxu0 %v1049
    %3130 = vmatpush.bf16.msra.mxu0 %v1048
    %3131 = vmatmul.bf16.gmra.mxu0 %v3018
    %v3132 = vpop.f32.mrf.mxu0
    %v3133 = vadd.f32 %v3120, %v3132
    %v3134 = vpop.f32.mrf.mxu0
    %3135 = vdwg.mxu0
    %v3136 = vtanh.pop %v3133
    %v3137 = vadd.f32 %v3066, 1e-08
    %v3138 = vmul.f32 %v3137, %v62
    %v3139 = vsel %vm271, %v3138, 0.0
    %3140 = vadd.xlane.f32.xlu0 %v3139
    %v3141 = vpop.xlane.xlu0 %3140
    %v3142 = vrcp.pop %v3141
    %v3143 = vmul.f32 %v3138, %v3142
    %vm3144 = vcmp.ge.f32.partialorder %v274, 5.0
    %v3145 = vsel %vm3144, 1, 0
    %v3146 = vcvt.s32.f32 %v3145
    %v3147 = vmul.f32 %v2806, %v3146
    %v3148 = vmul.f32 %v3143, %v3147
    %v3149 = vsel %vm271, %v3148, -inf
    %3150 = vmax.xlane.f32.xlu0 %v3149
    %v3151 = vpop.xlane.xlu0 %3150
    %vm3152 = vcmp.eq.f32.partialorder %v3148, %v3151
    %v3153 = vsel %vm3152, %v270, 8
    %v3154 = vsel %vm271, %v3153, 2147483647
    %v3155 = vand.u32 %v3154, 65535
    %v3156 = vshra.s32 %v3154, 16
    %v3157 = vcvt.s32.f32 %v3155
    %v3158 = vcvt.s32.f32 %v3156
    %3159 = vmin.xlane.f32.xlu0 %v3158
    %v3160 = vpop.xlane.xlu0 %3159
    %vm3161 = vcmp.eq.f32.partialorder %v3158, %v3160
    %v3162 = vsel %vm3161, %v3157, inf
    %3163 = vmin.xlane.f32.xlu0 %v3162
    %v3164 = vpop.xlane.xlu0 %3163
    %v3165 = vcvt.f32.s32 %v3164
    %v3166 = vcvt.f32.s32 %v3160
    %v3167 = vshll.u32 %v3166, 16
    %v3168 = vadd.s32 %v3167, %v3165
    %vm3169 = vcmp.eq.s32.totalorder %v270, %v3168
    %v3170 = vsel %vm3169, 1, 0
    %v3171 = vcvt.s32.f32 %v3170
    %v3172 = vadd.f32 %v3148, 1e-08
    %v3173 = vmul.f32 %v3172, %v3171
    %v3174 = vsel %vm271, %v3173, 0.0
    %3175 = vadd.xlane.f32.xlu0 %v3174
    %v3176 = vpop.xlane.xlu0 %3175
    %v3177 = vlog2.pop %v3176
    %v3178 = vmul.f32 %v3177, 0.6931472
    %v3179 = vsel %vm271, %v3172, 0.0
    %3180 = vadd.xlane.f32.xlu0 %v3179
    %v3181 = vpop.xlane.xlu0 %3180
    %v3182 = vlog2.pop %v3181
    %v3183 = vmul.f32 %v3182, 0.6931472
    %v3184 = vsub.f32 %v3178, %v3183
    %vm3185 = vcmask 42024
    %3186 = vst.msk [vmem:[#allocation2] sm:$0x3] %vm3185, %v3184
    %3187 = vst.msk [vmem:[#allocation4] sm:$0x3] %vm3185, %v3168
    %v3188 = vsub.f32 1.0, %v3171
    %v3189 = vmul.f32 %v2806, %v3188
    %v3191 = vrot.slane %v3171, 1
    %v3193 = vpack.c.bf16 %v3171, %v3171
    %v3194 = vpack.c.bf16 %v3191, %v3191
    %v3196 = vsel %vm918, %v3193, 0
    %3198 = vmatpush.bf16.msra.mxu0 0
    %3199 = vmatpush.bf16.msra.mxu0 0
    %3200 = vmatpush.bf16.msra.mxu0 0
    %3201 = vmatpush.bf16.msra.mxu0 0
    %3202 = vmatpush.bf16.msra.mxu0 0
    %3203 = vmatpush.bf16.msra.mxu0 0
    %3204 = vmatpush.bf16.msra.mxu0 0
    %3205 = vmatpush.bf16.msra.mxu0 %v1278
    %3206 = vmatmul.bf16.gmra.mxu0 %v3196
    %v3207 = vpop.f32.mrf.mxu0
    %v3208 = vadd.f32 0.0, %v3207
    %v3209 = vpop.f32.mrf.mxu0
    %3210 = vdwg.mxu0
    %v3212 = vsel %vm918, %v3194, 0
    %3214 = vmatpush.bf16.msra.mxu0 0
    %3215 = vmatpush.bf16.msra.mxu0 0
    %3216 = vmatpush.bf16.msra.mxu0 0
    %3217 = vmatpush.bf16.msra.mxu0 0
    %3218 = vmatpush.bf16.msra.mxu0 0
    %3219 = vmatpush.bf16.msra.mxu0 0
    %3220 = vmatpush.bf16.msra.mxu0 0
    %3221 = vmatpush.bf16.msra.mxu0 %v1297
    %3222 = vmatmul.bf16.gmra.mxu0 %v3212
    %v3223 = vpop.f32.mrf.mxu0
    %v3224 = vadd.f32 0.0, %v3223
    %v3225 = vpop.f32.mrf.mxu0
    %3226 = vdwg.mxu0
    %v3229 = vrot.slane %v3224, 7
    %v3230 = vsel %vm867, %v3229, %v3208
    %v3232 = vpack.c.bf16 %v3230, %v3230
    %v3233 = vpack.c.bf16 %v3136, %v3136
    %3234 = vmatpush.bf16.msra.mxu0 %v509
    %3235 = vmatpush.bf16.msra.mxu0 %v505
    %3236 = vmatpush.bf16.msra.mxu0 %v501
    %3237 = vmatpush.bf16.msra.mxu0 %v497
    %3238 = vmatpush.bf16.msra.mxu0 %v493
    %3239 = vmatpush.bf16.msra.mxu0 %v489
    %3240 = vmatpush.bf16.msra.mxu0 %v485
    %3241 = vmatpush.bf16.msra.mxu0 %v481
    %3242 = vmatmul.bf16.gmra.mxu0 %v3232
    %v3243 = vpop.f32.mrf.mxu0
    %v3244 = vadd.f32 %v281, %v3243
    %v3245 = vpop.f32.mrf.mxu0
    %3246 = vdwg.mxu0
    %3247 = vmatpush.bf16.msra.mxu0 %v541
    %3248 = vmatpush.bf16.msra.mxu0 %v537
    %3249 = vmatpush.bf16.msra.mxu0 %v533
    %3250 = vmatpush.bf16.msra.mxu0 %v529
    %3251 = vmatpush.bf16.msra.mxu0 %v525
    %3252 = vmatpush.bf16.msra.mxu0 %v521
    %3253 = vmatpush.bf16.msra.mxu0 %v517
    %3254 = vmatpush.bf16.msra.mxu0 %v513
    %3255 = vmatmul.bf16.gmra.mxu0 %v3233
    %v3256 = vpop.f32.mrf.mxu0
    %v3257 = vadd.f32 %v3244, %v3256
    %v3258 = vpop.f32.mrf.mxu0
    %3259 = vdwg.mxu0
    %3260 = vmatpush.bf16.msra.mxu0 %v510
    %3261 = vmatpush.bf16.msra.mxu0 %v506
    %3262 = vmatpush.bf16.msra.mxu0 %v502
    %3263 = vmatpush.bf16.msra.mxu0 %v498
    %3264 = vmatpush.bf16.msra.mxu0 %v494
    %3265 = vmatpush.bf16.msra.mxu0 %v490
    %3266 = vmatpush.bf16.msra.mxu0 %v486
    %3267 = vmatpush.bf16.msra.mxu0 %v482
    %3268 = vmatmul.bf16.gmra.mxu0 %v3232
    %v3269 = vpop.f32.mrf.mxu0
    %v3270 = vadd.f32 %v282, %v3269
    %v3271 = vpop.f32.mrf.mxu0
    %3272 = vdwg.mxu0
    %3273 = vmatpush.bf16.msra.mxu0 %v542
    %3274 = vmatpush.bf16.msra.mxu0 %v538
    %3275 = vmatpush.bf16.msra.mxu0 %v534
    %3276 = vmatpush.bf16.msra.mxu0 %v530
    %3277 = vmatpush.bf16.msra.mxu0 %v526
    %3278 = vmatpush.bf16.msra.mxu0 %v522
    %3279 = vmatpush.bf16.msra.mxu0 %v518
    %3280 = vmatpush.bf16.msra.mxu0 %v514
    %3281 = vmatmul.bf16.gmra.mxu0 %v3233
    %v3282 = vpop.f32.mrf.mxu0
    %v3283 = vadd.f32 %v3270, %v3282
    %v3284 = vpop.f32.mrf.mxu0
    %3285 = vdwg.mxu0
    %3286 = vmatpush.bf16.msra.mxu0 %v511
    %3287 = vmatpush.bf16.msra.mxu0 %v507
    %3288 = vmatpush.bf16.msra.mxu0 %v503
    %3289 = vmatpush.bf16.msra.mxu0 %v499
    %3290 = vmatpush.bf16.msra.mxu0 %v495
    %3291 = vmatpush.bf16.msra.mxu0 %v491
    %3292 = vmatpush.bf16.msra.mxu0 %v487
    %3293 = vmatpush.bf16.msra.mxu0 %v483
    %3294 = vmatmul.bf16.gmra.mxu0 %v3232
    %v3295 = vpop.f32.mrf.mxu0
    %v3296 = vadd.f32 %v283, %v3295
    %v3297 = vpop.f32.mrf.mxu0
    %3298 = vdwg.mxu0
    %3299 = vmatpush.bf16.msra.mxu0 %v543
    %3300 = vmatpush.bf16.msra.mxu0 %v539
    %3301 = vmatpush.bf16.msra.mxu0 %v535
    %3302 = vmatpush.bf16.msra.mxu0 %v531
    %3303 = vmatpush.bf16.msra.mxu0 %v527
    %3304 = vmatpush.bf16.msra.mxu0 %v523
    %3305 = vmatpush.bf16.msra.mxu0 %v519
    %3306 = vmatpush.bf16.msra.mxu0 %v515
    %3307 = vmatmul.bf16.gmra.mxu0 %v3233
    %v3308 = vpop.f32.mrf.mxu0
    %v3309 = vadd.f32 %v3296, %v3308
    %v3310 = vpop.f32.mrf.mxu0
    %3311 = vdwg.mxu0
    %3312 = vmatpush.bf16.msra.mxu0 %v512
    %3313 = vmatpush.bf16.msra.mxu0 %v508
    %3314 = vmatpush.bf16.msra.mxu0 %v504
    %3315 = vmatpush.bf16.msra.mxu0 %v500
    %3316 = vmatpush.bf16.msra.mxu0 %v496
    %3317 = vmatpush.bf16.msra.mxu0 %v492
    %3318 = vmatpush.bf16.msra.mxu0 %v488
    %3319 = vmatpush.bf16.msra.mxu0 %v484
    %3320 = vmatmul.bf16.gmra.mxu0 %v3232
    %v3321 = vpop.f32.mrf.mxu0
    %v3322 = vadd.f32 %v284, %v3321
    %v3323 = vpop.f32.mrf.mxu0
    %3324 = vdwg.mxu0
    %3325 = vmatpush.bf16.msra.mxu0 %v544
    %3326 = vmatpush.bf16.msra.mxu0 %v540
    %3327 = vmatpush.bf16.msra.mxu0 %v536
    %3328 = vmatpush.bf16.msra.mxu0 %v532
    %3329 = vmatpush.bf16.msra.mxu0 %v528
    %3330 = vmatpush.bf16.msra.mxu0 %v524
    %3331 = vmatpush.bf16.msra.mxu0 %v520
    %3332 = vmatpush.bf16.msra.mxu0 %v516
    %3333 = vmatmul.bf16.gmra.mxu0 %v3233
    %v3334 = vpop.f32.mrf.mxu0
    %v3335 = vadd.f32 %v3322, %v3334
    %v3336 = vpop.f32.mrf.mxu0
    %3337 = vdwg.mxu0
    %v3338 = vxor.u32 %v3257, 2147483648
    %v3339 = vmul.f32 %v3338, 1.442695
    %v3340 = vpow.pop %v3339
    %v3341 = vadd.f32 %v3340, 1.0
    %v3342 = vrcp.pop %v3341
    %v3343 = vmul.f32 %v3341, %v3342
    %v3344 = vsub.f32 1.0, %v3343
    %v3345 = vmul.f32 %v3342, %v3344
    %v3346 = vadd.f32 %v3342, %v3345
    %vm3347 = vweird.f32 %v3341
    %vm3348 = vweird.f32 %v3342
    %vm3349 = vmor %vm3347, %vm3348
    %v3350 = vsel %vm3349, %v3342, %v3346
    %v3351 = vand.u32 2147483647, %v3341
    %vm3352 = vcmp.eq.f32.partialorder %v3351, 8.507059e+37
    %v3353 = vand.u32 %v3341, 2147483648
    %v3354 = vor.u32 1.1754944e-38, %v3353
    %v3355 = vsel %vm3352, %v3354, %v3350
    %v3356 = vmul.f32 1.0, %v3355
    %v3357 = vxor.u32 %v3283, 2147483648
    %v3358 = vmul.f32 %v3357, 1.442695
    %v3359 = vpow.pop %v3358
    %v3360 = vadd.f32 %v3359, 1.0
    %v3361 = vrcp.pop %v3360
    %v3362 = vmul.f32 %v3360, %v3361
    %v3363 = vsub.f32 1.0, %v3362
    %v3364 = vmul.f32 %v3361, %v3363
    %v3365 = vadd.f32 %v3361, %v3364
    %vm3366 = vweird.f32 %v3360
    %vm3367 = vweird.f32 %v3361
    %vm3368 = vmor %vm3366, %vm3367
    %v3369 = vsel %vm3368, %v3361, %v3365
    %v3370 = vand.u32 2147483647, %v3360
    %vm3371 = vcmp.eq.f32.partialorder %v3370, 8.507059e+37
    %v3372 = vand.u32 %v3360, 2147483648
    %v3373 = vor.u32 1.1754944e-38, %v3372
    %v3374 = vsel %vm3371, %v3373, %v3369
    %v3375 = vmul.f32 1.0, %v3374
    %v3376 = vtanh.pop %v3309
    %v3377 = vxor.u32 %v3335, 2147483648
    %v3378 = vmul.f32 %v3377, 1.442695
    %v3379 = vpow.pop %v3378
    %v3380 = vadd.f32 %v3379, 1.0
    %v3381 = vrcp.pop %v3380
    %v3382 = vmul.f32 %v3380, %v3381
    %v3383 = vsub.f32 1.0, %v3382
    %v3384 = vmul.f32 %v3381, %v3383
    %v3385 = vadd.f32 %v3381, %v3384
    %vm3386 = vweird.f32 %v3380
    %vm3387 = vweird.f32 %v3381
    %vm3388 = vmor %vm3386, %vm3387
    %v3389 = vsel %vm3388, %v3381, %v3385
    %v3390 = vand.u32 2147483647, %v3380
    %vm3391 = vcmp.eq.f32.partialorder %v3390, 8.507059e+37
    %v3392 = vand.u32 %v3380, 2147483648
    %v3393 = vor.u32 1.1754944e-38, %v3392
    %v3394 = vsel %vm3391, %v3393, %v3389
    %v3395 = vmul.f32 1.0, %v3394
    %v3396 = vmul.f32 %v3375, %v3015
    %v3397 = vmul.f32 %v3356, %v3376
    %v3398 = vadd.f32 %v3396, %v3397
    %v3399 = vtanh.pop %v3398
    %v3400 = vmul.f32 %v3395, %v3399
    %v3401 = vpack.c.bf16 %v3400, %v3400
    %3402 = vmatpush.bf16.msra.mxu0 %v819
    %3403 = vmatpush.bf16.msra.mxu0 %v818
    %3404 = vmatpush.bf16.msra.mxu0 %v817
    %3405 = vmatpush.bf16.msra.mxu0 %v816
    %3406 = vmatpush.bf16.msra.mxu0 %v815
    %3407 = vmatpush.bf16.msra.mxu0 %v814
    %3408 = vmatpush.bf16.msra.mxu0 %v813
    %3409 = vmatpush.bf16.msra.mxu0 %v812
    %3410 = vmatmul.bf16.gmra.mxu0 %v3401
    %v3411 = vpop.f32.mrf.mxu0
    %v3412 = vadd.f32 %v778, %v3411
    %v3413 = vpop.f32.mrf.mxu0
    %3414 = vdwg.mxu0
    %v3416 = vrot.slane %v3412, 1
    %v3417 = vperm.slane %v3412, 0
    %v3418 = vperm.slane %v3416, 0
    %v3421 = vadd.f32 %v3417, %v263
    %v3422 = vadd.f32 %v3418, %v265
    %v3423 = vtanh.pop %v3421
    %v3424 = vtanh.pop %v3422
    %v3425 = vmul.f32 %v3423, %v852
    %v3426 = vmul.f32 %v3424, %v852
    %3427 = vadd.xlane.f32.xlu0 %v3425
    %v3428 = vpop.xlane.xlu0 %3427
    %3429 = vadd.xlane.f32.xlu0 %v3426
    %v3430 = vpop.xlane.xlu0 %3429
    %vm3431 = vcmp.eq.f32.partialorder %v3189, 0.0
    %v3434 = vperm.slane %v3428, %v270
    %v3435 = vperm.slane %v3430, %v270
    %v3436 = vsel %vm867, %v3435, %v3434
    %v3438 = vsel %vm3431, -1e+30, %v3436
    %v3439 = vsel %vm271, %v3438, -inf
    %3440 = vmax.xlane.f32.xlu0 %v3439
    %v3441 = vpop.xlane.xlu0 %3440
    %v3442 = vsub.f32 %v3438, %v3441
    %v3443 = vmul.f32 %v3442, 1.442695
    %v3444 = vpow.pop %v3443
    %v3445 = vsel %vm271, %v3444, 0.0
    %3446 = vadd.xlane.f32.xlu0 %v3445
    %v3447 = vpop.xlane.xlu0 %3446
    %v3448 = vrcp.pop %v3447
    %v3449 = vmul.f32 %v3444, %v3448
    %v3451 = vrot.slane %v3449, 1
    %v3453 = vpack.c.bf16 %v3449, %v3449
    %v3454 = vpack.c.bf16 %v3451, %v3451
    %v3456 = vsel %vm918, %v3453, 0
    %3458 = vmatpush.bf16.msra.mxu0 0
    %3459 = vmatpush.bf16.msra.mxu0 0
    %3460 = vmatpush.bf16.msra.mxu0 0
    %3461 = vmatpush.bf16.msra.mxu0 0
    %3462 = vmatpush.bf16.msra.mxu0 0
    %3463 = vmatpush.bf16.msra.mxu0 0
    %3464 = vmatpush.bf16.msra.mxu0 0
    %3465 = vmatpush.bf16.msra.mxu0 %v924
    %3466 = vmatmul.bf16.gmra.mxu0 %v3456
    %v3467 = vpop.f32.mrf.mxu0
    %v3468 = vadd.f32 0.0, %v3467
    %v3469 = vpop.f32.mrf.mxu0
    %3470 = vdwg.mxu0
    %v3472 = vsel %vm918, %v3454, 0
    %3474 = vmatpush.bf16.msra.mxu0 0
    %3475 = vmatpush.bf16.msra.mxu0 0
    %3476 = vmatpush.bf16.msra.mxu0 0
    %3477 = vmatpush.bf16.msra.mxu0 0
    %3478 = vmatpush.bf16.msra.mxu0 0
    %3479 = vmatpush.bf16.msra.mxu0 0
    %3480 = vmatpush.bf16.msra.mxu0 0
    %3481 = vmatpush.bf16.msra.mxu0 %v952
    %3482 = vmatmul.bf16.gmra.mxu0 %v3472
    %v3483 = vpop.f32.mrf.mxu0
    %v3484 = vadd.f32 0.0, %v3483
    %v3485 = vpop.f32.mrf.mxu0
    %3486 = vdwg.mxu0
    %v3489 = vrot.slane %v3484, 7
    %v3490 = vsel %vm867, %v3489, %v3468
    %v3492 = vpack.c.bf16 %v3490, %v3490
    %3493 = vmatpush.bf16.msra.mxu0 %v1047
    %3494 = vmatpush.bf16.msra.mxu0 %v1046
    %3495 = vmatpush.bf16.msra.mxu0 %v1045
    %3496 = vmatpush.bf16.msra.mxu0 %v1044
    %3497 = vmatpush.bf16.msra.mxu0 %v1043
    %3498 = vmatpush.bf16.msra.mxu0 %v1042
    %3499 = vmatpush.bf16.msra.mxu0 %v1041
    %3500 = vmatpush.bf16.msra.mxu0 %v1040
    %3501 = vmatmul.bf16.gmra.mxu0 %v3492
    %v3502 = vpop.f32.mrf.mxu0
    %v3503 = vadd.f32 %v974, %v3502
    %v3504 = vpop.f32.mrf.mxu0
    %3505 = vdwg.mxu0
    %3506 = vmatpush.bf16.msra.mxu0 %v1055
    %3507 = vmatpush.bf16.msra.mxu0 %v1054
    %3508 = vmatpush.bf16.msra.mxu0 %v1053
    %3509 = vmatpush.bf16.msra.mxu0 %v1052
    %3510 = vmatpush.bf16.msra.mxu0 %v1051
    %3511 = vmatpush.bf16.msra.mxu0 %v1050
    %3512 = vmatpush.bf16.msra.mxu0 %v1049
    %3513 = vmatpush.bf16.msra.mxu0 %v1048
    %3514 = vmatmul.bf16.gmra.mxu0 %v3401
    %v3515 = vpop.f32.mrf.mxu0
    %v3516 = vadd.f32 %v3503, %v3515
    %v3517 = vpop.f32.mrf.mxu0
    %3518 = vdwg.mxu0
    %v3519 = vtanh.pop %v3516
    %v3520 = vadd.f32 %v3449, 1e-08
    %v3521 = vmul.f32 %v3520, %v62
    %v3522 = vsel %vm271, %v3521, 0.0
    %3523 = vadd.xlane.f32.xlu0 %v3522
    %v3524 = vpop.xlane.xlu0 %3523
    %v3525 = vrcp.pop %v3524
    %v3526 = vmul.f32 %v3521, %v3525
    %vm3527 = vcmp.ge.f32.partialorder %v274, 6.0
    %v3528 = vsel %vm3527, 1, 0
    %v3529 = vcvt.s32.f32 %v3528
    %v3530 = vmul.f32 %v3189, %v3529
    %v3531 = vmul.f32 %v3526, %v3530
    %v3532 = vsel %vm271, %v3531, -inf
    %3533 = vmax.xlane.f32.xlu0 %v3532
    %v3534 = vpop.xlane.xlu0 %3533
    %vm3535 = vcmp.eq.f32.partialorder %v3531, %v3534
    %v3536 = vsel %vm3535, %v270, 8
    %v3537 = vsel %vm271, %v3536, 2147483647
    %v3538 = vand.u32 %v3537, 65535
    %v3539 = vshra.s32 %v3537, 16
    %v3540 = vcvt.s32.f32 %v3538
    %v3541 = vcvt.s32.f32 %v3539
    %3542 = vmin.xlane.f32.xlu0 %v3541
    %v3543 = vpop.xlane.xlu0 %3542
    %vm3544 = vcmp.eq.f32.partialorder %v3541, %v3543
    %v3545 = vsel %vm3544, %v3540, inf
    %3546 = vmin.xlane.f32.xlu0 %v3545
    %v3547 = vpop.xlane.xlu0 %3546
    %v3548 = vcvt.f32.s32 %v3547
    %v3549 = vcvt.f32.s32 %v3543
    %v3550 = vshll.u32 %v3549, 16
    %v3551 = vadd.s32 %v3550, %v3548
    %vm3552 = vcmp.eq.s32.totalorder %v270, %v3551
    %v3553 = vsel %vm3552, 1, 0
    %v3554 = vcvt.s32.f32 %v3553
    %v3555 = vadd.f32 %v3531, 1e-08
    %v3556 = vmul.f32 %v3555, %v3554
    %v3557 = vsel %vm271, %v3556, 0.0
    %3558 = vadd.xlane.f32.xlu0 %v3557
    %v3559 = vpop.xlane.xlu0 %3558
    %v3560 = vlog2.pop %v3559
    %v3561 = vmul.f32 %v3560, 0.6931472
    %v3562 = vsel %vm271, %v3555, 0.0
    %3563 = vadd.xlane.f32.xlu0 %v3562
    %v3564 = vpop.xlane.xlu0 %3563
    %v3565 = vlog2.pop %v3564
    %v3566 = vmul.f32 %v3565, 0.6931472
    %v3567 = vsub.f32 %v3561, %v3566
    %vm3568 = vcmask 50224
    %3569 = vst.msk [vmem:[#allocation2] sm:$0x3] %vm3568, %v3567
    %3570 = vst.msk [vmem:[#allocation4] sm:$0x3] %vm3568, %v3551
    %v3571 = vsub.f32 1.0, %v3554
    %v3572 = vmul.f32 %v3189, %v3571
    %v3574 = vrot.slane %v3554, 1
    %v3576 = vpack.c.bf16 %v3554, %v3554
    %v3577 = vpack.c.bf16 %v3574, %v3574
    %v3579 = vsel %vm918, %v3576, 0
    %3581 = vmatpush.bf16.msra.mxu0 0
    %3582 = vmatpush.bf16.msra.mxu0 0
    %3583 = vmatpush.bf16.msra.mxu0 0
    %3584 = vmatpush.bf16.msra.mxu0 0
    %3585 = vmatpush.bf16.msra.mxu0 0
    %3586 = vmatpush.bf16.msra.mxu0 0
    %3587 = vmatpush.bf16.msra.mxu0 0
    %3588 = vmatpush.bf16.msra.mxu0 %v1278
    %3589 = vmatmul.bf16.gmra.mxu0 %v3579
    %v3590 = vpop.f32.mrf.mxu0
    %v3591 = vadd.f32 0.0, %v3590
    %v3592 = vpop.f32.mrf.mxu0
    %3593 = vdwg.mxu0
    %v3595 = vsel %vm918, %v3577, 0
    %3597 = vmatpush.bf16.msra.mxu0 0
    %3598 = vmatpush.bf16.msra.mxu0 0
    %3599 = vmatpush.bf16.msra.mxu0 0
    %3600 = vmatpush.bf16.msra.mxu0 0
    %3601 = vmatpush.bf16.msra.mxu0 0
    %3602 = vmatpush.bf16.msra.mxu0 0
    %3603 = vmatpush.bf16.msra.mxu0 0
    %3604 = vmatpush.bf16.msra.mxu0 %v1297
    %3605 = vmatmul.bf16.gmra.mxu0 %v3595
    %v3606 = vpop.f32.mrf.mxu0
    %v3607 = vadd.f32 0.0, %v3606
    %v3608 = vpop.f32.mrf.mxu0
    %3609 = vdwg.mxu0
    %v3612 = vrot.slane %v3607, 7
    %v3613 = vsel %vm867, %v3612, %v3591
    %v3615 = vpack.c.bf16 %v3613, %v3613
    %v3616 = vpack.c.bf16 %v3519, %v3519
    %3617 = vmatpush.bf16.msra.mxu0 %v509
    %3618 = vmatpush.bf16.msra.mxu0 %v505
    %3619 = vmatpush.bf16.msra.mxu0 %v501
    %3620 = vmatpush.bf16.msra.mxu0 %v497
    %3621 = vmatpush.bf16.msra.mxu0 %v493
    %3622 = vmatpush.bf16.msra.mxu0 %v489
    %3623 = vmatpush.bf16.msra.mxu0 %v485
    %3624 = vmatpush.bf16.msra.mxu0 %v481
    %3625 = vmatmul.bf16.gmra.mxu0 %v3615
    %v3626 = vpop.f32.mrf.mxu0
    %v3627 = vadd.f32 %v281, %v3626
    %v3628 = vpop.f32.mrf.mxu0
    %3629 = vdwg.mxu0
    %3630 = vmatpush.bf16.msra.mxu0 %v541
    %3631 = vmatpush.bf16.msra.mxu0 %v537
    %3632 = vmatpush.bf16.msra.mxu0 %v533
    %3633 = vmatpush.bf16.msra.mxu0 %v529
    %3634 = vmatpush.bf16.msra.mxu0 %v525
    %3635 = vmatpush.bf16.msra.mxu0 %v521
    %3636 = vmatpush.bf16.msra.mxu0 %v517
    %3637 = vmatpush.bf16.msra.mxu0 %v513
    %3638 = vmatmul.bf16.gmra.mxu0 %v3616
    %v3639 = vpop.f32.mrf.mxu0
    %v3640 = vadd.f32 %v3627, %v3639
    %v3641 = vpop.f32.mrf.mxu0
    %3642 = vdwg.mxu0
    %3643 = vmatpush.bf16.msra.mxu0 %v510
    %3644 = vmatpush.bf16.msra.mxu0 %v506
    %3645 = vmatpush.bf16.msra.mxu0 %v502
    %3646 = vmatpush.bf16.msra.mxu0 %v498
    %3647 = vmatpush.bf16.msra.mxu0 %v494
    %3648 = vmatpush.bf16.msra.mxu0 %v490
    %3649 = vmatpush.bf16.msra.mxu0 %v486
    %3650 = vmatpush.bf16.msra.mxu0 %v482
    %3651 = vmatmul.bf16.gmra.mxu0 %v3615
    %v3652 = vpop.f32.mrf.mxu0
    %v3653 = vadd.f32 %v282, %v3652
    %v3654 = vpop.f32.mrf.mxu0
    %3655 = vdwg.mxu0
    %3656 = vmatpush.bf16.msra.mxu0 %v542
    %3657 = vmatpush.bf16.msra.mxu0 %v538
    %3658 = vmatpush.bf16.msra.mxu0 %v534
    %3659 = vmatpush.bf16.msra.mxu0 %v530
    %3660 = vmatpush.bf16.msra.mxu0 %v526
    %3661 = vmatpush.bf16.msra.mxu0 %v522
    %3662 = vmatpush.bf16.msra.mxu0 %v518
    %3663 = vmatpush.bf16.msra.mxu0 %v514
    %3664 = vmatmul.bf16.gmra.mxu0 %v3616
    %v3665 = vpop.f32.mrf.mxu0
    %v3666 = vadd.f32 %v3653, %v3665
    %v3667 = vpop.f32.mrf.mxu0
    %3668 = vdwg.mxu0
    %3669 = vmatpush.bf16.msra.mxu0 %v511
    %3670 = vmatpush.bf16.msra.mxu0 %v507
    %3671 = vmatpush.bf16.msra.mxu0 %v503
    %3672 = vmatpush.bf16.msra.mxu0 %v499
    %3673 = vmatpush.bf16.msra.mxu0 %v495
    %3674 = vmatpush.bf16.msra.mxu0 %v491
    %3675 = vmatpush.bf16.msra.mxu0 %v487
    %3676 = vmatpush.bf16.msra.mxu0 %v483
    %3677 = vmatmul.bf16.gmra.mxu0 %v3615
    %v3678 = vpop.f32.mrf.mxu0
    %v3679 = vadd.f32 %v283, %v3678
    %v3680 = vpop.f32.mrf.mxu0
    %3681 = vdwg.mxu0
    %3682 = vmatpush.bf16.msra.mxu0 %v543
    %3683 = vmatpush.bf16.msra.mxu0 %v539
    %3684 = vmatpush.bf16.msra.mxu0 %v535
    %3685 = vmatpush.bf16.msra.mxu0 %v531
    %3686 = vmatpush.bf16.msra.mxu0 %v527
    %3687 = vmatpush.bf16.msra.mxu0 %v523
    %3688 = vmatpush.bf16.msra.mxu0 %v519
    %3689 = vmatpush.bf16.msra.mxu0 %v515
    %3690 = vmatmul.bf16.gmra.mxu0 %v3616
    %v3691 = vpop.f32.mrf.mxu0
    %v3692 = vadd.f32 %v3679, %v3691
    %v3693 = vpop.f32.mrf.mxu0
    %3694 = vdwg.mxu0
    %3695 = vmatpush.bf16.msra.mxu0 %v512
    %3696 = vmatpush.bf16.msra.mxu0 %v508
    %3697 = vmatpush.bf16.msra.mxu0 %v504
    %3698 = vmatpush.bf16.msra.mxu0 %v500
    %3699 = vmatpush.bf16.msra.mxu0 %v496
    %3700 = vmatpush.bf16.msra.mxu0 %v492
    %3701 = vmatpush.bf16.msra.mxu0 %v488
    %3702 = vmatpush.bf16.msra.mxu0 %v484
    %3703 = vmatmul.bf16.gmra.mxu0 %v3615
    %v3704 = vpop.f32.mrf.mxu0
    %v3705 = vadd.f32 %v284, %v3704
    %v3706 = vpop.f32.mrf.mxu0
    %3707 = vdwg.mxu0
    %3708 = vmatpush.bf16.msra.mxu0 %v544
    %3709 = vmatpush.bf16.msra.mxu0 %v540
    %3710 = vmatpush.bf16.msra.mxu0 %v536
    %3711 = vmatpush.bf16.msra.mxu0 %v532
    %3712 = vmatpush.bf16.msra.mxu0 %v528
    %3713 = vmatpush.bf16.msra.mxu0 %v524
    %3714 = vmatpush.bf16.msra.mxu0 %v520
    %3715 = vmatpush.bf16.msra.mxu0 %v516
    %3716 = vmatmul.bf16.gmra.mxu0 %v3616
    %v3717 = vpop.f32.mrf.mxu0
    %v3718 = vadd.f32 %v3705, %v3717
    %v3719 = vpop.f32.mrf.mxu0
    %3720 = vdwg.mxu0
    %v3721 = vxor.u32 %v3640, 2147483648
    %v3722 = vmul.f32 %v3721, 1.442695
    %v3723 = vpow.pop %v3722
    %v3724 = vadd.f32 %v3723, 1.0
    %v3725 = vrcp.pop %v3724
    %v3726 = vmul.f32 %v3724, %v3725
    %v3727 = vsub.f32 1.0, %v3726
    %v3728 = vmul.f32 %v3725, %v3727
    %v3729 = vadd.f32 %v3725, %v3728
    %vm3730 = vweird.f32 %v3724
    %vm3731 = vweird.f32 %v3725
    %vm3732 = vmor %vm3730, %vm3731
    %v3733 = vsel %vm3732, %v3725, %v3729
    %v3734 = vand.u32 2147483647, %v3724
    %vm3735 = vcmp.eq.f32.partialorder %v3734, 8.507059e+37
    %v3736 = vand.u32 %v3724, 2147483648
    %v3737 = vor.u32 1.1754944e-38, %v3736
    %v3738 = vsel %vm3735, %v3737, %v3733
    %v3739 = vmul.f32 1.0, %v3738
    %v3740 = vxor.u32 %v3666, 2147483648
    %v3741 = vmul.f32 %v3740, 1.442695
    %v3742 = vpow.pop %v3741
    %v3743 = vadd.f32 %v3742, 1.0
    %v3744 = vrcp.pop %v3743
    %v3745 = vmul.f32 %v3743, %v3744
    %v3746 = vsub.f32 1.0, %v3745
    %v3747 = vmul.f32 %v3744, %v3746
    %v3748 = vadd.f32 %v3744, %v3747
    %vm3749 = vweird.f32 %v3743
    %vm3750 = vweird.f32 %v3744
    %vm3751 = vmor %vm3749, %vm3750
    %v3752 = vsel %vm3751, %v3744, %v3748
    %v3753 = vand.u32 2147483647, %v3743
    %vm3754 = vcmp.eq.f32.partialorder %v3753, 8.507059e+37
    %v3755 = vand.u32 %v3743, 2147483648
    %v3756 = vor.u32 1.1754944e-38, %v3755
    %v3757 = vsel %vm3754, %v3756, %v3752
    %v3758 = vmul.f32 1.0, %v3757
    %v3759 = vtanh.pop %v3692
    %v3760 = vxor.u32 %v3718, 2147483648
    %v3761 = vmul.f32 %v3760, 1.442695
    %v3762 = vpow.pop %v3761
    %v3763 = vadd.f32 %v3762, 1.0
    %v3764 = vrcp.pop %v3763
    %v3765 = vmul.f32 %v3763, %v3764
    %v3766 = vsub.f32 1.0, %v3765
    %v3767 = vmul.f32 %v3764, %v3766
    %v3768 = vadd.f32 %v3764, %v3767
    %vm3769 = vweird.f32 %v3763
    %vm3770 = vweird.f32 %v3764
    %vm3771 = vmor %vm3769, %vm3770
    %v3772 = vsel %vm3771, %v3764, %v3768
    %v3773 = vand.u32 2147483647, %v3763
    %vm3774 = vcmp.eq.f32.partialorder %v3773, 8.507059e+37
    %v3775 = vand.u32 %v3763, 2147483648
    %v3776 = vor.u32 1.1754944e-38, %v3775
    %v3777 = vsel %vm3774, %v3776, %v3772
    %v3778 = vmul.f32 1.0, %v3777
    %v3779 = vmul.f32 %v3758, %v3398
    %v3780 = vmul.f32 %v3739, %v3759
    %v3781 = vadd.f32 %v3779, %v3780
    %v3782 = vtanh.pop %v3781
    %v3783 = vmul.f32 %v3778, %v3782
    %v3784 = vpack.c.bf16 %v3783, %v3783
    %3785 = vmatpush.bf16.msra.mxu0 %v819
    %3786 = vmatpush.bf16.msra.mxu0 %v818
    %3787 = vmatpush.bf16.msra.mxu0 %v817
    %3788 = vmatpush.bf16.msra.mxu0 %v816
    %3789 = vmatpush.bf16.msra.mxu0 %v815
    %3790 = vmatpush.bf16.msra.mxu0 %v814
    %3791 = vmatpush.bf16.msra.mxu0 %v813
    %3792 = vmatpush.bf16.msra.mxu0 %v812
    %3793 = vmatmul.bf16.gmra.mxu0 %v3784
    %v3794 = vpop.f32.mrf.mxu0
    %v3795 = vadd.f32 %v778, %v3794
    %v3796 = vpop.f32.mrf.mxu0
    %3797 = vdwg.mxu0
    %v3799 = vrot.slane %v3795, 1
    %v3800 = vperm.slane %v3795, 0
    %v3801 = vperm.slane %v3799, 0
    %v3804 = vadd.f32 %v3800, %v263
    %v3805 = vadd.f32 %v3801, %v265
    %v3806 = vtanh.pop %v3804
    %v3807 = vtanh.pop %v3805
    %v3808 = vmul.f32 %v3806, %v852
    %v3809 = vmul.f32 %v3807, %v852
    %3810 = vadd.xlane.f32.xlu0 %v3808
    %v3811 = vpop.xlane.xlu0 %3810
    %3812 = vadd.xlane.f32.xlu0 %v3809
    %v3813 = vpop.xlane.xlu0 %3812
    %vm3814 = vcmp.eq.f32.partialorder %v3572, 0.0
    %v3817 = vperm.slane %v3811, %v270
    %v3818 = vperm.slane %v3813, %v270
    %v3819 = vsel %vm867, %v3818, %v3817
    %v3821 = vsel %vm3814, -1e+30, %v3819
    %v3822 = vsel %vm271, %v3821, -inf
    %3823 = vmax.xlane.f32.xlu0 %v3822
    %v3824 = vpop.xlane.xlu0 %3823
    %v3825 = vsub.f32 %v3821, %v3824
    %v3826 = vmul.f32 %v3825, 1.442695
    %v3827 = vpow.pop %v3826
    %v3828 = vsel %vm271, %v3827, 0.0
    %3829 = vadd.xlane.f32.xlu0 %v3828
    %v3830 = vpop.xlane.xlu0 %3829
    %v3831 = vrcp.pop %v3830
    %v3832 = vmul.f32 %v3827, %v3831
    %v3834 = vrot.slane %v3832, 1
    %v3836 = vpack.c.bf16 %v3832, %v3832
    %v3837 = vpack.c.bf16 %v3834, %v3834
    %v3839 = vsel %vm918, %v3836, 0
    %3841 = vmatpush.bf16.msra.mxu0 0
    %3842 = vmatpush.bf16.msra.mxu0 0
    %3843 = vmatpush.bf16.msra.mxu0 0
    %3844 = vmatpush.bf16.msra.mxu0 0
    %3845 = vmatpush.bf16.msra.mxu0 0
    %3846 = vmatpush.bf16.msra.mxu0 0
    %3847 = vmatpush.bf16.msra.mxu0 0
    %3848 = vmatpush.bf16.msra.mxu0 %v924
    %3849 = vmatmul.bf16.gmra.mxu0 %v3839
    %v3850 = vpop.f32.mrf.mxu0
    %v3851 = vadd.f32 0.0, %v3850
    %v3852 = vpop.f32.mrf.mxu0
    %3853 = vdwg.mxu0
    %v3855 = vsel %vm918, %v3837, 0
    %3857 = vmatpush.bf16.msra.mxu0 0
    %3858 = vmatpush.bf16.msra.mxu0 0
    %3859 = vmatpush.bf16.msra.mxu0 0
    %3860 = vmatpush.bf16.msra.mxu0 0
    %3861 = vmatpush.bf16.msra.mxu0 0
    %3862 = vmatpush.bf16.msra.mxu0 0
    %3863 = vmatpush.bf16.msra.mxu0 0
    %3864 = vmatpush.bf16.msra.mxu0 %v952
    %3865 = vmatmul.bf16.gmra.mxu0 %v3855
    %v3866 = vpop.f32.mrf.mxu0
    %v3867 = vadd.f32 0.0, %v3866
    %v3868 = vpop.f32.mrf.mxu0
    %3869 = vdwg.mxu0
    %v3872 = vrot.slane %v3867, 7
    %v3873 = vsel %vm867, %v3872, %v3851
    %v3875 = vpack.c.bf16 %v3873, %v3873
    %3876 = vmatpush.bf16.msra.mxu0 %v1047
    %3877 = vmatpush.bf16.msra.mxu0 %v1046
    %3878 = vmatpush.bf16.msra.mxu0 %v1045
    %3879 = vmatpush.bf16.msra.mxu0 %v1044
    %3880 = vmatpush.bf16.msra.mxu0 %v1043
    %3881 = vmatpush.bf16.msra.mxu0 %v1042
    %3882 = vmatpush.bf16.msra.mxu0 %v1041
    %3883 = vmatpush.bf16.msra.mxu0 %v1040
    %3884 = vmatmul.bf16.gmra.mxu0 %v3875
    %v3885 = vpop.f32.mrf.mxu0
    %v3886 = vadd.f32 %v974, %v3885
    %v3887 = vpop.f32.mrf.mxu0
    %3888 = vdwg.mxu0
    %3889 = vmatpush.bf16.msra.mxu0 %v1055
    %3890 = vmatpush.bf16.msra.mxu0 %v1054
    %3891 = vmatpush.bf16.msra.mxu0 %v1053
    %3892 = vmatpush.bf16.msra.mxu0 %v1052
    %3893 = vmatpush.bf16.msra.mxu0 %v1051
    %3894 = vmatpush.bf16.msra.mxu0 %v1050
    %3895 = vmatpush.bf16.msra.mxu0 %v1049
    %3896 = vmatpush.bf16.msra.mxu0 %v1048
    %3897 = vmatmul.bf16.gmra.mxu0 %v3784
    %v3898 = vpop.f32.mrf.mxu0
    %v3899 = vadd.f32 %v3886, %v3898
    %v3900 = vpop.f32.mrf.mxu0
    %3901 = vdwg.mxu0
    %v3902 = vtanh.pop %v3899
    %v3903 = vadd.f32 %v3832, 1e-08
    %v3904 = vmul.f32 %v3903, %v62
    %v3905 = vsel %vm271, %v3904, 0.0
    %3906 = vadd.xlane.f32.xlu0 %v3905
    %v3907 = vpop.xlane.xlu0 %3906
    %v3908 = vrcp.pop %v3907
    %v3909 = vmul.f32 %v3904, %v3908
    %vm3910 = vcmp.ge.f32.partialorder %v274, 7.0
    %v3911 = vsel %vm3910, 1, 0
    %v3912 = vcvt.s32.f32 %v3911
    %v3913 = vmul.f32 %v3572, %v3912
    %v3914 = vmul.f32 %v3909, %v3913
    %v3915 = vsel %vm271, %v3914, -inf
    %3916 = vmax.xlane.f32.xlu0 %v3915
    %v3917 = vpop.xlane.xlu0 %3916
    %vm3918 = vcmp.eq.f32.partialorder %v3914, %v3917
    %v3919 = vsel %vm3918, %v270, 8
    %v3920 = vsel %vm271, %v3919, 2147483647
    %v3921 = vand.u32 %v3920, 65535
    %v3922 = vshra.s32 %v3920, 16
    %v3923 = vcvt.s32.f32 %v3921
    %v3924 = vcvt.s32.f32 %v3922
    %3925 = vmin.xlane.f32.xlu0 %v3924
    %v3926 = vpop.xlane.xlu0 %3925
    %vm3927 = vcmp.eq.f32.partialorder %v3924, %v3926
    %v3928 = vsel %vm3927, %v3923, inf
    %3929 = vmin.xlane.f32.xlu0 %v3928
    %v3930 = vpop.xlane.xlu0 %3929
    %v3931 = vcvt.f32.s32 %v3930
    %v3932 = vcvt.f32.s32 %v3926
    %v3933 = vshll.u32 %v3932, 16
    %v3934 = vadd.s32 %v3933, %v3931
    %vm3935 = vcmp.eq.s32.totalorder %v270, %v3934
    %v3936 = vsel %vm3935, 1, 0
    %v3937 = vcvt.s32.f32 %v3936
    %v3938 = vadd.f32 %v3914, 1e-08
    %v3939 = vmul.f32 %v3938, %v3937
    %v3940 = vsel %vm271, %v3939, 0.0
    %3941 = vadd.xlane.f32.xlu0 %v3940
    %v3942 = vpop.xlane.xlu0 %3941
    %v3943 = vlog2.pop %v3942
    %v3944 = vmul.f32 %v3943, 0.6931472
    %v3945 = vsel %vm271, %v3938, 0.0
    %3946 = vadd.xlane.f32.xlu0 %v3945
    %v3947 = vpop.xlane.xlu0 %3946
    %v3948 = vlog2.pop %v3947
    %v3949 = vmul.f32 %v3948, 0.6931472
    %v3950 = vsub.f32 %v3944, %v3949
    %vm3951 = vcmask 58424
    %3952 = vst.msk [vmem:[#allocation2] sm:$0x3] %vm3951, %v3950
    %3953 = vst.msk [vmem:[#allocation4] sm:$0x3] %vm3951, %v3934
    %3954 = vst [vmem:[#allocation6] sm:$0x3] %v3902
    %3955 = vst [vmem:[#allocation7] sm:$0x3] %v3781
    // Predicated region
    $region62: #{decoder_forward.1} parent=1 // pred_check
      _
    $region63: #{decoder_forward.1} parent=1 // pred_check_branch
      %3957 = sbr.rel (0) target = $region65
    $region64: #{decoder_forward.1} parent=1 // pred_region
      %3959 = vsyncadd [#allocation3], 0
      %s3961 = sshll.u32 [#allocation2], 4
      %s3962 = int_to_ptr.vmem [resolvable:$true] %s3961
      %s3963 = sshll.u32 %s15, 4
      %s3964 = int_to_ptr.hbm [resolvable:$true] %s3963
      %3966 = dma.vmem_to_hbm [thread:$0]  %s3962, 32, %s3964, [#allocation3]
    $region65: #{decoder_forward.1} parent=1 // pred_fallthru
      _
    // Predicated region
    $region66: #{decoder_forward.1} parent=1 // pred_check
      _
    $region67: #{decoder_forward.1} parent=1 // pred_check_branch
      %3968 = sbr.rel (0) target = $region69
    $region68: #{decoder_forward.1} parent=1 // pred_region
      %3970 = vsyncadd [#allocation5], 0
      %s3972 = sshll.u32 [#allocation4], 4
      %s3973 = int_to_ptr.vmem [resolvable:$true] %s3972
      %s3974 = sshll.u32 %s16, 4
      %s3975 = int_to_ptr.hbm [resolvable:$true] %s3974
      %3977 = dma.vmem_to_hbm [thread:$0]  %s3973, 32, %s3975, [#allocation5]
    $region69: #{decoder_forward.1} parent=1 // pred_fallthru
      _
    // Predicated region
    $region70: #{decoder_forward.1} parent=1 // pred_check
      _
    $region71: #{decoder_forward.1} parent=1 // pred_check_branch
      %3979 = sbr.rel (0) target = $region73
    $region72: #{decoder_forward.1} parent=1 // pred_region
      %3981 = vsyncadd [#allocation5], 0
      %s3983 = sshll.u32 [#allocation6], 4
      %s3984 = int_to_ptr.vmem [resolvable:$true] %s3983
      %s3985 = sshll.u32 %s17, 4
      %s3986 = int_to_ptr.hbm [resolvable:$true] %s3985
      %3988 = dma.vmem_to_hbm [thread:$0]  %s3984, 32, %s3986, [#allocation5]
    $region73: #{decoder_forward.1} parent=1 // pred_fallthru
      _
    // Predicated region
    $region74: #{decoder_forward.1} parent=1 // pred_check
      _
    $region75: #{decoder_forward.1} parent=1 // pred_check_branch
      %3990 = sbr.rel (0) target = $region77
    $region76: #{decoder_forward.1} parent=1 // pred_region
      %3992 = vsyncadd [#allocation8], 0
      %s3994 = sshll.u32 [#allocation7], 4
      %s3995 = int_to_ptr.vmem [resolvable:$true] %s3994
      %s3996 = sshll.u32 %s18, 4
      %s3997 = int_to_ptr.hbm [resolvable:$true] %s3996
      %3999 = dma.vmem_to_hbm [thread:$0]  %s3995, 32, %s3997, [#allocation8]
    $region77: #{decoder_forward.1} parent=1 // pred_fallthru
      _
    // Predicated region
    $region78: #{decoder_forward.1} parent=1 // pred_check
      _
    $region79: #{decoder_forward.1} parent=1 // pred_check_branch
      %4001 = sbr.rel (0) target = $region81
    $region80: #{decoder_forward.1} parent=1 // pred_region
      %4003 = dma.done [#allocation3], 32
    $region81: #{decoder_forward.1} parent=1 // pred_fallthru
      _
    // Predicated region
    $region82: #{decoder_forward.1} parent=1 // pred_check
      _
    $region83: #{decoder_forward.1} parent=1 // pred_check_branch
      %4005 = sbr.rel (0) target = $region85
    $region84: #{decoder_forward.1} parent=1 // pred_region
      %4007 = dma.done [#allocation5], 32
    $region85: #{decoder_forward.1} parent=1 // pred_fallthru
      _
    // Predicated region
    $region86: #{decoder_forward.1} parent=1 // pred_check
      _
    $region87: #{decoder_forward.1} parent=1 // pred_check_branch
      %4009 = sbr.rel (0) target = $region89
    $region88: #{decoder_forward.1} parent=1 // pred_region
      %4011 = dma.done [#allocation5], 32
    $region89: #{decoder_forward.1} parent=1 // pred_fallthru
      _
    // Predicated region
    $region90: #{decoder_forward.1} parent=1 // pred_check
      _
    $region91: #{decoder_forward.1} parent=1 // pred_check_branch
      %4013 = sbr.rel (0) target = $region93
    $region92: #{decoder_forward.1} parent=1 // pred_region
      %4015 = dma.done [#allocation8], 32
    $region93: #{decoder_forward.1} parent=1 // pred_fallthru
      _
    %4016 = vsyncpa [#allocation3], 1
    %4017 = vsyncpa [#allocation5], 1
    %4018 = vsyncpa [#allocation8], 1

</llo_original>
